<compile_context>
chip_gen: v7x
topology: tpu7x:2x2x1
jax: 0.10.0
libtpu: 0.0.40
codegen_flags: <defaults>
</compile_context>

<pallas_src>
import functools
import math

import jax
import jax.numpy as jnp
from jax import lax
from jax.experimental import pallas as pl
from jax.experimental.pallas import tpu as pltpu


# ----------------------------------------------------------------------------
# Pass 1: fused K/V projection.
# ----------------------------------------------------------------------------
def kv_proj_kernel(x_ref, wkv_ref, bkv_ref, k_ref, v_ref, *, hidden, mm_dtype):
    x = x_ref[0].astype(mm_dtype)                                    # (TS, H)
    kv = jnp.dot(x, wkv_ref[...],
                 preferred_element_type=jnp.float32) + bkv_ref[...]  # (TS, 2H)
    kv = kv.astype(mm_dtype)
    k_ref[0] = kv[:, :hidden]         # 128-aligned, lane-dense slices
    v_ref[0] = kv[:, hidden:]


# ----------------------------------------------------------------------------
# Pass 2: attention + output projection + LayerNorm + FFN + LayerNorm.
# ----------------------------------------------------------------------------
def encoder_kernel(x_ref, mask_ref, k_ref, v_ref,
                   wq_ref, bq_ref, wo_ref, bo_ref,
                   w1_ref, b1_ref, w2_ref, b2_ref,
                   gamma_ref, beta_ref,
                   out_ref,
                   *, num_heads, d_k, eps, mm_dtype, exp_dtype, head_split):
    tq = x_ref.shape[1]
    seq = k_ref.shape[1]
    hidden = num_heads * d_k

    x_tile = x_ref[0].astype(jnp.float32)                            # (TQ, H)

    # Q projection for this tile only; 1/sqrt(d_k) is folded into wq/bq (host).
    q = jnp.dot(x_tile.astype(mm_dtype), wq_ref[...],
                preferred_element_type=jnp.float32) + bq_ref[...]
    q = q.astype(mm_dtype)                                           # (TQ, H)
    k2 = k_ref[0]                                                    # (S, H)
    v2 = v_ref[0]                                                    # (S, H)

    if head_split == "relayout":
        # One relayout per operand (no masked lane-slice stores, no scratch).
        q_h = q.reshape(tq, num_heads, d_k).transpose(1, 0, 2)       # (nh, TQ, dk)
        k_h = k2.reshape(seq, num_heads, d_k).transpose(1, 0, 2)     # (nh, S, dk)
        v_h = v2.reshape(seq, num_heads, d_k).transpose(1, 0, 2)
    else:  # conservative fallback: per-head lane slices stacked along axis 0
        q_h = jnp.stack([q[:, h * d_k:(h + 1) * d_k] for h in range(num_heads)], axis=0)
        k_h = jnp.stack([k2[:, h * d_k:(h + 1) * d_k] for h in range(num_heads)], axis=0)
        v_h = jnp.stack([v2[:, h * d_k:(h + 1) * d_k] for h in range(num_heads)], axis=0)

    # Additive mask bias: 0 for keep, -1e4 for masked.  Equivalent (after the
    # softmax) to the reference's masked_fill(-10000), not bit-identical.
    mask_row = mask_ref[0].astype(jnp.float32)                       # (1, S)
    bias = (mask_row - 1.0) * 10000.0

    scores = jnp.einsum('hqd,hkd->hqk', q_h, k_h,
                        preferred_element_type=jnp.float32) + bias   # (nh, TQ, S)
    m = jnp.max(scores, axis=-1, keepdims=True)
    e = jnp.exp((scores - m).astype(exp_dtype))                      # bf16 exp on v6e/v7x
    denom = jnp.sum(e, axis=-1, keepdims=True, dtype=jnp.float32)    # (nh, TQ, 1)
    # Un-normalized P.V; 1/denom is applied to the small (nh,TQ,dk) ctx slab
    # instead of the (nh,TQ,S) probs slab.
    ctx = jnp.einsum('hqk,hkd->hqd', e.astype(mm_dtype), v_h,
                     preferred_element_type=jnp.float32)             # (nh, TQ, dk)
    ctx = ctx * pl.reciprocal(denom, approx=True)

    if head_split == "relayout":
        ctx2d = ctx.transpose(1, 0, 2).reshape(tq, hidden)           # (TQ, H)
    else:
        ctx2d = jnp.concatenate([ctx[h] for h in range(num_heads)], axis=-1)

    attn = jnp.dot(ctx2d.astype(mm_dtype), wo_ref[...],
                   preferred_element_type=jnp.float32) + bo_ref[...]  # (TQ, H)

    gamma = gamma_ref[...]
    beta = beta_ref[...]

    def layer_norm(v):                       # one-pass variance
        mu = jnp.mean(v, axis=-1, keepdims=True)
        var = jnp.mean(v * v, axis=-1, keepdims=True) - mu * mu
        return (v - mu) * lax.rsqrt(var + eps) * gamma + beta

    def gelu_exact(v):                       # torch nn.GELU() default (erf form)
        return 0.5 * v * (1.0 + lax.erf(v * jnp.float32(0.7071067811865476)))

    h1 = layer_norm(x_tile + attn)
    mid = jnp.dot(h1.astype(mm_dtype), w1_ref[...],
                  preferred_element_type=jnp.float32) + b1_ref[...]
    mid = gelu_exact(mid)
    ffn = jnp.dot(mid.astype(mm_dtype), w2_ref[...],
                  preferred_element_type=jnp.float32) + b2_ref[...]

    # TODO(synk): dropout layers omitted (identity, eval-mode semantics).
    out_ref[0] = layer_norm(h1 + ffn).astype(out_ref.dtype)


# ----------------------------------------------------------------------------
# Host-side wrapper.
# ----------------------------------------------------------------------------
def _const_spec(shape, buffered):
    zeros = (0,) * len(shape)
    idx = lambda b, q, _z=zeros: _z          # noqa: E731
    if buffered:
        # Constant block: a single VMEM buffer is enough (halves weight VMEM).
        return pl.BlockSpec(shape, idx, pipeline_mode=pl.Buffered(1))
    return pl.BlockSpec(shape, idx)


def _vmem_limit(buffer_bytes):
    # Size from the actual pipeline buffers + headroom for compiler-internal
    # scratch; cap well under v7x's 64 MiB/TC physical VMEM (v5e/v6e: 128 MiB).
    return int(min(max(2 * buffer_bytes + (8 << 20), 16 << 20), 48 << 20))


def _device_kind():
    try:
        return jax.devices()[0].device_kind.lower()
    except Exception:
        return ""


def _default_q_tile():
    # 256-wide MXU on v6e/v7x -> TQ=256; keep 128 on v5-class chips.
    return 128 if "v5" in _device_kind() else 256


def _default_exp_dtype(matmul_dtype):
    # v6e/v7x EUP has a bf16 exp path (~2x); v5e does not -> keep f32 there.
    if jnp.dtype(matmul_dtype) != jnp.dtype(jnp.bfloat16):
        return jnp.float32
    return jnp.float32 if "v5" in _device_kind() else jnp.bfloat16


def _encoder_forward_impl(x, mask, params, *, num_heads, eps, q_tile, kv_tile,
                          matmul_dtype, exp_dtype, buffered_weights, head_split):
    B, S, H = x.shape
    d_k = H // num_heads
    I = params["w1"].shape[1]
    mm = matmul_dtype
    mm_bytes = jnp.dtype(mm).itemsize
    if exp_dtype is None:
        exp_dtype = _default_exp_dtype(mm)
    if q_tile is None:
        q_tile = _default_q_tile()

    tq = min(q_tile, S)
    ts = min(kv_tile, S)
    assert S % tq == 0 and S % ts == 0, "sequence length must be divisible by the tiles"
    nq, ns = S // tq, S // ts

    # Fold the 1/sqrt(d_k) attention scale into the Q projection.
    scale = 1.0 / math.sqrt(d_k)
    wq = (params["wq"] * scale).astype(mm)
    bq = (params["bq"] * scale).astype(jnp.float32)
    wkv = jnp.concatenate([params["wk"], params["wv"]], axis=1).astype(mm)
    bkv = jnp.concatenate([params["bk"], params["bv"]], axis=1).astype(jnp.float32)
    wo = params["wo"].astype(mm)
    bo = params["bo"].astype(jnp.float32)
    w1 = params["w1"].astype(mm)
    b1 = params["b1"].astype(jnp.float32)
    w2 = params["w2"].astype(mm)
    b2 = params["b2"].astype(jnp.float32)
    gamma = params["gamma"].astype(jnp.float32)
    beta = params["beta"].astype(jnp.float32)

    cs = functools.partial(_const_spec, buffered=buffered_weights)
    wbuf = 1 if buffered_weights else 2

    # ---- pass 1: K/V projection -------------------------------------------
    kv_bufs = (2 * ts * H * 4
               + wbuf * (H * 2 * H * mm_bytes + 2 * H * 4)
               + 2 * 2 * ts * H * mm_bytes
               + ts * 2 * H * 4)
    k_arr, v_arr = pl.pallas_call(
        functools.partial(kv_proj_kernel, hidden=H, mm_dtype=mm),
        out_shape=(jax.ShapeDtypeStruct((B, S, H), mm),
                   jax.ShapeDtypeStruct((B, S, H), mm)),
        grid=(B, ns),
        in_specs=[pl.BlockSpec((1, ts, H), lambda b, s: (b, s, 0)),
                  cs((H, 2 * H)), cs((1, 2 * H))],
        out_specs=(pl.BlockSpec((1, ts, H), lambda b, s: (b, s, 0)),
                   pl.BlockSpec((1, ts, H), lambda b, s: (b, s, 0))),
        compiler_params=pltpu.CompilerParams(
            dimension_semantics=("parallel", "parallel"),
            vmem_limit_bytes=_vmem_limit(kv_bufs)),
        cost_estimate=pl.CostEstimate(
            flops=4 * B * S * H * H, transcendentals=0,
            bytes_accessed=B * S * H * 4 + 2 * H * H * mm_bytes
                           + 2 * B * S * H * mm_bytes),
    )(x, wkv, bkv)

    # ---- pass 2: attention + FFN -------------------------------------------
    weight_bytes = ((2 * H * H + 2 * H * I) * mm_bytes + (6 * H + I) * 4)
    main_bufs = (2 * tq * H * 4                      # x tile (f32)
                 + 2 * S * 4                         # mask
                 + 2 * 2 * S * H * mm_bytes          # K, V blocks
                 + 2 * tq * H * 4                    # output tile
                 + wbuf * weight_bytes               # weights/biases
                 + 2 * num_heads * tq * S * 4        # scores / e live slab
                 + tq * I * 4)                       # FFN mid
    kernel = functools.partial(encoder_kernel, num_heads=num_heads, d_k=d_k,
                               eps=eps, mm_dtype=mm, exp_dtype=exp_dtype,
                               head_split=head_split)
    flops = B * (4 * S * H * H + 4 * S * S * H + 4 * S * H * I)
    transcend = B * (num_heads * S * S + S * I)
    bytes_acc = (weight_bytes + 2 * B * S * H * 4
                 + 2 * B * S * H * mm_bytes + B * S * 4)

    return pl.pallas_call(
        kernel,
        out_shape=jax.ShapeDtypeStruct((B, S, H), x.dtype),
        grid=(B, nq),
        in_specs=[
            pl.BlockSpec((1, tq, H), lambda b, q: (b, q, 0)),   # x tile (residual + Q)
            pl.BlockSpec((1, 1, S), lambda b, q: (b, 0, 0)),    # mask
            pl.BlockSpec((1, S, H), lambda b, q: (b, 0, 0)),    # K (block reused across q)
            pl.BlockSpec((1, S, H), lambda b, q: (b, 0, 0)),    # V
            cs((H, H)), cs((1, H)),                             # wq, bq (pre-scaled)
            cs((H, H)), cs((1, H)),                             # wo, bo
            cs((H, I)), cs((1, I)),                             # w1, b1
            cs((I, H)), cs((1, H)),                             # w2, b2
            cs((1, H)), cs((1, H)),                             # gamma, beta
        ],
        out_specs=pl.BlockSpec((1, tq, H), lambda b, q: (b, q, 0)),
        compiler_params=pltpu.CompilerParams(
            dimension_semantics=("parallel", "parallel"),
            vmem_limit_bytes=_vmem_limit(main_bufs)),
        cost_estimate=pl.CostEstimate(flops=flops, transcendentals=transcend,
                                      bytes_accessed=bytes_acc),
    )(x, mask, k_arr, v_arr, wq, bq, wo, bo, w1, b1, w2, b2, gamma, beta)


def encoder_forward(x, mask, params, *, num_heads, eps=1e-5, q_tile=None,
                    kv_tile=512, matmul_dtype=jnp.bfloat16, exp_dtype=None):
    """Encoder forward.  Tries the fastest kernel variant first and falls back
    if the installed Pallas rejects Buffered(1) specs or the head relayout."""
    last_err = None
    for buffered, head_split in ((True, "relayout"), (True, "slice"),
                                 (False, "relayout"), (False, "slice")):
        try:
            return _encoder_forward_impl(
                x, mask, params, num_heads=num_heads, eps=eps, q_tile=q_tile,
                kv_tile=kv_tile, matmul_dtype=matmul_dtype, exp_dtype=exp_dtype,
                buffered_weights=buffered, head_split=head_split)
        except Exception as err:  # compile-capability fallback only
            last_err = err
    raise last_err


# ----------------------------------------------------------------------------
# Pure-JAX reference mirroring the PyTorch forward (dropout = identity).
# ----------------------------------------------------------------------------
def encoder_reference(x, mask, params, *, num_heads, eps=1e-5):
    B, S, H = x.shape
    d_k = H // num_heads
    p = params

    def lin(v, w, b):
        return v @ w + b

    q = lin(x, p["wq"], p["bq"]).reshape(B, S, num_heads, d_k).transpose(0, 2, 1, 3)
    k = lin(x, p["wk"], p["bk"]).reshape(B, S, num_heads, d_k).transpose(0, 2, 3, 1)
    v = lin(x, p["wv"], p["bv"]).reshape(B, S, num_heads, d_k).transpose(0, 2, 1, 3)
    scores = jnp.matmul(q, k) / jnp.sqrt(jnp.float32(d_k))      # (B, h, S, S)
    m4 = mask[:, :, None, :]                                    # (B, 1, 1, S)
    scores = jnp.where(m4 == 0.0, -10000.0, scores)
    probs = jax.nn.softmax(scores, axis=-1)
    y = jnp.matmul(probs, v).transpose(0, 2, 1, 3).reshape(B, S, H)
    attn = lin(y, p["wo"], p["bo"])

    def ln(z):
        mu = jnp.mean(z, axis=-1, keepdims=True)
        var = jnp.mean((z - mu) ** 2, axis=-1, keepdims=True)
        return (z - mu) / jnp.sqrt(var + eps) * p["gamma"] + p["beta"]

    h1 = ln(x + attn)
    ffn = lin(jax.nn.gelu(lin(h1, p["w1"], p["b1"]), approximate=False), p["w2"], p["b2"])
    return ln(h1 + ffn)


if __name__ == "__main__":
    # Tile-aligned small config (H, I multiples of 128; S multiple of the q-tile).
    B, S, H = 2, 256, 128
    NUM_HEADS = 4
    INTERMEDIATE = 512

    key = jax.random.PRNGKey(0)
    keys = jax.random.split(key, 16)

    def w(k, shape, scale=0.05):
        return scale * jax.random.normal(k, shape, dtype=jnp.float32)

    params = {
        "wq": w(keys[0], (H, H)), "bq": w(keys[1], (1, H)),
        "wk": w(keys[2], (H, H)), "bk": w(keys[3], (1, H)),
        "wv": w(keys[4], (H, H)), "bv": w(keys[5], (1, H)),
        "wo": w(keys[6], (H, H)), "bo": w(keys[7], (1, H)),
        "w1": w(keys[8], (H, INTERMEDIATE)), "b1": w(keys[9], (1, INTERMEDIATE)),
        "w2": w(keys[10], (INTERMEDIATE, H)), "b2": w(keys[11], (1, H)),
        "gamma": 1.0 + 0.1 * jax.random.normal(keys[12], (1, H), dtype=jnp.float32),
        "beta": 0.1 * jax.random.normal(keys[13], (1, H), dtype=jnp.float32),
    }

    x = jax.random.normal(keys[14], (B, S, H), dtype=jnp.float32)
    # mask: (B, 1, S), 1 = attend, 0 = masked.  Second sequence has padding.
    lengths = jnp.array([S, 100])
    mask = (jnp.arange(S)[None, :] < lengths[:, None]).astype(jnp.float32)[:, None, :]

    ref = encoder_reference(x, mask, params, num_heads=NUM_HEADS)

    # f32-operand path: tight structural/numerical check (approx reciprocal only).
    out_f32 = encoder_forward(x, mask, params, num_heads=NUM_HEADS,
                              matmul_dtype=jnp.float32)
    out_f32 = jax.block_until_ready(out_f32)
    assert out_f32.shape == (B, S, H)
    assert jnp.allclose(out_f32, ref, atol=5e-3, rtol=5e-3), (
        f"f32 path: max abs diff = {jnp.max(jnp.abs(out_f32 - ref))}")

    # Default bf16-MXU path (f32 accumulation, bf16 exp on v6e/v7x).
    out_bf16 = encoder_forward(x, mask, params, num_heads=NUM_HEADS,
                               matmul_dtype=jnp.bfloat16)
    out_bf16 = jax.block_until_ready(out_bf16)
    assert out_bf16.shape == (B, S, H)
    assert jnp.allclose(out_bf16, ref, atol=5e-2, rtol=5e-2), (
        f"bf16 path: max abs diff = {jnp.max(jnp.abs(out_bf16 - ref))}")

    print("KERNEL_OK")
</pallas_src>

<mosaic_0001>
module attributes {stable_mosaic.version = 11 : i64} {
  func.func @kv_proj_kernel(%arg0: i32, %arg1: i32, %arg2: memref<1x256x128xf32, #tpu.memory_space<vmem>>, %arg3: memref<128x256xf32, #tpu.memory_space<vmem>>, %arg4: memref<1x256xf32, #tpu.memory_space<vmem>>, %arg5: memref<1x256x128xf32, #tpu.memory_space<vmem>>, %arg6: memref<1x256x128xf32, #tpu.memory_space<vmem>>) attributes {dimension_semantics = [#tpu.dimension_semantics<parallel>, #tpu.dimension_semantics<parallel>], iteration_bounds = array<i64: 2, 1>, scalar_prefetch = 0 : i64, scratch_operands = 0 : i64, tpu.core_type = #tpu.core_type<tc>, window_params = [{transform_indices = @transform_0, window_bounds = array<i64: 1, 256, 128>}, {pipeline_mode = #tpu.pipeline_mode<synchronous>, transform_indices = @transform_1, window_bounds = array<i64: 128, 256>}, {pipeline_mode = #tpu.pipeline_mode<synchronous>, transform_indices = @transform_2, window_bounds = array<i64: 1, 256>}, {transform_indices = @transform_3, window_bounds = array<i64: 1, 256, 128>}, {transform_indices = @transform_4, window_bounds = array<i64: 1, 256, 128>}]} {
    %c0 = arith.constant 0 : index
    %c0_0 = arith.constant 0 : index
    %c0_1 = arith.constant 0 : index
    %0 = vector.load %arg2[%c0, %c0_0, %c0_1] : memref<1x256x128xf32, #tpu.memory_space<vmem>>, vector<1x256x128xf32>
    %1 = vector.shape_cast %0 : vector<1x256x128xf32> to vector<256x128xf32>
    %c0_2 = arith.constant 0 : index
    %c0_3 = arith.constant 0 : index
    %2 = vector.load %arg3[%c0_2, %c0_3] : memref<128x256xf32, #tpu.memory_space<vmem>>, vector<128x256xf32>
    %cst = arith.constant dense<0.000000e+00> : vector<256x256xf32>
    %3 = tpu.matmul %1, %2, %cst {dimension_numbers = #tpu.dot_dimension_numbers<[1], [0], [0], [1], [0, 0, 1, 1], [], []>} : vector<256x128xf32>, vector<128x256xf32>, vector<256x256xf32> -> vector<256x256xf32>
    %c0_4 = arith.constant 0 : index
    %c0_5 = arith.constant 0 : index
    %4 = vector.load %arg4[%c0_4, %c0_5] : memref<1x256xf32, #tpu.memory_space<vmem>>, vector<1x256xf32>
    %5 = vector.broadcast %4 : vector<1x256xf32> to vector<256x256xf32>
    %6 = arith.addf %3, %5 : vector<256x256xf32>
    %7 = vector.extract_strided_slice %6 {offsets = [0, 0], sizes = [256, 128], strides = [1, 1]} : vector<256x256xf32> to vector<256x128xf32>
    %c0_6 = arith.constant 0 : index
    %c0_7 = arith.constant 0 : index
    %c0_8 = arith.constant 0 : index
    %8 = vector.load %arg5[%c0_6, %c0_7, %c0_8] : memref<1x256x128xf32, #tpu.memory_space<vmem>>, vector<1x256x128xf32>
    %9 = vector.shape_cast %8 : vector<1x256x128xf32> to vector<256x128xf32>
    %10 = vector.shape_cast %7 : vector<256x128xf32> to vector<1x256x128xf32>
    tpu.vector_store %arg5[%c0_6, %c0_7, %c0_8], %10 {strides = array<i32>} : memref<1x256x128xf32, #tpu.memory_space<vmem>>, vector<1x256x128xf32>,
    %11 = vector.extract_strided_slice %6 {offsets = [0, 128], sizes = [256, 128], strides = [1, 1]} : vector<256x256xf32> to vector<256x128xf32>
    %c0_9 = arith.constant 0 : index
    %c0_10 = arith.constant 0 : index
    %c0_11 = arith.constant 0 : index
    %12 = vector.load %arg6[%c0_9, %c0_10, %c0_11] : memref<1x256x128xf32, #tpu.memory_space<vmem>>, vector<1x256x128xf32>
    %13 = vector.shape_cast %12 : vector<1x256x128xf32> to vector<256x128xf32>
    %14 = vector.shape_cast %11 : vector<256x128xf32> to vector<1x256x128xf32>
    tpu.vector_store %arg6[%c0_9, %c0_10, %c0_11], %14 {strides = array<i32>} : memref<1x256x128xf32, #tpu.memory_space<vmem>>, vector<1x256x128xf32>,
    return
  }
  func.func @transform_0(%arg0: i32, %arg1: i32) -> (i32, i32, i32) {
    %c0_i32 = arith.constant 0 : i32
    %c0_i32_0 = arith.constant 0 : i32
    return %arg0, %arg1, %c0_i32 : i32, i32, i32
  }
  func.func @transform_1(%arg0: i32, %arg1: i32) -> (i32, i32) {
    %c0_i32 = arith.constant 0 : i32
    %c0_i32_0 = arith.constant 0 : i32
    %c0_i32_1 = arith.constant 0 : i32
    return %c0_i32, %c0_i32_0 : i32, i32
  }
  func.func @transform_2(%arg0: i32, %arg1: i32) -> (i32, i32) {
    %c0_i32 = arith.constant 0 : i32
    %c0_i32_0 = arith.constant 0 : i32
    %c0_i32_1 = arith.constant 0 : i32
    return %c0_i32, %c0_i32_0 : i32, i32
  }
  func.func @transform_3(%arg0: i32, %arg1: i32) -> (i32, i32, i32) {
    %c0_i32 = arith.constant 0 : i32
    %c0_i32_0 = arith.constant 0 : i32
    return %arg0, %arg1, %c0_i32 : i32, i32, i32
  }
  func.func @transform_4(%arg0: i32, %arg1: i32) -> (i32, i32, i32) {
    %c0_i32 = arith.constant 0 : i32
    %c0_i32_0 = arith.constant 0 : i32
    return %arg0, %arg1, %c0_i32 : i32, i32, i32
  }
}

module attributes {stable_mosaic.version = 11 : i64} {
  func.func @kv_proj_kernel(%arg0: i32, %arg1: i32, %arg2: memref<1x256x128xf32, #tpu.memory_space<vmem>>, %arg3: memref<128x256xf32, #tpu.memory_space<vmem>>, %arg4: memref<1x256xf32, #tpu.memory_space<vmem>>, %arg5: memref<1x256x128xf32, #tpu.memory_space<vmem>>, %arg6: memref<1x256x128xf32, #tpu.memory_space<vmem>>) attributes {dimension_semantics = [#tpu.dimension_semantics<parallel>, #tpu.dimension_semantics<parallel>], iteration_bounds = array<i64: 2, 1>, scalar_prefetch = 0 : i64, scratch_operands = 0 : i64, tpu.core_type = #tpu.core_type<tc>, window_params = [{transform_indices = @transform_0, window_bounds = array<i64: 1, 256, 128>}, {pipeline_mode = #tpu.pipeline_mode<synchronous>, transform_indices = @transform_1, window_bounds = array<i64: 128, 256>}, {pipeline_mode = #tpu.pipeline_mode<synchronous>, transform_indices = @transform_2, window_bounds = array<i64: 1, 256>}, {transform_indices = @transform_3, window_bounds = array<i64: 1, 256, 128>}, {transform_indices = @transform_4, window_bounds = array<i64: 1, 256, 128>}]} {
    %c0 = arith.constant 0 : index
    %c0_0 = arith.constant 0 : index
    %c0_1 = arith.constant 0 : index
    %0 = vector.load %arg2[%c0, %c0_0, %c0_1] : memref<1x256x128xf32, #tpu.memory_space<vmem>>, vector<1x256x128xf32>
    %1 = vector.shape_cast %0 : vector<1x256x128xf32> to vector<256x128xf32>
    %c0_2 = arith.constant 0 : index
    %c0_3 = arith.constant 0 : index
    %2 = vector.load %arg3[%c0_2, %c0_3] : memref<128x256xf32, #tpu.memory_space<vmem>>, vector<128x256xf32>
    %cst = arith.constant dense<0.000000e+00> : vector<256x256xf32>
    %3 = tpu.matmul %1, %2, %cst {dimension_numbers = #tpu.dot_dimension_numbers<[1], [0], [0], [1], [0, 0, 1, 1], [], []>} : vector<256x128xf32>, vector<128x256xf32>, vector<256x256xf32> -> vector<256x256xf32>
    %c0_4 = arith.constant 0 : index
    %c0_5 = arith.constant 0 : index
    %4 = vector.load %arg4[%c0_4, %c0_5] : memref<1x256xf32, #tpu.memory_space<vmem>>, vector<1x256xf32>
    %5 = vector.broadcast %4 : vector<1x256xf32> to vector<256x256xf32>
    %6 = arith.addf %3, %5 : vector<256x256xf32>
    %7 = vector.extract_strided_slice %6 {offsets = [0, 0], sizes = [256, 128], strides = [1, 1]} : vector<256x256xf32> to vector<256x128xf32>
    %c0_6 = arith.constant 0 : index
    %c0_7 = arith.constant 0 : index
    %c0_8 = arith.constant 0 : index
    %8 = vector.load %arg5[%c0_6, %c0_7, %c0_8] : memref<1x256x128xf32, #tpu.memory_space<vmem>>, vector<1x256x128xf32>
    %9 = vector.shape_cast %8 : vector<1x256x128xf32> to vector<256x128xf32>
    %10 = vector.shape_cast %7 : vector<256x128xf32> to vector<1x256x128xf32>
    tpu.vector_store %arg5[%c0_6, %c0_7, %c0_8], %10 {strides = array<i32>} : memref<1x256x128xf32, #tpu.memory_space<vmem>>, vector<1x256x128xf32>,
    %11 = vector.extract_strided_slice %6 {offsets = [0, 128], sizes = [256, 128], strides = [1, 1]} : vector<256x256xf32> to vector<256x128xf32>
    %c0_9 = arith.constant 0 : index
    %c0_10 = arith.constant 0 : index
    %c0_11 = arith.constant 0 : index
    %12 = vector.load %arg6[%c0_9, %c0_10, %c0_11] : memref<1x256x128xf32, #tpu.memory_space<vmem>>, vector<1x256x128xf32>
    %13 = vector.shape_cast %12 : vector<1x256x128xf32> to vector<256x128xf32>
    %14 = vector.shape_cast %11 : vector<256x128xf32> to vector<1x256x128xf32>
    tpu.vector_store %arg6[%c0_9, %c0_10, %c0_11], %14 {strides = array<i32>} : memref<1x256x128xf32, #tpu.memory_space<vmem>>, vector<1x256x128xf32>,
    return
  }
  func.func @transform_0(%arg0: i32, %arg1: i32) -> (i32, i32, i32) {
    %c0_i32 = arith.constant 0 : i32
    %c0_i32_0 = arith.constant 0 : i32
    return %arg0, %arg1, %c0_i32 : i32, i32, i32
  }
  func.func @transform_1(%arg0: i32, %arg1: i32) -> (i32, i32) {
    %c0_i32 = arith.constant 0 : i32
    %c0_i32_0 = arith.constant 0 : i32
    %c0_i32_1 = arith.constant 0 : i32
    return %c0_i32, %c0_i32_0 : i32, i32
  }
  func.func @transform_2(%arg0: i32, %arg1: i32) -> (i32, i32) {
    %c0_i32 = arith.constant 0 : i32
    %c0_i32_0 = arith.constant 0 : i32
    %c0_i32_1 = arith.constant 0 : i32
    return %c0_i32, %c0_i32_0 : i32, i32
  }
  func.func @transform_3(%arg0: i32, %arg1: i32) -> (i32, i32, i32) {
    %c0_i32 = arith.constant 0 : i32
    %c0_i32_0 = arith.constant 0 : i32
    return %arg0, %arg1, %c0_i32 : i32, i32, i32
  }
  func.func @transform_4(%arg0: i32, %arg1: i32) -> (i32, i32, i32) {
    %c0_i32 = arith.constant 0 : i32
    %c0_i32_0 = arith.constant 0 : i32
    return %arg0, %arg1, %c0_i32 : i32, i32, i32
  }
}

module attributes {stable_mosaic.version = 11 : i64} {
  func.func @kv_proj_kernel(%arg0: i32, %arg1: i32, %arg2: memref<1x256x128xf32, #tpu.memory_space<vmem>>, %arg3: memref<128x256xf32, #tpu.memory_space<vmem>>, %arg4: memref<1x256xf32, #tpu.memory_space<vmem>>, %arg5: memref<1x256x128xf32, #tpu.memory_space<vmem>>, %arg6: memref<1x256x128xf32, #tpu.memory_space<vmem>>) attributes {dimension_semantics = [#tpu.dimension_semantics<parallel>, #tpu.dimension_semantics<parallel>], iteration_bounds = array<i64: 2, 1>, scalar_prefetch = 0 : i64, scratch_operands = 0 : i64, tpu.core_type = #tpu.core_type<tc>, window_params = [{transform_indices = @transform_0, window_bounds = array<i64: 1, 256, 128>}, {pipeline_mode = #tpu.pipeline_mode<synchronous>, transform_indices = @transform_1, window_bounds = array<i64: 128, 256>}, {pipeline_mode = #tpu.pipeline_mode<synchronous>, transform_indices = @transform_2, window_bounds = array<i64: 1, 256>}, {transform_indices = @transform_3, window_bounds = array<i64: 1, 256, 128>}, {transform_indices = @transform_4, window_bounds = array<i64: 1, 256, 128>}]} {
    %c0 = arith.constant 0 : index
    %c0_0 = arith.constant 0 : index
    %c0_1 = arith.constant 0 : index
    %0 = vector.load %arg2[%c0, %c0_0, %c0_1] : memref<1x256x128xf32, #tpu.memory_space<vmem>>, vector<1x256x128xf32>
    %1 = vector.shape_cast %0 : vector<1x256x128xf32> to vector<256x128xf32>
    %c0_2 = arith.constant 0 : index
    %c0_3 = arith.constant 0 : index
    %2 = vector.load %arg3[%c0_2, %c0_3] : memref<128x256xf32, #tpu.memory_space<vmem>>, vector<128x256xf32>
    %cst = arith.constant dense<0.000000e+00> : vector<256x256xf32>
    %3 = tpu.matmul %1, %2, %cst {dimension_numbers = #tpu.dot_dimension_numbers<[1], [0], [0], [1], [0, 0, 1, 1], [], []>} : vector<256x128xf32>, vector<128x256xf32>, vector<256x256xf32> -> vector<256x256xf32>
    %c0_4 = arith.constant 0 : index
    %c0_5 = arith.constant 0 : index
    %4 = vector.load %arg4[%c0_4, %c0_5] : memref<1x256xf32, #tpu.memory_space<vmem>>, vector<1x256xf32>
    %5 = vector.broadcast %4 : vector<1x256xf32> to vector<256x256xf32>
    %6 = arith.addf %3, %5 : vector<256x256xf32>
    %7 = vector.extract_strided_slice %6 {offsets = [0, 0], sizes = [256, 128], strides = [1, 1]} : vector<256x256xf32> to vector<256x128xf32>
    %c0_6 = arith.constant 0 : index
    %c0_7 = arith.constant 0 : index
    %c0_8 = arith.constant 0 : index
    %8 = vector.load %arg5[%c0_6, %c0_7, %c0_8] : memref<1x256x128xf32, #tpu.memory_space<vmem>>, vector<1x256x128xf32>
    %9 = vector.shape_cast %8 : vector<1x256x128xf32> to vector<256x128xf32>
    %10 = vector.shape_cast %7 : vector<256x128xf32> to vector<1x256x128xf32>
    tpu.vector_store %arg5[%c0_6, %c0_7, %c0_8], %10 {strides = array<i32>} : memref<1x256x128xf32, #tpu.memory_space<vmem>>, vector<1x256x128xf32>,
    %11 = vector.extract_strided_slice %6 {offsets = [0, 128], sizes = [256, 128], strides = [1, 1]} : vector<256x256xf32> to vector<256x128xf32>
    %c0_9 = arith.constant 0 : index
    %c0_10 = arith.constant 0 : index
    %c0_11 = arith.constant 0 : index
    %12 = vector.load %arg6[%c0_9, %c0_10, %c0_11] : memref<1x256x128xf32, #tpu.memory_space<vmem>>, vector<1x256x128xf32>
    %13 = vector.shape_cast %12 : vector<1x256x128xf32> to vector<256x128xf32>
    %14 = vector.shape_cast %11 : vector<256x128xf32> to vector<1x256x128xf32>
    tpu.vector_store %arg6[%c0_9, %c0_10, %c0_11], %14 {strides = array<i32>} : memref<1x256x128xf32, #tpu.memory_space<vmem>>, vector<1x256x128xf32>,
    return
  }
  func.func @transform_0(%arg0: i32, %arg1: i32) -> (i32, i32, i32) {
    %c0_i32 = arith.constant 0 : i32
    %c0_i32_0 = arith.constant 0 : i32
    return %arg0, %arg1, %c0_i32 : i32, i32, i32
  }
  func.func @transform_1(%arg0: i32, %arg1: i32) -> (i32, i32) {
    %c0_i32 = arith.constant 0 : i32
    %c0_i32_0 = arith.constant 0 : i32
    %c0_i32_1 = arith.constant 0 : i32
    return %c0_i32, %c0_i32_0 : i32, i32
  }
  func.func @transform_2(%arg0: i32, %arg1: i32) -> (i32, i32) {
    %c0_i32 = arith.constant 0 : i32
    %c0_i32_0 = arith.constant 0 : i32
    %c0_i32_1 = arith.constant 0 : i32
    return %c0_i32, %c0_i32_0 : i32, i32
  }
  func.func @transform_3(%arg0: i32, %arg1: i32) -> (i32, i32, i32) {
    %c0_i32 = arith.constant 0 : i32
    %c0_i32_0 = arith.constant 0 : i32
    return %arg0, %arg1, %c0_i32 : i32, i32, i32
  }
  func.func @transform_4(%arg0: i32, %arg1: i32) -> (i32, i32, i32) {
    %c0_i32 = arith.constant 0 : i32
    %c0_i32_0 = arith.constant 0 : i32
    return %arg0, %arg1, %c0_i32 : i32, i32, i32
  }
}

module attributes {stable_mosaic.version = 11 : i64} {
  func.func @kv_proj_kernel(%arg0: i32, %arg1: i32, %arg2: memref<1x256x128xf32, #tpu.memory_space<vmem>>, %arg3: memref<128x256xf32, #tpu.memory_space<vmem>>, %arg4: memref<1x256xf32, #tpu.memory_space<vmem>>, %arg5: memref<1x256x128xf32, #tpu.memory_space<vmem>>, %arg6: memref<1x256x128xf32, #tpu.memory_space<vmem>>) attributes {dimension_semantics = [#tpu.dimension_semantics<parallel>, #tpu.dimension_semantics<parallel>], iteration_bounds = array<i64: 2, 1>, scalar_prefetch = 0 : i64, scratch_operands = 0 : i64, tpu.core_type = #tpu.core_type<tc>, window_params = [{transform_indices = @transform_0, window_bounds = array<i64: 1, 256, 128>}, {pipeline_mode = #tpu.pipeline_mode<synchronous>, transform_indices = @transform_1, window_bounds = array<i64: 128, 256>}, {pipeline_mode = #tpu.pipeline_mode<synchronous>, transform_indices = @transform_2, window_bounds = array<i64: 1, 256>}, {transform_indices = @transform_3, window_bounds = array<i64: 1, 256, 128>}, {transform_indices = @transform_4, window_bounds = array<i64: 1, 256, 128>}]} {
    %c0 = arith.constant 0 : index
    %c0_0 = arith.constant 0 : index
    %c0_1 = arith.constant 0 : index
    %0 = vector.load %arg2[%c0, %c0_0, %c0_1] : memref<1x256x128xf32, #tpu.memory_space<vmem>>, vector<1x256x128xf32>
    %1 = vector.shape_cast %0 : vector<1x256x128xf32> to vector<256x128xf32>
    %c0_2 = arith.constant 0 : index
    %c0_3 = arith.constant 0 : index
    %2 = vector.load %arg3[%c0_2, %c0_3] : memref<128x256xf32, #tpu.memory_space<vmem>>, vector<128x256xf32>
    %cst = arith.constant dense<0.000000e+00> : vector<256x256xf32>
    %3 = tpu.matmul %1, %2, %cst {dimension_numbers = #tpu.dot_dimension_numbers<[1], [0], [0], [1], [0, 0, 1, 1], [], []>} : vector<256x128xf32>, vector<128x256xf32>, vector<256x256xf32> -> vector<256x256xf32>
    %c0_4 = arith.constant 0 : index
    %c0_5 = arith.constant 0 : index
    %4 = vector.load %arg4[%c0_4, %c0_5] : memref<1x256xf32, #tpu.memory_space<vmem>>, vector<1x256xf32>
    %5 = vector.broadcast %4 : vector<1x256xf32> to vector<256x256xf32>
    %6 = arith.addf %3, %5 : vector<256x256xf32>
    %7 = vector.extract_strided_slice %6 {offsets = [0, 0], sizes = [256, 128], strides = [1, 1]} : vector<256x256xf32> to vector<256x128xf32>
    %c0_6 = arith.constant 0 : index
    %c0_7 = arith.constant 0 : index
    %c0_8 = arith.constant 0 : index
    %8 = vector.load %arg5[%c0_6, %c0_7, %c0_8] : memref<1x256x128xf32, #tpu.memory_space<vmem>>, vector<1x256x128xf32>
    %9 = vector.shape_cast %8 : vector<1x256x128xf32> to vector<256x128xf32>
    %10 = vector.shape_cast %7 : vector<256x128xf32> to vector<1x256x128xf32>
    tpu.vector_store %arg5[%c0_6, %c0_7, %c0_8], %10 {strides = array<i32>} : memref<1x256x128xf32, #tpu.memory_space<vmem>>, vector<1x256x128xf32>,
    %11 = vector.extract_strided_slice %6 {offsets = [0, 128], sizes = [256, 128], strides = [1, 1]} : vector<256x256xf32> to vector<256x128xf32>
    %c0_9 = arith.constant 0 : index
    %c0_10 = arith.constant 0 : index
    %c0_11 = arith.constant 0 : index
    %12 = vector.load %arg6[%c0_9, %c0_10, %c0_11] : memref<1x256x128xf32, #tpu.memory_space<vmem>>, vector<1x256x128xf32>
    %13 = vector.shape_cast %12 : vector<1x256x128xf32> to vector<256x128xf32>
    %14 = vector.shape_cast %11 : vector<256x128xf32> to vector<1x256x128xf32>
    tpu.vector_store %arg6[%c0_9, %c0_10, %c0_11], %14 {strides = array<i32>} : memref<1x256x128xf32, #tpu.memory_space<vmem>>, vector<1x256x128xf32>,
    return
  }
  func.func @transform_0(%arg0: i32, %arg1: i32) -> (i32, i32, i32) {
    %c0_i32 = arith.constant 0 : i32
    %c0_i32_0 = arith.constant 0 : i32
    return %arg0, %arg1, %c0_i32 : i32, i32, i32
  }
  func.func @transform_1(%arg0: i32, %arg1: i32) -> (i32, i32) {
    %c0_i32 = arith.constant 0 : i32
    %c0_i32_0 = arith.constant 0 : i32
    %c0_i32_1 = arith.constant 0 : i32
    return %c0_i32, %c0_i32_0 : i32, i32
  }
  func.func @transform_2(%arg0: i32, %arg1: i32) -> (i32, i32) {
    %c0_i32 = arith.constant 0 : i32
    %c0_i32_0 = arith.constant 0 : i32
    %c0_i32_1 = arith.constant 0 : i32
    return %c0_i32, %c0_i32_0 : i32, i32
  }
  func.func @transform_3(%arg0: i32, %arg1: i32) -> (i32, i32, i32) {
    %c0_i32 = arith.constant 0 : i32
    %c0_i32_0 = arith.constant 0 : i32
    return %arg0, %arg1, %c0_i32 : i32, i32, i32
  }
  func.func @transform_4(%arg0: i32, %arg1: i32) -> (i32, i32, i32) {
    %c0_i32 = arith.constant 0 : i32
    %c0_i32_0 = arith.constant 0 : i32
    return %arg0, %arg1, %c0_i32 : i32, i32, i32
  }
}

</mosaic_0001>

<llo_original>
// kernel: tpu_custom_call.1
$region0: #{tpu_custom_call.1}
  #allocation0 [shape = 'u32[]', space=smem, size = 0x4, offset = 0x4, fixed_abs, tag = 'smem constant byte address 0x4 - core index']
  #allocation1 [shape = 'u32[144,128]{1,0:T(1,128)}', space=vmem, size = 0x12000, scoped, tag = 'internal scratch']
  %s0 = inlined_call_operand.hbm [shape: f32[2,256,128], index: 0, kind: input, shape index: {}]
  %s1 = inlined_call_operand.hbm [shape: f32[128,256], index: 1, kind: input, shape index: {}]
  %s2 = inlined_call_operand.vmem [shape: f32[1,256], index: 2, kind: input, shape index: {}]
  %s3 = inlined_call_operand.hbm [shape: f32[2,256,128], index: 3, kind: output, shape index: {0}]
  %s4 = inlined_call_operand.hbm [shape: f32[2,256,128], index: 4, kind: output, shape index: {1}]
  %5 = xla_tuple %s3, %s4
  %s6 = sld [smem:[#allocation0]]
  $region61: #{tpu_custom_call.1} parent=0
    _
  %s8 = ssub.s32 1, %s6
  %s9 = scalar_select 0, %s8, %s6
  $region1: #{tpu_custom_call.1} parent=0
    #allocation2 [shape = 'u8[262144]{0}', space=vmem, size = 0x40000, scoped, tag = 'input window, operand 0']
    #allocation3 [shape = 's32[2]{0}', space=sflag, size = 0x8, scoped, tag = 'scoped memory for tpu_custom_call.1']
    #allocation4 [shape = 's32[2]{0}', space=sflag, size = 0x8, scoped, tag = 'scoped memory for tpu_custom_call.1']
    #allocation5 [shape = 'u8[131072]{0}', space=vmem, size = 0x20000, scoped, tag = 'input window, operand 1, single buffered']
    #allocation6 [shape = 's32[1]{0}', space=sflag, size = 0x4, scoped, tag = 'scoped memory for tpu_custom_call.1']
    #allocation7 [shape = 'u8[262144]{0}', space=vmem, size = 0x40000, scoped, tag = 'output window, operand 0']
    #allocation8 [shape = 'u8[262144]{0}', space=vmem, size = 0x40000, scoped, tag = 'output window, operand 1']
    #allocation9 [shape = 's32[2]{0}', space=sflag, size = 0x8, scoped, tag = 'scoped memory for tpu_custom_call.1']
    %10 = vsyncpa [#allocation3], 0
    %s11 = scalar_lea.sflag [#allocation3], 1
    %12 = vsyncpa %s11, 0
    %13 = vsyncpa [#allocation6], 0
    %14 = vsyncpa [#allocation4], 0
    %s15 = scalar_lea.sflag [#allocation4], 1
    %16 = vsyncpa %s15, 0
    %17 = vsyncpa [#allocation9], 0
    %s18 = scalar_lea.sflag [#allocation9], 1
    %19 = vsyncpa %s18, 0
    loop: start=0, step=1, limit=4
    $region2: #{tpu_custom_call.1} parent=1 // loop_pre_header
      _
    $region3: #{tpu_custom_call.1} parent=1 // loop_header
      %s21 = sphi 0, %s25
      %p22 = scmp.ge.s32.totalorder %s21, 4
      %s28 = sphi 0, %s40
      %s29 = sphi 0, %s36
      %s30 = sphi 0, %s28
      %s31 = sphi 0, %s29
      %s32 = sphi 0, %s30
      %s33 = sphi 0, %s31
      %s45 = sphi 0, %s47
      %s48 = sphi 0, %s45
      %s49 = sphi 0, %s48
      %s65 = sphi 0, %s49
      %s69 = sphi 0, %s69
      %s71 = sphi 0, %s69
      %s72 = sphi 0, %s71
      %s86 = sphi 0, %s72
      %s90 = sphi 0, %s90
      %s92 = sphi 0, %s90
      %s93 = sphi 0, %s92
      %s107 = sphi 0, %s93
      %s115 = sphi 0, %s117
      %s118 = sphi 0, %s115
      %s119 = sphi 0, %s118
      %s135 = sphi 0, %s119
      %s143 = sphi 0, %s145
      %s146 = sphi 0, %s143
      %s147 = sphi 0, %s146
      %s163 = sphi 0, %s147
    $region4: #{tpu_custom_call.1} parent=1 // loop_header_branch
      %24 = sbr.rel (%p22) target = $region8
    $region5: #{tpu_custom_call.1} parent=1 // loop_body
      %s26 = ssub.s32 %s21, 1
      %s27 = ssub.s32 %s21, 2
      %s34 = sadd.s32 1, %s29
      %p35 = scmp.ge.s32.totalorder %s34, 1
      %s36 = scalar_select %p35, 0, %s34
      %s37 = sadd.s32 1, %s28
      %s38 = scalar_select %p35, %s37, %s28
      %p39 = scmp.ge.s32.totalorder %s38, 2
      %s40 = scalar_select %p39, 0, %s38
      %s41 = ssub.s32 %s28, %s40
      %s42 = ssub.s32 %s29, %s36
      %s43 = sor.u32 %s41, %s42
      %p44 = scmp.eq.s32.totalorder %s43, 0
      %s46 = sadd.s32 %s45, 1
      %s47 = scalar_select %p44, %s45, %s46
      %p50 = pneg %p44
      %p51 = scmp.eq.s32.totalorder %s21, 1
      %p52 = por %p50, %p51
      %p53 = scmp.ne.s32.totalorder %s45, %s48
      %p54 = scmp.eq.s32.totalorder %s21, 0
      %p55 = por %p53, %p54
      %p56 = scmp.ne.s32.totalorder %s45, %s48
      %p57 = scmp.eq.s32.totalorder %s26, 1
      %p58 = por %p56, %p57
      %p59 = scmp.ne.s32.totalorder %s48, %s49
      %p60 = scmp.eq.s32.totalorder %s26, 0
      %p61 = por %p59, %p60
      %p62 = scmp.ne.s32.totalorder %s48, %s49
      %p63 = scmp.eq.s32.totalorder %s27, 1
      %p64 = por %p62, %p63
      %p66 = scmp.ne.s32.totalorder %s49, %s65
      %p67 = scmp.eq.s32.totalorder %s27, 0
      %p68 = por %p66, %p67
      %s70 = sadd.s32 %s69, 1
      %p73 = scmp.eq.s32.totalorder %s21, 1
      %p74 = scmp.ne.s32.totalorder %s69, %s71
      %p75 = scmp.eq.s32.totalorder %s21, 0
      %p76 = por %p74, %p75
      %p77 = scmp.ne.s32.totalorder %s69, %s71
      %p78 = scmp.eq.s32.totalorder %s26, 1
      %p79 = por %p77, %p78
      %p80 = scmp.ne.s32.totalorder %s71, %s72
      %p81 = scmp.eq.s32.totalorder %s26, 0
      %p82 = por %p80, %p81
      %p83 = scmp.ne.s32.totalorder %s71, %s72
      %p84 = scmp.eq.s32.totalorder %s27, 1
      %p85 = por %p83, %p84
      %p87 = scmp.ne.s32.totalorder %s72, %s86
      %p88 = scmp.eq.s32.totalorder %s27, 0
      %p89 = por %p87, %p88
      %s91 = sadd.s32 %s90, 1
      %p94 = scmp.eq.s32.totalorder %s21, 1
      %p95 = scmp.ne.s32.totalorder %s90, %s92
      %p96 = scmp.eq.s32.totalorder %s21, 0
      %p97 = por %p95, %p96
      %p98 = scmp.ne.s32.totalorder %s90, %s92
      %p99 = scmp.eq.s32.totalorder %s26, 1
      %p100 = por %p98, %p99
      %p101 = scmp.ne.s32.totalorder %s92, %s93
      %p102 = scmp.eq.s32.totalorder %s26, 0
      %p103 = por %p101, %p102
      %p104 = scmp.ne.s32.totalorder %s92, %s93
      %p105 = scmp.eq.s32.totalorder %s27, 1
      %p106 = por %p104, %p105
      %p108 = scmp.ne.s32.totalorder %s93, %s107
      %p109 = scmp.eq.s32.totalorder %s27, 0
      %p110 = por %p108, %p109
      %s111 = ssub.s32 %s28, %s40
      %s112 = ssub.s32 %s29, %s36
      %s113 = sor.u32 %s111, %s112
      %p114 = scmp.eq.s32.totalorder %s113, 0
      %s116 = sadd.s32 %s115, 1
      %s117 = scalar_select %p114, %s115, %s116
      %p120 = pneg %p114
      %p121 = scmp.eq.s32.totalorder %s21, 1
      %p122 = por %p120, %p121
      %p123 = scmp.ne.s32.totalorder %s115, %s118
      %p124 = scmp.eq.s32.totalorder %s21, 0
      %p125 = por %p123, %p124
      %p126 = scmp.ne.s32.totalorder %s115, %s118
      %p127 = scmp.eq.s32.totalorder %s26, 1
      %p128 = por %p126, %p127
      %p129 = scmp.ne.s32.totalorder %s118, %s119
      %p130 = scmp.eq.s32.totalorder %s26, 0
      %p131 = por %p129, %p130
      %p132 = scmp.ne.s32.totalorder %s118, %s119
      %p133 = scmp.eq.s32.totalorder %s27, 1
      %p134 = por %p132, %p133
      %p136 = scmp.ne.s32.totalorder %s119, %s135
      %p137 = scmp.eq.s32.totalorder %s27, 0
      %p138 = por %p136, %p137
      %s139 = ssub.s32 %s28, %s40
      %s140 = ssub.s32 %s29, %s36
      %s141 = sor.u32 %s139, %s140
      %p142 = scmp.eq.s32.totalorder %s141, 0
      %s144 = sadd.s32 %s143, 1
      %s145 = scalar_select %p142, %s143, %s144
      %p148 = pneg %p142
      %p149 = scmp.eq.s32.totalorder %s21, 1
      %p150 = por %p148, %p149
      %p151 = scmp.ne.s32.totalorder %s143, %s146
      %p152 = scmp.eq.s32.totalorder %s21, 0
      %p153 = por %p151, %p152
      %p154 = scmp.ne.s32.totalorder %s143, %s146
      %p155 = scmp.eq.s32.totalorder %s26, 1
      %p156 = por %p154, %p155
      %p157 = scmp.ne.s32.totalorder %s146, %s147
      %p158 = scmp.eq.s32.totalorder %s26, 0
      %p159 = por %p157, %p158
      %p160 = scmp.ne.s32.totalorder %s146, %s147
      %p161 = scmp.eq.s32.totalorder %s27, 1
      %p162 = por %p160, %p161
      %p164 = scmp.ne.s32.totalorder %s147, %s163
      %p165 = scmp.eq.s32.totalorder %s27, 0
      %p166 = por %p164, %p165
      %p167 = scmp.le.s32.totalorder 1, %s21
      %p168 = scmp.lt.s32.totalorder %s21, 3
      %p169 = pnand %p167, %p168
      %p170 = pneg %p169
      // Predicated region
      $region9: #{tpu_custom_call.1} parent=5 // pred_check
        _
      $region10: #{tpu_custom_call.1} parent=5 // pred_check_branch
        %172 = sbr.rel (%p169) target = $region12
      $region11: #{tpu_custom_call.1} parent=5 // pred_region
        %s173 = ssub.s32 %s21, 1
        // Predicated region
        $region13: #{tpu_custom_call.1} parent=11 // pred_check
          %p174 = pneg %p82
        $region14: #{tpu_custom_call.1} parent=11 // pred_check_branch
          %176 = sbr.rel (%p174) target = $region16
        $region15: #{tpu_custom_call.1} parent=11 // pred_region
          %s178 = ssub.s32 4096, 4096
          %179 = vsyncadd [#allocation6], %s178
          %s180 = sshll.u32 [#allocation5], 4
          %s181 = int_to_ptr.vmem [resolvable:$true] %s180
          %186 = dma.hbm_to_vmem [thread:$0]  %s1, 4096, %s181, [#allocation6], 256, 256, 16
        $region16: #{tpu_custom_call.1} parent=11 // pred_fallthru
          _
        // Predicated region
        $region17: #{tpu_custom_call.1} parent=11 // pred_check
          %p187 = pneg %p103
        $region18: #{tpu_custom_call.1} parent=11 // pred_check_branch
          %189 = sbr.rel (%p187) target = $region20
        $region19: #{tpu_custom_call.1} parent=11 // pred_region
          _
        $region20: #{tpu_custom_call.1} parent=11 // pred_fallthru
          _
      $region12: #{tpu_custom_call.1} parent=5 // pred_fallthru
        _
      %p190 = scmp.lt.s32.totalorder %s21, 2
      // Predicated region
      $region21: #{tpu_custom_call.1} parent=5 // pred_check
        %p191 = pneg %p190
      $region22: #{tpu_custom_call.1} parent=5 // pred_check_branch
        %193 = sbr.rel (%p191) target = $region24
      $region23: #{tpu_custom_call.1} parent=5 // pred_region
        // Predicated region
        $region25: #{tpu_custom_call.1} parent=23 // pred_check
          %p194 = pneg %p55
        $region26: #{tpu_custom_call.1} parent=23 // pred_check_branch
          %196 = sbr.rel (%p194) target = $region28
        $region27: #{tpu_custom_call.1} parent=23 // pred_region
          %s197 = sand.u32 %s45, 1
          %s198 = scalar_lea.sflag [#allocation3], %s197
          %s199 = sand.u32 %s45, 1
          %s200 = smul.addr %s199, 256
          %s201 = scalar_lea.vmem [#allocation2], %s200
          %s202 = smul.u32 32, %s29
          %s204 = ssub.s32 4096, 4096
          %205 = vsyncadd %s198, %s204
          %s206 = smul.addr %s28, 32
          %s207 = sadd.s32 %s202, %s206
          %s208 = smul.addr %s207, 128
          %s209 = scalar_lea.hbm %s0, %s208
          %s210 = sshll.u32 %s201, 4
          %s211 = int_to_ptr.vmem [resolvable:$true] %s210
          %216 = dma.hbm_to_vmem [thread:$0]  %s209, 4096, %s211, %s198, 128, 128, 8
        $region28: #{tpu_custom_call.1} parent=23 // pred_fallthru
          _
      $region24: #{tpu_custom_call.1} parent=5 // pred_fallthru
        _
      %p217 = scmp.le.s32.totalorder 1, %s21
      %p218 = scmp.lt.s32.totalorder %s21, 3
      %p219 = pnand %p217, %p218
      %p220 = pneg %p219
      // Predicated region
      $region29: #{tpu_custom_call.1} parent=5 // pred_check
        _
      $region30: #{tpu_custom_call.1} parent=5 // pred_check_branch
        %222 = sbr.rel (%p219) target = $region32
      $region31: #{tpu_custom_call.1} parent=5 // pred_region
        %s223 = ssub.s32 %s21, 1
        %s224 = sand.u32 %s48, 1
        %s225 = scalar_lea.sflag [#allocation3], %s224
        %s226 = sand.u32 %s48, 1
        %s227 = smul.addr %s226, 256
        %s228 = scalar_lea.vmem [#allocation2], %s227
        // Predicated region
        $region33: #{tpu_custom_call.1} parent=31 // pred_check
          %p229 = pneg %p61
        $region34: #{tpu_custom_call.1} parent=31 // pred_check_branch
          %231 = sbr.rel (%p229) target = $region36
        $region35: #{tpu_custom_call.1} parent=31 // pred_region
          %232 = dma.done %s225, 4096
        $region36: #{tpu_custom_call.1} parent=31 // pred_fallthru
          _
        // Predicated region
        $region37: #{tpu_custom_call.1} parent=31 // pred_check
          %p233 = pneg %p82
        $region38: #{tpu_custom_call.1} parent=31 // pred_check_branch
          %235 = sbr.rel (%p233) target = $region40
        $region39: #{tpu_custom_call.1} parent=31 // pred_region
          %236 = dma.done [#allocation6], 4096
        $region40: #{tpu_custom_call.1} parent=31 // pred_fallthru
          _
        %s237 = sand.u32 %s48, 1
        %s238 = scalar_lea.sflag [#allocation3], %s237
        %s239 = sand.u32 %s48, 1
        %s240 = smul.addr %s239, 256
        %s241 = scalar_lea.vmem [#allocation2], %s240
        %p242 = pneg %p61
        %p243 = pneg %p58
        %p244 = pneg %p82
        %p245 = pneg %p79
        %p246 = pneg %p103
        %p247 = pneg %p100
        %p248 = pneg %p131
        %p249 = pneg %p128
        %s250 = sand.u32 %s118, 1
        %s251 = scalar_lea.sflag [#allocation4], %s250
        %s252 = sand.u32 %s118, 1
        %s253 = smul.addr %s252, 256
        %s254 = scalar_lea.vmem [#allocation7], %s253
        %p255 = pneg %p159
        %p256 = pneg %p156
        %s257 = sand.u32 %s146, 1
        %s258 = scalar_lea.sflag [#allocation9], %s257
        %s259 = sand.u32 %s146, 1
        %s260 = smul.addr %s259, 256
        %s261 = scalar_lea.vmem [#allocation8], %s260
        %s262 = smul.u32 32, %s31
        %s263 = smul.u32 32, %s31
        %s264 = smul.u32 32, %s31
        %v265 = vld [vmem:[%s228] sm:$0xff]
        %v266 = vld [vmem:[%s228 + $0x8] sm:$0xff]
        %v267 = vld [vmem:[%s228 + $0x10] sm:$0xff]
        %v268 = vld [vmem:[%s228 + $0x18] sm:$0xff]
        %v269 = vld [vmem:[%s228 + $0x20] sm:$0xff]
        %v270 = vld [vmem:[%s228 + $0x28] sm:$0xff]
        %v271 = vld [vmem:[%s228 + $0x30] sm:$0xff]
        %v272 = vld [vmem:[%s228 + $0x38] sm:$0xff]
        %v273 = vld [vmem:[%s228 + $0x40] sm:$0xff]
        %v274 = vld [vmem:[%s228 + $0x48] sm:$0xff]
        %v275 = vld [vmem:[%s228 + $0x50] sm:$0xff]
        %v276 = vld [vmem:[%s228 + $0x58] sm:$0xff]
        %v277 = vld [vmem:[%s228 + $0x60] sm:$0xff]
        %v278 = vld [vmem:[%s228 + $0x68] sm:$0xff]
        %v279 = vld [vmem:[%s228 + $0x70] sm:$0xff]
        %v280 = vld [vmem:[%s228 + $0x78] sm:$0xff]
        %v281 = vld [vmem:[%s228 + $0x80] sm:$0xff]
        %v282 = vld [vmem:[%s228 + $0x88] sm:$0xff]
        %v283 = vld [vmem:[%s228 + $0x90] sm:$0xff]
        %v284 = vld [vmem:[%s228 + $0x98] sm:$0xff]
        %v285 = vld [vmem:[%s228 + $0xa0] sm:$0xff]
        %v286 = vld [vmem:[%s228 + $0xa8] sm:$0xff]
        %v287 = vld [vmem:[%s228 + $0xb0] sm:$0xff]
        %v288 = vld [vmem:[%s228 + $0xb8] sm:$0xff]
        %v289 = vld [vmem:[%s228 + $0xc0] sm:$0xff]
        %v290 = vld [vmem:[%s228 + $0xc8] sm:$0xff]
        %v291 = vld [vmem:[%s228 + $0xd0] sm:$0xff]
        %v292 = vld [vmem:[%s228 + $0xd8] sm:$0xff]
        %v293 = vld [vmem:[%s228 + $0xe0] sm:$0xff]
        %v294 = vld [vmem:[%s228 + $0xe8] sm:$0xff]
        %v295 = vld [vmem:[%s228 + $0xf0] sm:$0xff]
        %v296 = vld [vmem:[%s228 + $0xf8] sm:$0xff]
        %v297 = vld [vmem:[#allocation5] sm:$0xff]
        %v298 = vld [vmem:[#allocation5 + $0x8] sm:$0xff]
        %v299 = vld [vmem:[#allocation5 + $0x10] sm:$0xff]
        %v300 = vld [vmem:[#allocation5 + $0x18] sm:$0xff]
        %v301 = vld [vmem:[#allocation5 + $0x20] sm:$0xff]
        %v302 = vld [vmem:[#allocation5 + $0x28] sm:$0xff]
        %v303 = vld [vmem:[#allocation5 + $0x30] sm:$0xff]
        %v304 = vld [vmem:[#allocation5 + $0x38] sm:$0xff]
        %v305 = vld [vmem:[#allocation5 + $0x40] sm:$0xff]
        %v306 = vld [vmem:[#allocation5 + $0x48] sm:$0xff]
        %v307 = vld [vmem:[#allocation5 + $0x50] sm:$0xff]
        %v308 = vld [vmem:[#allocation5 + $0x58] sm:$0xff]
        %v309 = vld [vmem:[#allocation5 + $0x60] sm:$0xff]
        %v310 = vld [vmem:[#allocation5 + $0x68] sm:$0xff]
        %v311 = vld [vmem:[#allocation5 + $0x70] sm:$0xff]
        %v312 = vld [vmem:[#allocation5 + $0x78] sm:$0xff]
        %v313 = vld [vmem:[#allocation5 + $0x80] sm:$0xff]
        %v314 = vld [vmem:[#allocation5 + $0x88] sm:$0xff]
        %v315 = vld [vmem:[#allocation5 + $0x90] sm:$0xff]
        %v316 = vld [vmem:[#allocation5 + $0x98] sm:$0xff]
        %v317 = vld [vmem:[#allocation5 + $0xa0] sm:$0xff]
        %v318 = vld [vmem:[#allocation5 + $0xa8] sm:$0xff]
        %v319 = vld [vmem:[#allocation5 + $0xb0] sm:$0xff]
        %v320 = vld [vmem:[#allocation5 + $0xb8] sm:$0xff]
        %v321 = vld [vmem:[#allocation5 + $0xc0] sm:$0xff]
        %v322 = vld [vmem:[#allocation5 + $0xc8] sm:$0xff]
        %v323 = vld [vmem:[#allocation5 + $0xd0] sm:$0xff]
        %v324 = vld [vmem:[#allocation5 + $0xd8] sm:$0xff]
        %v325 = vld [vmem:[#allocation5 + $0xe0] sm:$0xff]
        %v326 = vld [vmem:[#allocation5 + $0xe8] sm:$0xff]
        %v327 = vld [vmem:[#allocation5 + $0xf0] sm:$0xff]
        %v328 = vld [vmem:[#allocation5 + $0xf8] sm:$0xff]
        %v329 = vld [vmem:[%s2] sm:$0x3]
        %v331 = vlaneseq
        %v332 = vshrl.u32 %v331, 7
        %v333 = vsub.s32 0, %v332
        %v334 = vrot.slane %v329, %v333
        %v335 = vlaneseq
        %v336 = vshrl.u32 %v335, 7
        %v337 = vsub.s32 1, %v336
        %v338 = vrot.slane %v329, %v337
        %341 = vmatprep.subr.mxu0 %v298
        %342 = vmatpush1.msra.mxu0 %v297
        %343 = vmatprep.subr.mxu0 %v300
        %344 = vmatpush1.msra.mxu0 %v299
        %345 = vmatprep.subr.mxu0 %v302
        %346 = vmatpush1.msra.mxu0 %v301
        %347 = vmatprep.subr.mxu0 %v304
        %348 = vmatpush1.msra.mxu0 %v303
        %349 = vmatprep.subr.mxu0 %v306
        %350 = vmatpush1.msra.mxu0 %v305
        %351 = vmatprep.subr.mxu0 %v308
        %352 = vmatpush1.msra.mxu0 %v307
        %353 = vmatprep.subr.mxu0 %v310
        %354 = vmatpush1.msra.mxu0 %v309
        %355 = vmatprep.subr.mxu0 %v312
        %356 = vmatpush1.msra.mxu0 %v311
        %357 = vmatprep.subr.mxu0 %v314
        %358 = vmatpush1.msra.mxu0 %v313
        %359 = vmatprep.subr.mxu0 %v316
        %360 = vmatpush1.msra.mxu0 %v315
        %361 = vmatprep.subr.mxu0 %v318
        %362 = vmatpush1.msra.mxu0 %v317
        %363 = vmatprep.subr.mxu0 %v320
        %364 = vmatpush1.msra.mxu0 %v319
        %365 = vmatprep.subr.mxu0 %v322
        %366 = vmatpush1.msra.mxu0 %v321
        %367 = vmatprep.subr.mxu0 %v324
        %368 = vmatpush1.msra.mxu0 %v323
        %369 = vmatprep.subr.mxu0 %v326
        %370 = vmatpush1.msra.mxu0 %v325
        %371 = vmatprep.subr.mxu0 %v328
        %372 = vmatpush1.msra.mxu0 %v327
        %373 = vmatprep.subr.mxu0 0.0
        %374 = vmatpush1.msra.mxu0 0.0
        %375 = vmatprep.subr.mxu0 0.0
        %376 = vmatpush1.msra.mxu0 0.0
        %377 = vmatprep.subr.mxu0 0.0
        %378 = vmatpush1.msra.mxu0 0.0
        %379 = vmatprep.subr.mxu0 0.0
        %380 = vmatpush1.msra.mxu0 0.0
        %381 = vmatprep.subr.mxu0 0.0
        %382 = vmatpush1.msra.mxu0 0.0
        %383 = vmatprep.subr.mxu0 0.0
        %384 = vmatpush1.msra.mxu0 0.0
        %385 = vmatprep.subr.mxu0 0.0
        %386 = vmatpush1.msra.mxu0 0.0
        %387 = vmatprep.subr.mxu0 0.0
        %388 = vmatpush1.msra.mxu0 0.0
        %389 = vmatprep.subr.mxu0 0.0
        %390 = vmatpush1.msra.mxu0 0.0
        %391 = vmatprep.subr.mxu0 0.0
        %392 = vmatpush1.msra.mxu0 0.0
        %393 = vmatprep.subr.mxu0 0.0
        %394 = vmatpush1.msra.mxu0 0.0
        %395 = vmatprep.subr.mxu0 0.0
        %396 = vmatpush1.msra.mxu0 0.0
        %397 = vmatprep.subr.mxu0 0.0
        %398 = vmatpush1.msra.mxu0 0.0
        %399 = vmatprep.subr.mxu0 0.0
        %400 = vmatpush1.msra.mxu0 0.0
        %401 = vmatprep.subr.mxu0 0.0
        %402 = vmatpush1.msra.mxu0 0.0
        %403 = vmatprep.subr.mxu0 0.0
        %404 = vmatpush1.msra.mxu0 0.0
        %405 = vmatprep.mubr.f32.mxu0 0.0
        %406 = vmatmul.mubr.f32.gmra.mrb[0].mxu0 %v265
        %v407 = vpop.f32.mrb[0].mxu0
        %v408 = vadd.f32 %v334, %v407
        %v409 = vpop.f32.mrb[0].mxu0
        %v410 = vadd.f32 %v338, %v409
        %411 = vmatprep.mubr.f32.mxu0 0.0
        %412 = vmatmul.mubr.f32.gmra.mrb[0].mxu0 %v266
        %v413 = vpop.f32.mrb[0].mxu0
        %v414 = vadd.f32 %v334, %v413
        %v415 = vpop.f32.mrb[0].mxu0
        %v416 = vadd.f32 %v338, %v415
        %417 = vmatprep.mubr.f32.mxu0 0.0
        %418 = vmatmul.mubr.f32.gmra.mrb[0].mxu0 %v267
        %v419 = vpop.f32.mrb[0].mxu0
        %v420 = vadd.f32 %v334, %v419
        %v421 = vpop.f32.mrb[0].mxu0
        %v422 = vadd.f32 %v338, %v421
        %423 = vmatprep.mubr.f32.mxu0 0.0
        %424 = vmatmul.mubr.f32.gmra.mrb[0].mxu0 %v268
        %v425 = vpop.f32.mrb[0].mxu0
        %v426 = vadd.f32 %v334, %v425
        %v427 = vpop.f32.mrb[0].mxu0
        %v428 = vadd.f32 %v338, %v427
        %429 = vmatprep.mubr.f32.mxu0 0.0
        %430 = vmatmul.mubr.f32.gmra.mrb[0].mxu0 %v269
        %v431 = vpop.f32.mrb[0].mxu0
        %v432 = vadd.f32 %v334, %v431
        %v433 = vpop.f32.mrb[0].mxu0
        %v434 = vadd.f32 %v338, %v433
        %435 = vmatprep.mubr.f32.mxu0 0.0
        %436 = vmatmul.mubr.f32.gmra.mrb[0].mxu0 %v270
        %v437 = vpop.f32.mrb[0].mxu0
        %v438 = vadd.f32 %v334, %v437
        %v439 = vpop.f32.mrb[0].mxu0
        %v440 = vadd.f32 %v338, %v439
        %441 = vmatprep.mubr.f32.mxu0 0.0
        %442 = vmatmul.mubr.f32.gmra.mrb[0].mxu0 %v271
        %v443 = vpop.f32.mrb[0].mxu0
        %v444 = vadd.f32 %v334, %v443
        %v445 = vpop.f32.mrb[0].mxu0
        %v446 = vadd.f32 %v338, %v445
        %447 = vmatprep.mubr.f32.mxu0 0.0
        %448 = vmatmul.mubr.f32.gmra.mrb[0].mxu0 %v272
        %v449 = vpop.f32.mrb[0].mxu0
        %v450 = vadd.f32 %v334, %v449
        %v451 = vpop.f32.mrb[0].mxu0
        %v452 = vadd.f32 %v338, %v451
        %453 = vmatprep.mubr.f32.mxu0 0.0
        %454 = vmatmul.mubr.f32.gmra.mrb[0].mxu0 %v273
        %v455 = vpop.f32.mrb[0].mxu0
        %v456 = vadd.f32 %v334, %v455
        %v457 = vpop.f32.mrb[0].mxu0
        %v458 = vadd.f32 %v338, %v457
        %459 = vmatprep.mubr.f32.mxu0 0.0
        %460 = vmatmul.mubr.f32.gmra.mrb[0].mxu0 %v274
        %v461 = vpop.f32.mrb[0].mxu0
        %v462 = vadd.f32 %v334, %v461
        %v463 = vpop.f32.mrb[0].mxu0
        %v464 = vadd.f32 %v338, %v463
        %465 = vmatprep.mubr.f32.mxu0 0.0
        %466 = vmatmul.mubr.f32.gmra.mrb[0].mxu0 %v275
        %v467 = vpop.f32.mrb[0].mxu0
        %v468 = vadd.f32 %v334, %v467
        %v469 = vpop.f32.mrb[0].mxu0
        %v470 = vadd.f32 %v338, %v469
        %471 = vmatprep.mubr.f32.mxu0 0.0
        %472 = vmatmul.mubr.f32.gmra.mrb[0].mxu0 %v276
        %v473 = vpop.f32.mrb[0].mxu0
        %v474 = vadd.f32 %v334, %v473
        %v475 = vpop.f32.mrb[0].mxu0
        %v476 = vadd.f32 %v338, %v475
        %477 = vmatprep.mubr.f32.mxu0 0.0
        %478 = vmatmul.mubr.f32.gmra.mrb[0].mxu0 %v277
        %v479 = vpop.f32.mrb[0].mxu0
        %v480 = vadd.f32 %v334, %v479
        %v481 = vpop.f32.mrb[0].mxu0
        %v482 = vadd.f32 %v338, %v481
        %483 = vmatprep.mubr.f32.mxu0 0.0
        %484 = vmatmul.mubr.f32.gmra.mrb[0].mxu0 %v278
        %v485 = vpop.f32.mrb[0].mxu0
        %v486 = vadd.f32 %v334, %v485
        %v487 = vpop.f32.mrb[0].mxu0
        %v488 = vadd.f32 %v338, %v487
        %489 = vmatprep.mubr.f32.mxu0 0.0
        %490 = vmatmul.mubr.f32.gmra.mrb[0].mxu0 %v279
        %v491 = vpop.f32.mrb[0].mxu0
        %v492 = vadd.f32 %v334, %v491
        %v493 = vpop.f32.mrb[0].mxu0
        %v494 = vadd.f32 %v338, %v493
        %495 = vmatprep.mubr.f32.mxu0 0.0
        %496 = vmatmul.mubr.f32.gmra.mrb[0].mxu0 %v280
        %v497 = vpop.f32.mrb[0].mxu0
        %v498 = vadd.f32 %v334, %v497
        %v499 = vpop.f32.mrb[0].mxu0
        %v500 = vadd.f32 %v338, %v499
        %501 = vmatprep.mubr.f32.mxu0 0.0
        %502 = vmatmul.mubr.f32.gmra.mrb[0].mxu0 %v281
        %v503 = vpop.f32.mrb[0].mxu0
        %v504 = vadd.f32 %v334, %v503
        %v505 = vpop.f32.mrb[0].mxu0
        %v506 = vadd.f32 %v338, %v505
        %507 = vmatprep.mubr.f32.mxu0 0.0
        %508 = vmatmul.mubr.f32.gmra.mrb[0].mxu0 %v282
        %v509 = vpop.f32.mrb[0].mxu0
        %v510 = vadd.f32 %v334, %v509
        %v511 = vpop.f32.mrb[0].mxu0
        %v512 = vadd.f32 %v338, %v511
        %513 = vmatprep.mubr.f32.mxu0 0.0
        %514 = vmatmul.mubr.f32.gmra.mrb[0].mxu0 %v283
        %v515 = vpop.f32.mrb[0].mxu0
        %v516 = vadd.f32 %v334, %v515
        %v517 = vpop.f32.mrb[0].mxu0
        %v518 = vadd.f32 %v338, %v517
        %519 = vmatprep.mubr.f32.mxu0 0.0
        %520 = vmatmul.mubr.f32.gmra.mrb[0].mxu0 %v284
        %v521 = vpop.f32.mrb[0].mxu0
        %v522 = vadd.f32 %v334, %v521
        %v523 = vpop.f32.mrb[0].mxu0
        %v524 = vadd.f32 %v338, %v523
        %525 = vmatprep.mubr.f32.mxu0 0.0
        %526 = vmatmul.mubr.f32.gmra.mrb[0].mxu0 %v285
        %v527 = vpop.f32.mrb[0].mxu0
        %v528 = vadd.f32 %v334, %v527
        %v529 = vpop.f32.mrb[0].mxu0
        %v530 = vadd.f32 %v338, %v529
        %531 = vmatprep.mubr.f32.mxu0 0.0
        %532 = vmatmul.mubr.f32.gmra.mrb[0].mxu0 %v286
        %v533 = vpop.f32.mrb[0].mxu0
        %v534 = vadd.f32 %v334, %v533
        %v535 = vpop.f32.mrb[0].mxu0
        %v536 = vadd.f32 %v338, %v535
        %537 = vmatprep.mubr.f32.mxu0 0.0
        %538 = vmatmul.mubr.f32.gmra.mrb[0].mxu0 %v287
        %v539 = vpop.f32.mrb[0].mxu0
        %v540 = vadd.f32 %v334, %v539
        %v541 = vpop.f32.mrb[0].mxu0
        %v542 = vadd.f32 %v338, %v541
        %543 = vmatprep.mubr.f32.mxu0 0.0
        %544 = vmatmul.mubr.f32.gmra.mrb[0].mxu0 %v288
        %v545 = vpop.f32.mrb[0].mxu0
        %v546 = vadd.f32 %v334, %v545
        %v547 = vpop.f32.mrb[0].mxu0
        %v548 = vadd.f32 %v338, %v547
        %549 = vmatprep.mubr.f32.mxu0 0.0
        %550 = vmatmul.mubr.f32.gmra.mrb[0].mxu0 %v289
        %v551 = vpop.f32.mrb[0].mxu0
        %v552 = vadd.f32 %v334, %v551
        %v553 = vpop.f32.mrb[0].mxu0
        %v554 = vadd.f32 %v338, %v553
        %555 = vmatprep.mubr.f32.mxu0 0.0
        %556 = vmatmul.mubr.f32.gmra.mrb[0].mxu0 %v290
        %v557 = vpop.f32.mrb[0].mxu0
        %v558 = vadd.f32 %v334, %v557
        %v559 = vpop.f32.mrb[0].mxu0
        %v560 = vadd.f32 %v338, %v559
        %561 = vmatprep.mubr.f32.mxu0 0.0
        %562 = vmatmul.mubr.f32.gmra.mrb[0].mxu0 %v291
        %v563 = vpop.f32.mrb[0].mxu0
        %v564 = vadd.f32 %v334, %v563
        %v565 = vpop.f32.mrb[0].mxu0
        %v566 = vadd.f32 %v338, %v565
        %567 = vmatprep.mubr.f32.mxu0 0.0
        %568 = vmatmul.mubr.f32.gmra.mrb[0].mxu0 %v292
        %v569 = vpop.f32.mrb[0].mxu0
        %v570 = vadd.f32 %v334, %v569
        %v571 = vpop.f32.mrb[0].mxu0
        %v572 = vadd.f32 %v338, %v571
        %573 = vmatprep.mubr.f32.mxu0 0.0
        %574 = vmatmul.mubr.f32.gmra.mrb[0].mxu0 %v293
        %v575 = vpop.f32.mrb[0].mxu0
        %v576 = vadd.f32 %v334, %v575
        %v577 = vpop.f32.mrb[0].mxu0
        %v578 = vadd.f32 %v338, %v577
        %579 = vmatprep.mubr.f32.mxu0 0.0
        %580 = vmatmul.mubr.f32.gmra.mrb[0].mxu0 %v294
        %v581 = vpop.f32.mrb[0].mxu0
        %v582 = vadd.f32 %v334, %v581
        %v583 = vpop.f32.mrb[0].mxu0
        %v584 = vadd.f32 %v338, %v583
        %585 = vmatprep.mubr.f32.mxu0 0.0
        %586 = vmatmul.mubr.f32.gmra.mrb[0].mxu0 %v295
        %v587 = vpop.f32.mrb[0].mxu0
        %v588 = vadd.f32 %v334, %v587
        %v589 = vpop.f32.mrb[0].mxu0
        %v590 = vadd.f32 %v338, %v589
        %591 = vmatprep.mubr.f32.mxu0 0.0
        %592 = vmatmul.mubr.f32.gmra.mrb[0].mxu0 %v296
        %v593 = vpop.f32.mrb[0].mxu0
        %v594 = vadd.f32 %v334, %v593
        %v595 = vpop.f32.mrb[0].mxu0
        %v596 = vadd.f32 %v338, %v595
        %597 = vdwg.mxu0
        %598 = vst [vmem:[%s254] sm:$0xff] %v408
        %599 = vst [vmem:[%s254 + $0x8] sm:$0xff] %v414
        %600 = vst [vmem:[%s254 + $0x10] sm:$0xff] %v420
        %601 = vst [vmem:[%s254 + $0x18] sm:$0xff] %v426
        %602 = vst [vmem:[%s254 + $0x20] sm:$0xff] %v432
        %603 = vst [vmem:[%s254 + $0x28] sm:$0xff] %v438
        %604 = vst [vmem:[%s254 + $0x30] sm:$0xff] %v444
        %605 = vst [vmem:[%s254 + $0x38] sm:$0xff] %v450
        %606 = vst [vmem:[%s254 + $0x40] sm:$0xff] %v456
        %607 = vst [vmem:[%s254 + $0x48] sm:$0xff] %v462
        %608 = vst [vmem:[%s254 + $0x50] sm:$0xff] %v468
        %609 = vst [vmem:[%s254 + $0x58] sm:$0xff] %v474
        %610 = vst [vmem:[%s254 + $0x60] sm:$0xff] %v480
        %611 = vst [vmem:[%s254 + $0x68] sm:$0xff] %v486
        %612 = vst [vmem:[%s254 + $0x70] sm:$0xff] %v492
        %613 = vst [vmem:[%s254 + $0x78] sm:$0xff] %v498
        %614 = vst [vmem:[%s254 + $0x80] sm:$0xff] %v504
        %615 = vst [vmem:[%s254 + $0x88] sm:$0xff] %v510
        %616 = vst [vmem:[%s254 + $0x90] sm:$0xff] %v516
        %617 = vst [vmem:[%s254 + $0x98] sm:$0xff] %v522
        %618 = vst [vmem:[%s254 + $0xa0] sm:$0xff] %v528
        %619 = vst [vmem:[%s254 + $0xa8] sm:$0xff] %v534
        %620 = vst [vmem:[%s254 + $0xb0] sm:$0xff] %v540
        %621 = vst [vmem:[%s254 + $0xb8] sm:$0xff] %v546
        %622 = vst [vmem:[%s254 + $0xc0] sm:$0xff] %v552
        %623 = vst [vmem:[%s254 + $0xc8] sm:$0xff] %v558
        %624 = vst [vmem:[%s254 + $0xd0] sm:$0xff] %v564
        %625 = vst [vmem:[%s254 + $0xd8] sm:$0xff] %v570
        %626 = vst [vmem:[%s254 + $0xe0] sm:$0xff] %v576
        %627 = vst [vmem:[%s254 + $0xe8] sm:$0xff] %v582
        %628 = vst [vmem:[%s254 + $0xf0] sm:$0xff] %v588
        %629 = vst [vmem:[%s254 + $0xf8] sm:$0xff] %v594
        %630 = vst [vmem:[%s261] sm:$0xff] %v410
        %631 = vst [vmem:[%s261 + $0x8] sm:$0xff] %v416
        %632 = vst [vmem:[%s261 + $0x10] sm:$0xff] %v422
        %633 = vst [vmem:[%s261 + $0x18] sm:$0xff] %v428
        %634 = vst [vmem:[%s261 + $0x20] sm:$0xff] %v434
        %635 = vst [vmem:[%s261 + $0x28] sm:$0xff] %v440
        %636 = vst [vmem:[%s261 + $0x30] sm:$0xff] %v446
        %637 = vst [vmem:[%s261 + $0x38] sm:$0xff] %v452
        %638 = vst [vmem:[%s261 + $0x40] sm:$0xff] %v458
        %639 = vst [vmem:[%s261 + $0x48] sm:$0xff] %v464
        %640 = vst [vmem:[%s261 + $0x50] sm:$0xff] %v470
        %641 = vst [vmem:[%s261 + $0x58] sm:$0xff] %v476
        %642 = vst [vmem:[%s261 + $0x60] sm:$0xff] %v482
        %643 = vst [vmem:[%s261 + $0x68] sm:$0xff] %v488
        %644 = vst [vmem:[%s261 + $0x70] sm:$0xff] %v494
        %645 = vst [vmem:[%s261 + $0x78] sm:$0xff] %v500
        %646 = vst [vmem:[%s261 + $0x80] sm:$0xff] %v506
        %647 = vst [vmem:[%s261 + $0x88] sm:$0xff] %v512
        %648 = vst [vmem:[%s261 + $0x90] sm:$0xff] %v518
        %649 = vst [vmem:[%s261 + $0x98] sm:$0xff] %v524
        %650 = vst [vmem:[%s261 + $0xa0] sm:$0xff] %v530
        %651 = vst [vmem:[%s261 + $0xa8] sm:$0xff] %v536
        %652 = vst [vmem:[%s261 + $0xb0] sm:$0xff] %v542
        %653 = vst [vmem:[%s261 + $0xb8] sm:$0xff] %v548
        %654 = vst [vmem:[%s261 + $0xc0] sm:$0xff] %v554
        %655 = vst [vmem:[%s261 + $0xc8] sm:$0xff] %v560
        %656 = vst [vmem:[%s261 + $0xd0] sm:$0xff] %v566
        %657 = vst [vmem:[%s261 + $0xd8] sm:$0xff] %v572
        %658 = vst [vmem:[%s261 + $0xe0] sm:$0xff] %v578
        %659 = vst [vmem:[%s261 + $0xe8] sm:$0xff] %v584
        %660 = vst [vmem:[%s261 + $0xf0] sm:$0xff] %v590
        %661 = vst [vmem:[%s261 + $0xf8] sm:$0xff] %v596
        %s662 = sand.u32 %s118, 1
        %s663 = scalar_lea.sflag [#allocation4], %s662
        %s664 = sand.u32 %s118, 1
        %s665 = smul.addr %s664, 256
        %s666 = scalar_lea.vmem [#allocation7], %s665
        %s667 = sand.u32 %s146, 1
        %s668 = scalar_lea.sflag [#allocation9], %s667
        %s669 = sand.u32 %s146, 1
        %s670 = smul.addr %s669, 256
        %s671 = scalar_lea.vmem [#allocation8], %s670
        // Predicated region
        $region41: #{tpu_custom_call.1} parent=31 // pred_check
          %p672 = pneg %p128
        $region42: #{tpu_custom_call.1} parent=31 // pred_check_branch
          %674 = sbr.rel (%p672) target = $region44
        $region43: #{tpu_custom_call.1} parent=31 // pred_region
          %s675 = smul.u32 32, %s31
          %s677 = ssub.s32 4096, 4096
          %678 = vsyncadd %s663, %s677
          %s679 = smul.addr %s30, 32
          %s680 = sadd.s32 %s675, %s679
          %s681 = smul.addr %s680, 128
          %s682 = scalar_lea.hbm %s3, %s681
          %s683 = sshll.u32 %s666, 4
          %s684 = int_to_ptr.vmem [resolvable:$true] %s683
          %689 = dma.vmem_to_hbm [thread:$0]  %s684, 4096, %s682, %s663, 128, 128, 8
        $region44: #{tpu_custom_call.1} parent=31 // pred_fallthru
          _
        // Predicated region
        $region45: #{tpu_custom_call.1} parent=31 // pred_check
          %p690 = pneg %p156
        $region46: #{tpu_custom_call.1} parent=31 // pred_check_branch
          %692 = sbr.rel (%p690) target = $region48
        $region47: #{tpu_custom_call.1} parent=31 // pred_region
          %s693 = smul.u32 32, %s31
          %s695 = ssub.s32 4096, 4096
          %696 = vsyncadd %s668, %s695
          %s697 = smul.addr %s30, 32
          %s698 = sadd.s32 %s693, %s697
          %s699 = smul.addr %s698, 128
          %s700 = scalar_lea.hbm %s4, %s699
          %s701 = sshll.u32 %s671, 4
          %s702 = int_to_ptr.vmem [resolvable:$true] %s701
          %707 = dma.vmem_to_hbm [thread:$0]  %s702, 4096, %s700, %s668, 128, 128, 8
        $region48: #{tpu_custom_call.1} parent=31 // pred_fallthru
          _
      $region32: #{tpu_custom_call.1} parent=5 // pred_fallthru
        _
      %p708 = scmp.le.s32.totalorder 2, %s21
      // Predicated region
      $region49: #{tpu_custom_call.1} parent=5 // pred_check
        %p709 = pneg %p708
      $region50: #{tpu_custom_call.1} parent=5 // pred_check_branch
        %711 = sbr.rel (%p709) target = $region52
      $region51: #{tpu_custom_call.1} parent=5 // pred_region
        %s712 = ssub.s32 %s21, 2
        // Predicated region
        $region53: #{tpu_custom_call.1} parent=51 // pred_check
          %p713 = pneg %p134
        $region54: #{tpu_custom_call.1} parent=51 // pred_check_branch
          %715 = sbr.rel (%p713) target = $region56
        $region55: #{tpu_custom_call.1} parent=51 // pred_region
          %s716 = sand.u32 %s119, 1
          %s717 = scalar_lea.sflag [#allocation4], %s716
          %s718 = sand.u32 %s119, 1
          %s719 = smul.addr %s718, 256
          %s720 = scalar_lea.vmem [#allocation7], %s719
          %721 = dma.done %s717, 4096
        $region56: #{tpu_custom_call.1} parent=51 // pred_fallthru
          _
        // Predicated region
        $region57: #{tpu_custom_call.1} parent=51 // pred_check
          %p722 = pneg %p162
        $region58: #{tpu_custom_call.1} parent=51 // pred_check_branch
          %724 = sbr.rel (%p722) target = $region60
        $region59: #{tpu_custom_call.1} parent=51 // pred_region
          %s725 = sand.u32 %s147, 1
          %s726 = scalar_lea.sflag [#allocation9], %s725
          %s727 = sand.u32 %s147, 1
          %s728 = smul.addr %s727, 256
          %s729 = scalar_lea.vmem [#allocation8], %s728
          %730 = dma.done %s726, 4096
        $region60: #{tpu_custom_call.1} parent=51 // pred_fallthru
          _
      $region52: #{tpu_custom_call.1} parent=5 // pred_fallthru
        _
    $region6: #{tpu_custom_call.1} parent=1 // loop_footer
      %s25 = sadd.s32 1, %s21
    $region7: #{tpu_custom_call.1} parent=1 // loop_footer_branch
      %20 = sbr.rel target = $region3
    $region8: #{tpu_custom_call.1} parent=1 // loop_exit
      _
    %731 = vsyncpa [#allocation3], 1
    %s732 = scalar_lea.sflag [#allocation3], 1
    %733 = vsyncpa %s732, 1
    %734 = vsyncpa [#allocation6], 1
    %735 = vsyncpa [#allocation4], 1
    %s736 = scalar_lea.sflag [#allocation4], 1
    %737 = vsyncpa %s736, 1
    %738 = vsyncpa [#allocation9], 1
    %s739 = scalar_lea.sflag [#allocation9], 1
    %740 = vsyncpa %s739, 1

// kernel: tpu_custom_call.1
$region0: #{tpu_custom_call.1}
  #allocation0 [shape = 'u32[]', space=smem, size = 0x4, offset = 0x4, fixed_abs, tag = 'smem constant byte address 0x4 - core index']
  #allocation1 [shape = 'u32[144,128]{1,0:T(1,128)}', space=vmem, size = 0x12000, scoped, tag = 'internal scratch']
  %s0 = inlined_call_operand.hbm [shape: f32[2,256,128], index: 0, kind: input, shape index: {}]
  %s1 = inlined_call_operand.hbm [shape: f32[128,256], index: 1, kind: input, shape index: {}]
  %s2 = inlined_call_operand.vmem [shape: f32[1,256], index: 2, kind: input, shape index: {}]
  %s3 = inlined_call_operand.hbm [shape: f32[2,256,128], index: 3, kind: output, shape index: {0}]
  %s4 = inlined_call_operand.hbm [shape: f32[2,256,128], index: 4, kind: output, shape index: {1}]
  %5 = xla_tuple %s3, %s4
  %s6 = sld [smem:[#allocation0]]
  $region61: #{tpu_custom_call.1} parent=0
    _
  %s8 = ssub.s32 1, %s6
  %s9 = scalar_select 0, %s8, %s6
  $region1: #{tpu_custom_call.1} parent=0
    #allocation2 [shape = 'u8[262144]{0}', space=vmem, size = 0x40000, scoped, tag = 'input window, operand 0']
    #allocation3 [shape = 's32[2]{0}', space=sflag, size = 0x8, scoped, tag = 'scoped memory for tpu_custom_call.1']
    #allocation4 [shape = 's32[2]{0}', space=sflag, size = 0x8, scoped, tag = 'scoped memory for tpu_custom_call.1']
    #allocation5 [shape = 'u8[131072]{0}', space=vmem, size = 0x20000, scoped, tag = 'input window, operand 1, single buffered']
    #allocation6 [shape = 's32[1]{0}', space=sflag, size = 0x4, scoped, tag = 'scoped memory for tpu_custom_call.1']
    #allocation7 [shape = 'u8[262144]{0}', space=vmem, size = 0x40000, scoped, tag = 'output window, operand 0']
    #allocation8 [shape = 'u8[262144]{0}', space=vmem, size = 0x40000, scoped, tag = 'output window, operand 1']
    #allocation9 [shape = 's32[2]{0}', space=sflag, size = 0x8, scoped, tag = 'scoped memory for tpu_custom_call.1']
    %10 = vsyncpa [#allocation3], 0
    %s11 = scalar_lea.sflag [#allocation3], 1
    %12 = vsyncpa %s11, 0
    %13 = vsyncpa [#allocation6], 0
    %14 = vsyncpa [#allocation4], 0
    %s15 = scalar_lea.sflag [#allocation4], 1
    %16 = vsyncpa %s15, 0
    %17 = vsyncpa [#allocation9], 0
    %s18 = scalar_lea.sflag [#allocation9], 1
    %19 = vsyncpa %s18, 0
    loop: start=0, step=1, limit=4
    $region2: #{tpu_custom_call.1} parent=1 // loop_pre_header
      _
    $region3: #{tpu_custom_call.1} parent=1 // loop_header
      %s21 = sphi 0, %s25
      %p22 = scmp.ge.s32.totalorder %s21, 4
      %s28 = sphi 0, %s40
      %s29 = sphi 0, %s36
      %s30 = sphi 0, %s28
      %s31 = sphi 0, %s29
      %s32 = sphi 0, %s30
      %s33 = sphi 0, %s31
      %s45 = sphi 0, %s47
      %s48 = sphi 0, %s45
      %s49 = sphi 0, %s48
      %s65 = sphi 0, %s49
      %s69 = sphi 0, %s69
      %s71 = sphi 0, %s69
      %s72 = sphi 0, %s71
      %s86 = sphi 0, %s72
      %s90 = sphi 0, %s90
      %s92 = sphi 0, %s90
      %s93 = sphi 0, %s92
      %s107 = sphi 0, %s93
      %s115 = sphi 0, %s117
      %s118 = sphi 0, %s115
      %s119 = sphi 0, %s118
      %s135 = sphi 0, %s119
      %s143 = sphi 0, %s145
      %s146 = sphi 0, %s143
      %s147 = sphi 0, %s146
      %s163 = sphi 0, %s147
    $region4: #{tpu_custom_call.1} parent=1 // loop_header_branch
      %24 = sbr.rel (%p22) target = $region8
    $region5: #{tpu_custom_call.1} parent=1 // loop_body
      %s26 = ssub.s32 %s21, 1
      %s27 = ssub.s32 %s21, 2
      %s34 = sadd.s32 1, %s29
      %p35 = scmp.ge.s32.totalorder %s34, 1
      %s36 = scalar_select %p35, 0, %s34
      %s37 = sadd.s32 1, %s28
      %s38 = scalar_select %p35, %s37, %s28
      %p39 = scmp.ge.s32.totalorder %s38, 2
      %s40 = scalar_select %p39, 0, %s38
      %s41 = ssub.s32 %s28, %s40
      %s42 = ssub.s32 %s29, %s36
      %s43 = sor.u32 %s41, %s42
      %p44 = scmp.eq.s32.totalorder %s43, 0
      %s46 = sadd.s32 %s45, 1
      %s47 = scalar_select %p44, %s45, %s46
      %p50 = pneg %p44
      %p51 = scmp.eq.s32.totalorder %s21, 1
      %p52 = por %p50, %p51
      %p53 = scmp.ne.s32.totalorder %s45, %s48
      %p54 = scmp.eq.s32.totalorder %s21, 0
      %p55 = por %p53, %p54
      %p56 = scmp.ne.s32.totalorder %s45, %s48
      %p57 = scmp.eq.s32.totalorder %s26, 1
      %p58 = por %p56, %p57
      %p59 = scmp.ne.s32.totalorder %s48, %s49
      %p60 = scmp.eq.s32.totalorder %s26, 0
      %p61 = por %p59, %p60
      %p62 = scmp.ne.s32.totalorder %s48, %s49
      %p63 = scmp.eq.s32.totalorder %s27, 1
      %p64 = por %p62, %p63
      %p66 = scmp.ne.s32.totalorder %s49, %s65
      %p67 = scmp.eq.s32.totalorder %s27, 0
      %p68 = por %p66, %p67
      %s70 = sadd.s32 %s69, 1
      %p73 = scmp.eq.s32.totalorder %s21, 1
      %p74 = scmp.ne.s32.totalorder %s69, %s71
      %p75 = scmp.eq.s32.totalorder %s21, 0
      %p76 = por %p74, %p75
      %p77 = scmp.ne.s32.totalorder %s69, %s71
      %p78 = scmp.eq.s32.totalorder %s26, 1
      %p79 = por %p77, %p78
      %p80 = scmp.ne.s32.totalorder %s71, %s72
      %p81 = scmp.eq.s32.totalorder %s26, 0
      %p82 = por %p80, %p81
      %p83 = scmp.ne.s32.totalorder %s71, %s72
      %p84 = scmp.eq.s32.totalorder %s27, 1
      %p85 = por %p83, %p84
      %p87 = scmp.ne.s32.totalorder %s72, %s86
      %p88 = scmp.eq.s32.totalorder %s27, 0
      %p89 = por %p87, %p88
      %s91 = sadd.s32 %s90, 1
      %p94 = scmp.eq.s32.totalorder %s21, 1
      %p95 = scmp.ne.s32.totalorder %s90, %s92
      %p96 = scmp.eq.s32.totalorder %s21, 0
      %p97 = por %p95, %p96
      %p98 = scmp.ne.s32.totalorder %s90, %s92
      %p99 = scmp.eq.s32.totalorder %s26, 1
      %p100 = por %p98, %p99
      %p101 = scmp.ne.s32.totalorder %s92, %s93
      %p102 = scmp.eq.s32.totalorder %s26, 0
      %p103 = por %p101, %p102
      %p104 = scmp.ne.s32.totalorder %s92, %s93
      %p105 = scmp.eq.s32.totalorder %s27, 1
      %p106 = por %p104, %p105
      %p108 = scmp.ne.s32.totalorder %s93, %s107
      %p109 = scmp.eq.s32.totalorder %s27, 0
      %p110 = por %p108, %p109
      %s111 = ssub.s32 %s28, %s40
      %s112 = ssub.s32 %s29, %s36
      %s113 = sor.u32 %s111, %s112
      %p114 = scmp.eq.s32.totalorder %s113, 0
      %s116 = sadd.s32 %s115, 1
      %s117 = scalar_select %p114, %s115, %s116
      %p120 = pneg %p114
      %p121 = scmp.eq.s32.totalorder %s21, 1
      %p122 = por %p120, %p121
      %p123 = scmp.ne.s32.totalorder %s115, %s118
      %p124 = scmp.eq.s32.totalorder %s21, 0
      %p125 = por %p123, %p124
      %p126 = scmp.ne.s32.totalorder %s115, %s118
      %p127 = scmp.eq.s32.totalorder %s26, 1
      %p128 = por %p126, %p127
      %p129 = scmp.ne.s32.totalorder %s118, %s119
      %p130 = scmp.eq.s32.totalorder %s26, 0
      %p131 = por %p129, %p130
      %p132 = scmp.ne.s32.totalorder %s118, %s119
      %p133 = scmp.eq.s32.totalorder %s27, 1
      %p134 = por %p132, %p133
      %p136 = scmp.ne.s32.totalorder %s119, %s135
      %p137 = scmp.eq.s32.totalorder %s27, 0
      %p138 = por %p136, %p137
      %s139 = ssub.s32 %s28, %s40
      %s140 = ssub.s32 %s29, %s36
      %s141 = sor.u32 %s139, %s140
      %p142 = scmp.eq.s32.totalorder %s141, 0
      %s144 = sadd.s32 %s143, 1
      %s145 = scalar_select %p142, %s143, %s144
      %p148 = pneg %p142
      %p149 = scmp.eq.s32.totalorder %s21, 1
      %p150 = por %p148, %p149
      %p151 = scmp.ne.s32.totalorder %s143, %s146
      %p152 = scmp.eq.s32.totalorder %s21, 0
      %p153 = por %p151, %p152
      %p154 = scmp.ne.s32.totalorder %s143, %s146
      %p155 = scmp.eq.s32.totalorder %s26, 1
      %p156 = por %p154, %p155
      %p157 = scmp.ne.s32.totalorder %s146, %s147
      %p158 = scmp.eq.s32.totalorder %s26, 0
      %p159 = por %p157, %p158
      %p160 = scmp.ne.s32.totalorder %s146, %s147
      %p161 = scmp.eq.s32.totalorder %s27, 1
      %p162 = por %p160, %p161
      %p164 = scmp.ne.s32.totalorder %s147, %s163
      %p165 = scmp.eq.s32.totalorder %s27, 0
      %p166 = por %p164, %p165
      %p167 = scmp.le.s32.totalorder 1, %s21
      %p168 = scmp.lt.s32.totalorder %s21, 3
      %p169 = pnand %p167, %p168
      %p170 = pneg %p169
      // Predicated region
      $region9: #{tpu_custom_call.1} parent=5 // pred_check
        _
      $region10: #{tpu_custom_call.1} parent=5 // pred_check_branch
        %172 = sbr.rel (%p169) target = $region12
      $region11: #{tpu_custom_call.1} parent=5 // pred_region
        %s173 = ssub.s32 %s21, 1
        // Predicated region
        $region13: #{tpu_custom_call.1} parent=11 // pred_check
          %p174 = pneg %p82
        $region14: #{tpu_custom_call.1} parent=11 // pred_check_branch
          %176 = sbr.rel (%p174) target = $region16
        $region15: #{tpu_custom_call.1} parent=11 // pred_region
          %s178 = ssub.s32 4096, 4096
          %179 = vsyncadd [#allocation6], %s178
          %s180 = sshll.u32 [#allocation5], 4
          %s181 = int_to_ptr.vmem [resolvable:$true] %s180
          %186 = dma.hbm_to_vmem [thread:$0]  %s1, 4096, %s181, [#allocation6], 256, 256, 16
        $region16: #{tpu_custom_call.1} parent=11 // pred_fallthru
          _
        // Predicated region
        $region17: #{tpu_custom_call.1} parent=11 // pred_check
          %p187 = pneg %p103
        $region18: #{tpu_custom_call.1} parent=11 // pred_check_branch
          %189 = sbr.rel (%p187) target = $region20
        $region19: #{tpu_custom_call.1} parent=11 // pred_region
          _
        $region20: #{tpu_custom_call.1} parent=11 // pred_fallthru
          _
      $region12: #{tpu_custom_call.1} parent=5 // pred_fallthru
        _
      %p190 = scmp.lt.s32.totalorder %s21, 2
      // Predicated region
      $region21: #{tpu_custom_call.1} parent=5 // pred_check
        %p191 = pneg %p190
      $region22: #{tpu_custom_call.1} parent=5 // pred_check_branch
        %193 = sbr.rel (%p191) target = $region24
      $region23: #{tpu_custom_call.1} parent=5 // pred_region
        // Predicated region
        $region25: #{tpu_custom_call.1} parent=23 // pred_check
          %p194 = pneg %p55
        $region26: #{tpu_custom_call.1} parent=23 // pred_check_branch
          %196 = sbr.rel (%p194) target = $region28
        $region27: #{tpu_custom_call.1} parent=23 // pred_region
          %s197 = sand.u32 %s45, 1
          %s198 = scalar_lea.sflag [#allocation3], %s197
          %s199 = sand.u32 %s45, 1
          %s200 = smul.addr %s199, 256
          %s201 = scalar_lea.vmem [#allocation2], %s200
          %s202 = smul.u32 32, %s29
          %s204 = ssub.s32 4096, 4096
          %205 = vsyncadd %s198, %s204
          %s206 = smul.addr %s28, 32
          %s207 = sadd.s32 %s202, %s206
          %s208 = smul.addr %s207, 128
          %s209 = scalar_lea.hbm %s0, %s208
          %s210 = sshll.u32 %s201, 4
          %s211 = int_to_ptr.vmem [resolvable:$true] %s210
          %216 = dma.hbm_to_vmem [thread:$0]  %s209, 4096, %s211, %s198, 128, 128, 8
        $region28: #{tpu_custom_call.1} parent=23 // pred_fallthru
          _
      $region24: #{tpu_custom_call.1} parent=5 // pred_fallthru
        _
      %p217 = scmp.le.s32.totalorder 1, %s21
      %p218 = scmp.lt.s32.totalorder %s21, 3
      %p219 = pnand %p217, %p218
      %p220 = pneg %p219
      // Predicated region
      $region29: #{tpu_custom_call.1} parent=5 // pred_check
        _
      $region30: #{tpu_custom_call.1} parent=5 // pred_check_branch
        %222 = sbr.rel (%p219) target = $region32
      $region31: #{tpu_custom_call.1} parent=5 // pred_region
        %s223 = ssub.s32 %s21, 1
        %s224 = sand.u32 %s48, 1
        %s225 = scalar_lea.sflag [#allocation3], %s224
        %s226 = sand.u32 %s48, 1
        %s227 = smul.addr %s226, 256
        %s228 = scalar_lea.vmem [#allocation2], %s227
        // Predicated region
        $region33: #{tpu_custom_call.1} parent=31 // pred_check
          %p229 = pneg %p61
        $region34: #{tpu_custom_call.1} parent=31 // pred_check_branch
          %231 = sbr.rel (%p229) target = $region36
        $region35: #{tpu_custom_call.1} parent=31 // pred_region
          %232 = dma.done %s225, 4096
        $region36: #{tpu_custom_call.1} parent=31 // pred_fallthru
          _
        // Predicated region
        $region37: #{tpu_custom_call.1} parent=31 // pred_check
          %p233 = pneg %p82
        $region38: #{tpu_custom_call.1} parent=31 // pred_check_branch
          %235 = sbr.rel (%p233) target = $region40
        $region39: #{tpu_custom_call.1} parent=31 // pred_region
          %236 = dma.done [#allocation6], 4096
        $region40: #{tpu_custom_call.1} parent=31 // pred_fallthru
          _
        %s237 = sand.u32 %s48, 1
        %s238 = scalar_lea.sflag [#allocation3], %s237
        %s239 = sand.u32 %s48, 1
        %s240 = smul.addr %s239, 256
        %s241 = scalar_lea.vmem [#allocation2], %s240
        %p242 = pneg %p61
        %p243 = pneg %p58
        %p244 = pneg %p82
        %p245 = pneg %p79
        %p246 = pneg %p103
        %p247 = pneg %p100
        %p248 = pneg %p131
        %p249 = pneg %p128
        %s250 = sand.u32 %s118, 1
        %s251 = scalar_lea.sflag [#allocation4], %s250
        %s252 = sand.u32 %s118, 1
        %s253 = smul.addr %s252, 256
        %s254 = scalar_lea.vmem [#allocation7], %s253
        %p255 = pneg %p159
        %p256 = pneg %p156
        %s257 = sand.u32 %s146, 1
        %s258 = scalar_lea.sflag [#allocation9], %s257
        %s259 = sand.u32 %s146, 1
        %s260 = smul.addr %s259, 256
        %s261 = scalar_lea.vmem [#allocation8], %s260
        %s262 = smul.u32 32, %s31
        %s263 = smul.u32 32, %s31
        %s264 = smul.u32 32, %s31
        %v265 = vld [vmem:[%s228] sm:$0xff]
        %v266 = vld [vmem:[%s228 + $0x8] sm:$0xff]
        %v267 = vld [vmem:[%s228 + $0x10] sm:$0xff]
        %v268 = vld [vmem:[%s228 + $0x18] sm:$0xff]
        %v269 = vld [vmem:[%s228 + $0x20] sm:$0xff]
        %v270 = vld [vmem:[%s228 + $0x28] sm:$0xff]
        %v271 = vld [vmem:[%s228 + $0x30] sm:$0xff]
        %v272 = vld [vmem:[%s228 + $0x38] sm:$0xff]
        %v273 = vld [vmem:[%s228 + $0x40] sm:$0xff]
        %v274 = vld [vmem:[%s228 + $0x48] sm:$0xff]
        %v275 = vld [vmem:[%s228 + $0x50] sm:$0xff]
        %v276 = vld [vmem:[%s228 + $0x58] sm:$0xff]
        %v277 = vld [vmem:[%s228 + $0x60] sm:$0xff]
        %v278 = vld [vmem:[%s228 + $0x68] sm:$0xff]
        %v279 = vld [vmem:[%s228 + $0x70] sm:$0xff]
        %v280 = vld [vmem:[%s228 + $0x78] sm:$0xff]
        %v281 = vld [vmem:[%s228 + $0x80] sm:$0xff]
        %v282 = vld [vmem:[%s228 + $0x88] sm:$0xff]
        %v283 = vld [vmem:[%s228 + $0x90] sm:$0xff]
        %v284 = vld [vmem:[%s228 + $0x98] sm:$0xff]
        %v285 = vld [vmem:[%s228 + $0xa0] sm:$0xff]
        %v286 = vld [vmem:[%s228 + $0xa8] sm:$0xff]
        %v287 = vld [vmem:[%s228 + $0xb0] sm:$0xff]
        %v288 = vld [vmem:[%s228 + $0xb8] sm:$0xff]
        %v289 = vld [vmem:[%s228 + $0xc0] sm:$0xff]
        %v290 = vld [vmem:[%s228 + $0xc8] sm:$0xff]
        %v291 = vld [vmem:[%s228 + $0xd0] sm:$0xff]
        %v292 = vld [vmem:[%s228 + $0xd8] sm:$0xff]
        %v293 = vld [vmem:[%s228 + $0xe0] sm:$0xff]
        %v294 = vld [vmem:[%s228 + $0xe8] sm:$0xff]
        %v295 = vld [vmem:[%s228 + $0xf0] sm:$0xff]
        %v296 = vld [vmem:[%s228 + $0xf8] sm:$0xff]
        %v297 = vld [vmem:[#allocation5] sm:$0xff]
        %v298 = vld [vmem:[#allocation5 + $0x8] sm:$0xff]
        %v299 = vld [vmem:[#allocation5 + $0x10] sm:$0xff]
        %v300 = vld [vmem:[#allocation5 + $0x18] sm:$0xff]
        %v301 = vld [vmem:[#allocation5 + $0x20] sm:$0xff]
        %v302 = vld [vmem:[#allocation5 + $0x28] sm:$0xff]
        %v303 = vld [vmem:[#allocation5 + $0x30] sm:$0xff]
        %v304 = vld [vmem:[#allocation5 + $0x38] sm:$0xff]
        %v305 = vld [vmem:[#allocation5 + $0x40] sm:$0xff]
        %v306 = vld [vmem:[#allocation5 + $0x48] sm:$0xff]
        %v307 = vld [vmem:[#allocation5 + $0x50] sm:$0xff]
        %v308 = vld [vmem:[#allocation5 + $0x58] sm:$0xff]
        %v309 = vld [vmem:[#allocation5 + $0x60] sm:$0xff]
        %v310 = vld [vmem:[#allocation5 + $0x68] sm:$0xff]
        %v311 = vld [vmem:[#allocation5 + $0x70] sm:$0xff]
        %v312 = vld [vmem:[#allocation5 + $0x78] sm:$0xff]
        %v313 = vld [vmem:[#allocation5 + $0x80] sm:$0xff]
        %v314 = vld [vmem:[#allocation5 + $0x88] sm:$0xff]
        %v315 = vld [vmem:[#allocation5 + $0x90] sm:$0xff]
        %v316 = vld [vmem:[#allocation5 + $0x98] sm:$0xff]
        %v317 = vld [vmem:[#allocation5 + $0xa0] sm:$0xff]
        %v318 = vld [vmem:[#allocation5 + $0xa8] sm:$0xff]
        %v319 = vld [vmem:[#allocation5 + $0xb0] sm:$0xff]
        %v320 = vld [vmem:[#allocation5 + $0xb8] sm:$0xff]
        %v321 = vld [vmem:[#allocation5 + $0xc0] sm:$0xff]
        %v322 = vld [vmem:[#allocation5 + $0xc8] sm:$0xff]
        %v323 = vld [vmem:[#allocation5 + $0xd0] sm:$0xff]
        %v324 = vld [vmem:[#allocation5 + $0xd8] sm:$0xff]
        %v325 = vld [vmem:[#allocation5 + $0xe0] sm:$0xff]
        %v326 = vld [vmem:[#allocation5 + $0xe8] sm:$0xff]
        %v327 = vld [vmem:[#allocation5 + $0xf0] sm:$0xff]
        %v328 = vld [vmem:[#allocation5 + $0xf8] sm:$0xff]
        %v329 = vld [vmem:[%s2] sm:$0x3]
        %v331 = vlaneseq
        %v332 = vshrl.u32 %v331, 7
        %v333 = vsub.s32 0, %v332
        %v334 = vrot.slane %v329, %v333
        %v335 = vlaneseq
        %v336 = vshrl.u32 %v335, 7
        %v337 = vsub.s32 1, %v336
        %v338 = vrot.slane %v329, %v337
        %341 = vmatprep.subr.mxu0 %v298
        %342 = vmatpush1.msra.mxu0 %v297
        %343 = vmatprep.subr.mxu0 %v300
        %344 = vmatpush1.msra.mxu0 %v299
        %345 = vmatprep.subr.mxu0 %v302
        %346 = vmatpush1.msra.mxu0 %v301
        %347 = vmatprep.subr.mxu0 %v304
        %348 = vmatpush1.msra.mxu0 %v303
        %349 = vmatprep.subr.mxu0 %v306
        %350 = vmatpush1.msra.mxu0 %v305
        %351 = vmatprep.subr.mxu0 %v308
        %352 = vmatpush1.msra.mxu0 %v307
        %353 = vmatprep.subr.mxu0 %v310
        %354 = vmatpush1.msra.mxu0 %v309
        %355 = vmatprep.subr.mxu0 %v312
        %356 = vmatpush1.msra.mxu0 %v311
        %357 = vmatprep.subr.mxu0 %v314
        %358 = vmatpush1.msra.mxu0 %v313
        %359 = vmatprep.subr.mxu0 %v316
        %360 = vmatpush1.msra.mxu0 %v315
        %361 = vmatprep.subr.mxu0 %v318
        %362 = vmatpush1.msra.mxu0 %v317
        %363 = vmatprep.subr.mxu0 %v320
        %364 = vmatpush1.msra.mxu0 %v319
        %365 = vmatprep.subr.mxu0 %v322
        %366 = vmatpush1.msra.mxu0 %v321
        %367 = vmatprep.subr.mxu0 %v324
        %368 = vmatpush1.msra.mxu0 %v323
        %369 = vmatprep.subr.mxu0 %v326
        %370 = vmatpush1.msra.mxu0 %v325
        %371 = vmatprep.subr.mxu0 %v328
        %372 = vmatpush1.msra.mxu0 %v327
        %373 = vmatprep.subr.mxu0 0.0
        %374 = vmatpush1.msra.mxu0 0.0
        %375 = vmatprep.subr.mxu0 0.0
        %376 = vmatpush1.msra.mxu0 0.0
        %377 = vmatprep.subr.mxu0 0.0
        %378 = vmatpush1.msra.mxu0 0.0
        %379 = vmatprep.subr.mxu0 0.0
        %380 = vmatpush1.msra.mxu0 0.0
        %381 = vmatprep.subr.mxu0 0.0
        %382 = vmatpush1.msra.mxu0 0.0
        %383 = vmatprep.subr.mxu0 0.0
        %384 = vmatpush1.msra.mxu0 0.0
        %385 = vmatprep.subr.mxu0 0.0
        %386 = vmatpush1.msra.mxu0 0.0
        %387 = vmatprep.subr.mxu0 0.0
        %388 = vmatpush1.msra.mxu0 0.0
        %389 = vmatprep.subr.mxu0 0.0
        %390 = vmatpush1.msra.mxu0 0.0
        %391 = vmatprep.subr.mxu0 0.0
        %392 = vmatpush1.msra.mxu0 0.0
        %393 = vmatprep.subr.mxu0 0.0
        %394 = vmatpush1.msra.mxu0 0.0
        %395 = vmatprep.subr.mxu0 0.0
        %396 = vmatpush1.msra.mxu0 0.0
        %397 = vmatprep.subr.mxu0 0.0
        %398 = vmatpush1.msra.mxu0 0.0
        %399 = vmatprep.subr.mxu0 0.0
        %400 = vmatpush1.msra.mxu0 0.0
        %401 = vmatprep.subr.mxu0 0.0
        %402 = vmatpush1.msra.mxu0 0.0
        %403 = vmatprep.subr.mxu0 0.0
        %404 = vmatpush1.msra.mxu0 0.0
        %405 = vmatprep.mubr.f32.mxu0 0.0
        %406 = vmatmul.mubr.f32.gmra.mrb[0].mxu0 %v265
        %v407 = vpop.f32.mrb[0].mxu0
        %v408 = vadd.f32 %v334, %v407
        %v409 = vpop.f32.mrb[0].mxu0
        %v410 = vadd.f32 %v338, %v409
        %411 = vmatprep.mubr.f32.mxu0 0.0
        %412 = vmatmul.mubr.f32.gmra.mrb[0].mxu0 %v266
        %v413 = vpop.f32.mrb[0].mxu0
        %v414 = vadd.f32 %v334, %v413
        %v415 = vpop.f32.mrb[0].mxu0
        %v416 = vadd.f32 %v338, %v415
        %417 = vmatprep.mubr.f32.mxu0 0.0
        %418 = vmatmul.mubr.f32.gmra.mrb[0].mxu0 %v267
        %v419 = vpop.f32.mrb[0].mxu0
        %v420 = vadd.f32 %v334, %v419
        %v421 = vpop.f32.mrb[0].mxu0
        %v422 = vadd.f32 %v338, %v421
        %423 = vmatprep.mubr.f32.mxu0 0.0
        %424 = vmatmul.mubr.f32.gmra.mrb[0].mxu0 %v268
        %v425 = vpop.f32.mrb[0].mxu0
        %v426 = vadd.f32 %v334, %v425
        %v427 = vpop.f32.mrb[0].mxu0
        %v428 = vadd.f32 %v338, %v427
        %429 = vmatprep.mubr.f32.mxu0 0.0
        %430 = vmatmul.mubr.f32.gmra.mrb[0].mxu0 %v269
        %v431 = vpop.f32.mrb[0].mxu0
        %v432 = vadd.f32 %v334, %v431
        %v433 = vpop.f32.mrb[0].mxu0
        %v434 = vadd.f32 %v338, %v433
        %435 = vmatprep.mubr.f32.mxu0 0.0
        %436 = vmatmul.mubr.f32.gmra.mrb[0].mxu0 %v270
        %v437 = vpop.f32.mrb[0].mxu0
        %v438 = vadd.f32 %v334, %v437
        %v439 = vpop.f32.mrb[0].mxu0
        %v440 = vadd.f32 %v338, %v439
        %441 = vmatprep.mubr.f32.mxu0 0.0
        %442 = vmatmul.mubr.f32.gmra.mrb[0].mxu0 %v271
        %v443 = vpop.f32.mrb[0].mxu0
        %v444 = vadd.f32 %v334, %v443
        %v445 = vpop.f32.mrb[0].mxu0
        %v446 = vadd.f32 %v338, %v445
        %447 = vmatprep.mubr.f32.mxu0 0.0
        %448 = vmatmul.mubr.f32.gmra.mrb[0].mxu0 %v272
        %v449 = vpop.f32.mrb[0].mxu0
        %v450 = vadd.f32 %v334, %v449
        %v451 = vpop.f32.mrb[0].mxu0
        %v452 = vadd.f32 %v338, %v451
        %453 = vmatprep.mubr.f32.mxu0 0.0
        %454 = vmatmul.mubr.f32.gmra.mrb[0].mxu0 %v273
        %v455 = vpop.f32.mrb[0].mxu0
        %v456 = vadd.f32 %v334, %v455
        %v457 = vpop.f32.mrb[0].mxu0
        %v458 = vadd.f32 %v338, %v457
        %459 = vmatprep.mubr.f32.mxu0 0.0
        %460 = vmatmul.mubr.f32.gmra.mrb[0].mxu0 %v274
        %v461 = vpop.f32.mrb[0].mxu0
        %v462 = vadd.f32 %v334, %v461
        %v463 = vpop.f32.mrb[0].mxu0
        %v464 = vadd.f32 %v338, %v463
        %465 = vmatprep.mubr.f32.mxu0 0.0
        %466 = vmatmul.mubr.f32.gmra.mrb[0].mxu0 %v275
        %v467 = vpop.f32.mrb[0].mxu0
        %v468 = vadd.f32 %v334, %v467
        %v469 = vpop.f32.mrb[0].mxu0
        %v470 = vadd.f32 %v338, %v469
        %471 = vmatprep.mubr.f32.mxu0 0.0
        %472 = vmatmul.mubr.f32.gmra.mrb[0].mxu0 %v276
        %v473 = vpop.f32.mrb[0].mxu0
        %v474 = vadd.f32 %v334, %v473
        %v475 = vpop.f32.mrb[0].mxu0
        %v476 = vadd.f32 %v338, %v475
        %477 = vmatprep.mubr.f32.mxu0 0.0
        %478 = vmatmul.mubr.f32.gmra.mrb[0].mxu0 %v277
        %v479 = vpop.f32.mrb[0].mxu0
        %v480 = vadd.f32 %v334, %v479
        %v481 = vpop.f32.mrb[0].mxu0
        %v482 = vadd.f32 %v338, %v481
        %483 = vmatprep.mubr.f32.mxu0 0.0
        %484 = vmatmul.mubr.f32.gmra.mrb[0].mxu0 %v278
        %v485 = vpop.f32.mrb[0].mxu0
        %v486 = vadd.f32 %v334, %v485
        %v487 = vpop.f32.mrb[0].mxu0
        %v488 = vadd.f32 %v338, %v487
        %489 = vmatprep.mubr.f32.mxu0 0.0
        %490 = vmatmul.mubr.f32.gmra.mrb[0].mxu0 %v279
        %v491 = vpop.f32.mrb[0].mxu0
        %v492 = vadd.f32 %v334, %v491
        %v493 = vpop.f32.mrb[0].mxu0
        %v494 = vadd.f32 %v338, %v493
        %495 = vmatprep.mubr.f32.mxu0 0.0
        %496 = vmatmul.mubr.f32.gmra.mrb[0].mxu0 %v280
        %v497 = vpop.f32.mrb[0].mxu0
        %v498 = vadd.f32 %v334, %v497
        %v499 = vpop.f32.mrb[0].mxu0
        %v500 = vadd.f32 %v338, %v499
        %501 = vmatprep.mubr.f32.mxu0 0.0
        %502 = vmatmul.mubr.f32.gmra.mrb[0].mxu0 %v281
        %v503 = vpop.f32.mrb[0].mxu0
        %v504 = vadd.f32 %v334, %v503
        %v505 = vpop.f32.mrb[0].mxu0
        %v506 = vadd.f32 %v338, %v505
        %507 = vmatprep.mubr.f32.mxu0 0.0
        %508 = vmatmul.mubr.f32.gmra.mrb[0].mxu0 %v282
        %v509 = vpop.f32.mrb[0].mxu0
        %v510 = vadd.f32 %v334, %v509
        %v511 = vpop.f32.mrb[0].mxu0
        %v512 = vadd.f32 %v338, %v511
        %513 = vmatprep.mubr.f32.mxu0 0.0
        %514 = vmatmul.mubr.f32.gmra.mrb[0].mxu0 %v283
        %v515 = vpop.f32.mrb[0].mxu0
        %v516 = vadd.f32 %v334, %v515
        %v517 = vpop.f32.mrb[0].mxu0
        %v518 = vadd.f32 %v338, %v517
        %519 = vmatprep.mubr.f32.mxu0 0.0
        %520 = vmatmul.mubr.f32.gmra.mrb[0].mxu0 %v284
        %v521 = vpop.f32.mrb[0].mxu0
        %v522 = vadd.f32 %v334, %v521
        %v523 = vpop.f32.mrb[0].mxu0
        %v524 = vadd.f32 %v338, %v523
        %525 = vmatprep.mubr.f32.mxu0 0.0
        %526 = vmatmul.mubr.f32.gmra.mrb[0].mxu0 %v285
        %v527 = vpop.f32.mrb[0].mxu0
        %v528 = vadd.f32 %v334, %v527
        %v529 = vpop.f32.mrb[0].mxu0
        %v530 = vadd.f32 %v338, %v529
        %531 = vmatprep.mubr.f32.mxu0 0.0
        %532 = vmatmul.mubr.f32.gmra.mrb[0].mxu0 %v286
        %v533 = vpop.f32.mrb[0].mxu0
        %v534 = vadd.f32 %v334, %v533
        %v535 = vpop.f32.mrb[0].mxu0
        %v536 = vadd.f32 %v338, %v535
        %537 = vmatprep.mubr.f32.mxu0 0.0
        %538 = vmatmul.mubr.f32.gmra.mrb[0].mxu0 %v287
        %v539 = vpop.f32.mrb[0].mxu0
        %v540 = vadd.f32 %v334, %v539
        %v541 = vpop.f32.mrb[0].mxu0
        %v542 = vadd.f32 %v338, %v541
        %543 = vmatprep.mubr.f32.mxu0 0.0
        %544 = vmatmul.mubr.f32.gmra.mrb[0].mxu0 %v288
        %v545 = vpop.f32.mrb[0].mxu0
        %v546 = vadd.f32 %v334, %v545
        %v547 = vpop.f32.mrb[0].mxu0
        %v548 = vadd.f32 %v338, %v547
        %549 = vmatprep.mubr.f32.mxu0 0.0
        %550 = vmatmul.mubr.f32.gmra.mrb[0].mxu0 %v289
        %v551 = vpop.f32.mrb[0].mxu0
        %v552 = vadd.f32 %v334, %v551
        %v553 = vpop.f32.mrb[0].mxu0
        %v554 = vadd.f32 %v338, %v553
        %555 = vmatprep.mubr.f32.mxu0 0.0
        %556 = vmatmul.mubr.f32.gmra.mrb[0].mxu0 %v290
        %v557 = vpop.f32.mrb[0].mxu0
        %v558 = vadd.f32 %v334, %v557
        %v559 = vpop.f32.mrb[0].mxu0
        %v560 = vadd.f32 %v338, %v559
        %561 = vmatprep.mubr.f32.mxu0 0.0
        %562 = vmatmul.mubr.f32.gmra.mrb[0].mxu0 %v291
        %v563 = vpop.f32.mrb[0].mxu0
        %v564 = vadd.f32 %v334, %v563
        %v565 = vpop.f32.mrb[0].mxu0
        %v566 = vadd.f32 %v338, %v565
        %567 = vmatprep.mubr.f32.mxu0 0.0
        %568 = vmatmul.mubr.f32.gmra.mrb[0].mxu0 %v292
        %v569 = vpop.f32.mrb[0].mxu0
        %v570 = vadd.f32 %v334, %v569
        %v571 = vpop.f32.mrb[0].mxu0
        %v572 = vadd.f32 %v338, %v571
        %573 = vmatprep.mubr.f32.mxu0 0.0
        %574 = vmatmul.mubr.f32.gmra.mrb[0].mxu0 %v293
        %v575 = vpop.f32.mrb[0].mxu0
        %v576 = vadd.f32 %v334, %v575
        %v577 = vpop.f32.mrb[0].mxu0
        %v578 = vadd.f32 %v338, %v577
        %579 = vmatprep.mubr.f32.mxu0 0.0
        %580 = vmatmul.mubr.f32.gmra.mrb[0].mxu0 %v294
        %v581 = vpop.f32.mrb[0].mxu0
        %v582 = vadd.f32 %v334, %v581
        %v583 = vpop.f32.mrb[0].mxu0
        %v584 = vadd.f32 %v338, %v583
        %585 = vmatprep.mubr.f32.mxu0 0.0
        %586 = vmatmul.mubr.f32.gmra.mrb[0].mxu0 %v295
        %v587 = vpop.f32.mrb[0].mxu0
        %v588 = vadd.f32 %v334, %v587
        %v589 = vpop.f32.mrb[0].mxu0
        %v590 = vadd.f32 %v338, %v589
        %591 = vmatprep.mubr.f32.mxu0 0.0
        %592 = vmatmul.mubr.f32.gmra.mrb[0].mxu0 %v296
        %v593 = vpop.f32.mrb[0].mxu0
        %v594 = vadd.f32 %v334, %v593
        %v595 = vpop.f32.mrb[0].mxu0
        %v596 = vadd.f32 %v338, %v595
        %597 = vdwg.mxu0
        %598 = vst [vmem:[%s254] sm:$0xff] %v408
        %599 = vst [vmem:[%s254 + $0x8] sm:$0xff] %v414
        %600 = vst [vmem:[%s254 + $0x10] sm:$0xff] %v420
        %601 = vst [vmem:[%s254 + $0x18] sm:$0xff] %v426
        %602 = vst [vmem:[%s254 + $0x20] sm:$0xff] %v432
        %603 = vst [vmem:[%s254 + $0x28] sm:$0xff] %v438
        %604 = vst [vmem:[%s254 + $0x30] sm:$0xff] %v444
        %605 = vst [vmem:[%s254 + $0x38] sm:$0xff] %v450
        %606 = vst [vmem:[%s254 + $0x40] sm:$0xff] %v456
        %607 = vst [vmem:[%s254 + $0x48] sm:$0xff] %v462
        %608 = vst [vmem:[%s254 + $0x50] sm:$0xff] %v468
        %609 = vst [vmem:[%s254 + $0x58] sm:$0xff] %v474
        %610 = vst [vmem:[%s254 + $0x60] sm:$0xff] %v480
        %611 = vst [vmem:[%s254 + $0x68] sm:$0xff] %v486
        %612 = vst [vmem:[%s254 + $0x70] sm:$0xff] %v492
        %613 = vst [vmem:[%s254 + $0x78] sm:$0xff] %v498
        %614 = vst [vmem:[%s254 + $0x80] sm:$0xff] %v504
        %615 = vst [vmem:[%s254 + $0x88] sm:$0xff] %v510
        %616 = vst [vmem:[%s254 + $0x90] sm:$0xff] %v516
        %617 = vst [vmem:[%s254 + $0x98] sm:$0xff] %v522
        %618 = vst [vmem:[%s254 + $0xa0] sm:$0xff] %v528
        %619 = vst [vmem:[%s254 + $0xa8] sm:$0xff] %v534
        %620 = vst [vmem:[%s254 + $0xb0] sm:$0xff] %v540
        %621 = vst [vmem:[%s254 + $0xb8] sm:$0xff] %v546
        %622 = vst [vmem:[%s254 + $0xc0] sm:$0xff] %v552
        %623 = vst [vmem:[%s254 + $0xc8] sm:$0xff] %v558
        %624 = vst [vmem:[%s254 + $0xd0] sm:$0xff] %v564
        %625 = vst [vmem:[%s254 + $0xd8] sm:$0xff] %v570
        %626 = vst [vmem:[%s254 + $0xe0] sm:$0xff] %v576
        %627 = vst [vmem:[%s254 + $0xe8] sm:$0xff] %v582
        %628 = vst [vmem:[%s254 + $0xf0] sm:$0xff] %v588
        %629 = vst [vmem:[%s254 + $0xf8] sm:$0xff] %v594
        %630 = vst [vmem:[%s261] sm:$0xff] %v410
        %631 = vst [vmem:[%s261 + $0x8] sm:$0xff] %v416
        %632 = vst [vmem:[%s261 + $0x10] sm:$0xff] %v422
        %633 = vst [vmem:[%s261 + $0x18] sm:$0xff] %v428
        %634 = vst [vmem:[%s261 + $0x20] sm:$0xff] %v434
        %635 = vst [vmem:[%s261 + $0x28] sm:$0xff] %v440
        %636 = vst [vmem:[%s261 + $0x30] sm:$0xff] %v446
        %637 = vst [vmem:[%s261 + $0x38] sm:$0xff] %v452
        %638 = vst [vmem:[%s261 + $0x40] sm:$0xff] %v458
        %639 = vst [vmem:[%s261 + $0x48] sm:$0xff] %v464
        %640 = vst [vmem:[%s261 + $0x50] sm:$0xff] %v470
        %641 = vst [vmem:[%s261 + $0x58] sm:$0xff] %v476
        %642 = vst [vmem:[%s261 + $0x60] sm:$0xff] %v482
        %643 = vst [vmem:[%s261 + $0x68] sm:$0xff] %v488
        %644 = vst [vmem:[%s261 + $0x70] sm:$0xff] %v494
        %645 = vst [vmem:[%s261 + $0x78] sm:$0xff] %v500
        %646 = vst [vmem:[%s261 + $0x80] sm:$0xff] %v506
        %647 = vst [vmem:[%s261 + $0x88] sm:$0xff] %v512
        %648 = vst [vmem:[%s261 + $0x90] sm:$0xff] %v518
        %649 = vst [vmem:[%s261 + $0x98] sm:$0xff] %v524
        %650 = vst [vmem:[%s261 + $0xa0] sm:$0xff] %v530
        %651 = vst [vmem:[%s261 + $0xa8] sm:$0xff] %v536
        %652 = vst [vmem:[%s261 + $0xb0] sm:$0xff] %v542
        %653 = vst [vmem:[%s261 + $0xb8] sm:$0xff] %v548
        %654 = vst [vmem:[%s261 + $0xc0] sm:$0xff] %v554
        %655 = vst [vmem:[%s261 + $0xc8] sm:$0xff] %v560
        %656 = vst [vmem:[%s261 + $0xd0] sm:$0xff] %v566
        %657 = vst [vmem:[%s261 + $0xd8] sm:$0xff] %v572
        %658 = vst [vmem:[%s261 + $0xe0] sm:$0xff] %v578
        %659 = vst [vmem:[%s261 + $0xe8] sm:$0xff] %v584
        %660 = vst [vmem:[%s261 + $0xf0] sm:$0xff] %v590
        %661 = vst [vmem:[%s261 + $0xf8] sm:$0xff] %v596
        %s662 = sand.u32 %s118, 1
        %s663 = scalar_lea.sflag [#allocation4], %s662
        %s664 = sand.u32 %s118, 1
        %s665 = smul.addr %s664, 256
        %s666 = scalar_lea.vmem [#allocation7], %s665
        %s667 = sand.u32 %s146, 1
        %s668 = scalar_lea.sflag [#allocation9], %s667
        %s669 = sand.u32 %s146, 1
        %s670 = smul.addr %s669, 256
        %s671 = scalar_lea.vmem [#allocation8], %s670
        // Predicated region
        $region41: #{tpu_custom_call.1} parent=31 // pred_check
          %p672 = pneg %p128
        $region42: #{tpu_custom_call.1} parent=31 // pred_check_branch
          %674 = sbr.rel (%p672) target = $region44
        $region43: #{tpu_custom_call.1} parent=31 // pred_region
          %s675 = smul.u32 32, %s31
          %s677 = ssub.s32 4096, 4096
          %678 = vsyncadd %s663, %s677
          %s679 = smul.addr %s30, 32
          %s680 = sadd.s32 %s675, %s679
          %s681 = smul.addr %s680, 128
          %s682 = scalar_lea.hbm %s3, %s681
          %s683 = sshll.u32 %s666, 4
          %s684 = int_to_ptr.vmem [resolvable:$true] %s683
          %689 = dma.vmem_to_hbm [thread:$0]  %s684, 4096, %s682, %s663, 128, 128, 8
        $region44: #{tpu_custom_call.1} parent=31 // pred_fallthru
          _
        // Predicated region
        $region45: #{tpu_custom_call.1} parent=31 // pred_check
          %p690 = pneg %p156
        $region46: #{tpu_custom_call.1} parent=31 // pred_check_branch
          %692 = sbr.rel (%p690) target = $region48
        $region47: #{tpu_custom_call.1} parent=31 // pred_region
          %s693 = smul.u32 32, %s31
          %s695 = ssub.s32 4096, 4096
          %696 = vsyncadd %s668, %s695
          %s697 = smul.addr %s30, 32
          %s698 = sadd.s32 %s693, %s697
          %s699 = smul.addr %s698, 128
          %s700 = scalar_lea.hbm %s4, %s699
          %s701 = sshll.u32 %s671, 4
          %s702 = int_to_ptr.vmem [resolvable:$true] %s701
          %707 = dma.vmem_to_hbm [thread:$0]  %s702, 4096, %s700, %s668, 128, 128, 8
        $region48: #{tpu_custom_call.1} parent=31 // pred_fallthru
          _
      $region32: #{tpu_custom_call.1} parent=5 // pred_fallthru
        _
      %p708 = scmp.le.s32.totalorder 2, %s21
      // Predicated region
      $region49: #{tpu_custom_call.1} parent=5 // pred_check
        %p709 = pneg %p708
      $region50: #{tpu_custom_call.1} parent=5 // pred_check_branch
        %711 = sbr.rel (%p709) target = $region52
      $region51: #{tpu_custom_call.1} parent=5 // pred_region
        %s712 = ssub.s32 %s21, 2
        // Predicated region
        $region53: #{tpu_custom_call.1} parent=51 // pred_check
          %p713 = pneg %p134
        $region54: #{tpu_custom_call.1} parent=51 // pred_check_branch
          %715 = sbr.rel (%p713) target = $region56
        $region55: #{tpu_custom_call.1} parent=51 // pred_region
          %s716 = sand.u32 %s119, 1
          %s717 = scalar_lea.sflag [#allocation4], %s716
          %s718 = sand.u32 %s119, 1
          %s719 = smul.addr %s718, 256
          %s720 = scalar_lea.vmem [#allocation7], %s719
          %721 = dma.done %s717, 4096
        $region56: #{tpu_custom_call.1} parent=51 // pred_fallthru
          _
        // Predicated region
        $region57: #{tpu_custom_call.1} parent=51 // pred_check
          %p722 = pneg %p162
        $region58: #{tpu_custom_call.1} parent=51 // pred_check_branch
          %724 = sbr.rel (%p722) target = $region60
        $region59: #{tpu_custom_call.1} parent=51 // pred_region
          %s725 = sand.u32 %s147, 1
          %s726 = scalar_lea.sflag [#allocation9], %s725
          %s727 = sand.u32 %s147, 1
          %s728 = smul.addr %s727, 256
          %s729 = scalar_lea.vmem [#allocation8], %s728
          %730 = dma.done %s726, 4096
        $region60: #{tpu_custom_call.1} parent=51 // pred_fallthru
          _
      $region52: #{tpu_custom_call.1} parent=5 // pred_fallthru
        _
    $region6: #{tpu_custom_call.1} parent=1 // loop_footer
      %s25 = sadd.s32 1, %s21
    $region7: #{tpu_custom_call.1} parent=1 // loop_footer_branch
      %20 = sbr.rel target = $region3
    $region8: #{tpu_custom_call.1} parent=1 // loop_exit
      _
    %731 = vsyncpa [#allocation3], 1
    %s732 = scalar_lea.sflag [#allocation3], 1
    %733 = vsyncpa %s732, 1
    %734 = vsyncpa [#allocation6], 1
    %735 = vsyncpa [#allocation4], 1
    %s736 = scalar_lea.sflag [#allocation4], 1
    %737 = vsyncpa %s736, 1
    %738 = vsyncpa [#allocation9], 1
    %s739 = scalar_lea.sflag [#allocation9], 1
    %740 = vsyncpa %s739, 1

// kernel: tpu_custom_call.1
$region0: #{tpu_custom_call.1}
  #allocation0 [shape = 'u32[]', space=smem, size = 0x4, offset = 0x4, fixed_abs, tag = 'smem constant byte address 0x4 - core index']
  #allocation1 [shape = 'u32[144,128]{1,0:T(1,128)}', space=vmem, size = 0x12000, scoped, tag = 'internal scratch']
  %s0 = inlined_call_operand.hbm [shape: f32[2,256,128], index: 0, kind: input, shape index: {}]
  %s1 = inlined_call_operand.hbm [shape: f32[128,256], index: 1, kind: input, shape index: {}]
  %s2 = inlined_call_operand.vmem [shape: f32[1,256], index: 2, kind: input, shape index: {}]
  %s3 = inlined_call_operand.hbm [shape: f32[2,256,128], index: 3, kind: output, shape index: {0}]
  %s4 = inlined_call_operand.hbm [shape: f32[2,256,128], index: 4, kind: output, shape index: {1}]
  %5 = xla_tuple %s3, %s4
  %s6 = sld [smem:[#allocation0]]
  $region61: #{tpu_custom_call.1} parent=0
    _
  %s8 = ssub.s32 1, %s6
  %s9 = scalar_select 0, %s8, %s6
  $region1: #{tpu_custom_call.1} parent=0
    #allocation2 [shape = 'u8[262144]{0}', space=vmem, size = 0x40000, scoped, tag = 'input window, operand 0']
    #allocation3 [shape = 's32[2]{0}', space=sflag, size = 0x8, scoped, tag = 'scoped memory for tpu_custom_call.1']
    #allocation4 [shape = 's32[2]{0}', space=sflag, size = 0x8, scoped, tag = 'scoped memory for tpu_custom_call.1']
    #allocation5 [shape = 'u8[131072]{0}', space=vmem, size = 0x20000, scoped, tag = 'input window, operand 1, single buffered']
    #allocation6 [shape = 's32[1]{0}', space=sflag, size = 0x4, scoped, tag = 'scoped memory for tpu_custom_call.1']
    #allocation7 [shape = 'u8[262144]{0}', space=vmem, size = 0x40000, scoped, tag = 'output window, operand 0']
    #allocation8 [shape = 'u8[262144]{0}', space=vmem, size = 0x40000, scoped, tag = 'output window, operand 1']
    #allocation9 [shape = 's32[2]{0}', space=sflag, size = 0x8, scoped, tag = 'scoped memory for tpu_custom_call.1']
    %10 = vsyncpa [#allocation3], 0
    %s11 = scalar_lea.sflag [#allocation3], 1
    %12 = vsyncpa %s11, 0
    %13 = vsyncpa [#allocation6], 0
    %14 = vsyncpa [#allocation4], 0
    %s15 = scalar_lea.sflag [#allocation4], 1
    %16 = vsyncpa %s15, 0
    %17 = vsyncpa [#allocation9], 0
    %s18 = scalar_lea.sflag [#allocation9], 1
    %19 = vsyncpa %s18, 0
    loop: start=0, step=1, limit=4
    $region2: #{tpu_custom_call.1} parent=1 // loop_pre_header
      _
    $region3: #{tpu_custom_call.1} parent=1 // loop_header
      %s21 = sphi 0, %s25
      %p22 = scmp.ge.s32.totalorder %s21, 4
      %s28 = sphi 0, %s40
      %s29 = sphi 0, %s36
      %s30 = sphi 0, %s28
      %s31 = sphi 0, %s29
      %s32 = sphi 0, %s30
      %s33 = sphi 0, %s31
      %s45 = sphi 0, %s47
      %s48 = sphi 0, %s45
      %s49 = sphi 0, %s48
      %s65 = sphi 0, %s49
      %s69 = sphi 0, %s69
      %s71 = sphi 0, %s69
      %s72 = sphi 0, %s71
      %s86 = sphi 0, %s72
      %s90 = sphi 0, %s90
      %s92 = sphi 0, %s90
      %s93 = sphi 0, %s92
      %s107 = sphi 0, %s93
      %s115 = sphi 0, %s117
      %s118 = sphi 0, %s115
      %s119 = sphi 0, %s118
      %s135 = sphi 0, %s119
      %s143 = sphi 0, %s145
      %s146 = sphi 0, %s143
      %s147 = sphi 0, %s146
      %s163 = sphi 0, %s147
    $region4: #{tpu_custom_call.1} parent=1 // loop_header_branch
      %24 = sbr.rel (%p22) target = $region8
    $region5: #{tpu_custom_call.1} parent=1 // loop_body
      %s26 = ssub.s32 %s21, 1
      %s27 = ssub.s32 %s21, 2
      %s34 = sadd.s32 1, %s29
      %p35 = scmp.ge.s32.totalorder %s34, 1
      %s36 = scalar_select %p35, 0, %s34
      %s37 = sadd.s32 1, %s28
      %s38 = scalar_select %p35, %s37, %s28
      %p39 = scmp.ge.s32.totalorder %s38, 2
      %s40 = scalar_select %p39, 0, %s38
      %s41 = ssub.s32 %s28, %s40
      %s42 = ssub.s32 %s29, %s36
      %s43 = sor.u32 %s41, %s42
      %p44 = scmp.eq.s32.totalorder %s43, 0
      %s46 = sadd.s32 %s45, 1
      %s47 = scalar_select %p44, %s45, %s46
      %p50 = pneg %p44
      %p51 = scmp.eq.s32.totalorder %s21, 1
      %p52 = por %p50, %p51
      %p53 = scmp.ne.s32.totalorder %s45, %s48
      %p54 = scmp.eq.s32.totalorder %s21, 0
      %p55 = por %p53, %p54
      %p56 = scmp.ne.s32.totalorder %s45, %s48
      %p57 = scmp.eq.s32.totalorder %s26, 1
      %p58 = por %p56, %p57
      %p59 = scmp.ne.s32.totalorder %s48, %s49
      %p60 = scmp.eq.s32.totalorder %s26, 0
      %p61 = por %p59, %p60
      %p62 = scmp.ne.s32.totalorder %s48, %s49
      %p63 = scmp.eq.s32.totalorder %s27, 1
      %p64 = por %p62, %p63
      %p66 = scmp.ne.s32.totalorder %s49, %s65
      %p67 = scmp.eq.s32.totalorder %s27, 0
      %p68 = por %p66, %p67
      %s70 = sadd.s32 %s69, 1
      %p73 = scmp.eq.s32.totalorder %s21, 1
      %p74 = scmp.ne.s32.totalorder %s69, %s71
      %p75 = scmp.eq.s32.totalorder %s21, 0
      %p76 = por %p74, %p75
      %p77 = scmp.ne.s32.totalorder %s69, %s71
      %p78 = scmp.eq.s32.totalorder %s26, 1
      %p79 = por %p77, %p78
      %p80 = scmp.ne.s32.totalorder %s71, %s72
      %p81 = scmp.eq.s32.totalorder %s26, 0
      %p82 = por %p80, %p81
      %p83 = scmp.ne.s32.totalorder %s71, %s72
      %p84 = scmp.eq.s32.totalorder %s27, 1
      %p85 = por %p83, %p84
      %p87 = scmp.ne.s32.totalorder %s72, %s86
      %p88 = scmp.eq.s32.totalorder %s27, 0
      %p89 = por %p87, %p88
      %s91 = sadd.s32 %s90, 1
      %p94 = scmp.eq.s32.totalorder %s21, 1
      %p95 = scmp.ne.s32.totalorder %s90, %s92
      %p96 = scmp.eq.s32.totalorder %s21, 0
      %p97 = por %p95, %p96
      %p98 = scmp.ne.s32.totalorder %s90, %s92
      %p99 = scmp.eq.s32.totalorder %s26, 1
      %p100 = por %p98, %p99
      %p101 = scmp.ne.s32.totalorder %s92, %s93
      %p102 = scmp.eq.s32.totalorder %s26, 0
      %p103 = por %p101, %p102
      %p104 = scmp.ne.s32.totalorder %s92, %s93
      %p105 = scmp.eq.s32.totalorder %s27, 1
      %p106 = por %p104, %p105
      %p108 = scmp.ne.s32.totalorder %s93, %s107
      %p109 = scmp.eq.s32.totalorder %s27, 0
      %p110 = por %p108, %p109
      %s111 = ssub.s32 %s28, %s40
      %s112 = ssub.s32 %s29, %s36
      %s113 = sor.u32 %s111, %s112
      %p114 = scmp.eq.s32.totalorder %s113, 0
      %s116 = sadd.s32 %s115, 1
      %s117 = scalar_select %p114, %s115, %s116
      %p120 = pneg %p114
      %p121 = scmp.eq.s32.totalorder %s21, 1
      %p122 = por %p120, %p121
      %p123 = scmp.ne.s32.totalorder %s115, %s118
      %p124 = scmp.eq.s32.totalorder %s21, 0
      %p125 = por %p123, %p124
      %p126 = scmp.ne.s32.totalorder %s115, %s118
      %p127 = scmp.eq.s32.totalorder %s26, 1
      %p128 = por %p126, %p127
      %p129 = scmp.ne.s32.totalorder %s118, %s119
      %p130 = scmp.eq.s32.totalorder %s26, 0
      %p131 = por %p129, %p130
      %p132 = scmp.ne.s32.totalorder %s118, %s119
      %p133 = scmp.eq.s32.totalorder %s27, 1
      %p134 = por %p132, %p133
      %p136 = scmp.ne.s32.totalorder %s119, %s135
      %p137 = scmp.eq.s32.totalorder %s27, 0
      %p138 = por %p136, %p137
      %s139 = ssub.s32 %s28, %s40
      %s140 = ssub.s32 %s29, %s36
      %s141 = sor.u32 %s139, %s140
      %p142 = scmp.eq.s32.totalorder %s141, 0
      %s144 = sadd.s32 %s143, 1
      %s145 = scalar_select %p142, %s143, %s144
      %p148 = pneg %p142
      %p149 = scmp.eq.s32.totalorder %s21, 1
      %p150 = por %p148, %p149
      %p151 = scmp.ne.s32.totalorder %s143, %s146
      %p152 = scmp.eq.s32.totalorder %s21, 0
      %p153 = por %p151, %p152
      %p154 = scmp.ne.s32.totalorder %s143, %s146
      %p155 = scmp.eq.s32.totalorder %s26, 1
      %p156 = por %p154, %p155
      %p157 = scmp.ne.s32.totalorder %s146, %s147
      %p158 = scmp.eq.s32.totalorder %s26, 0
      %p159 = por %p157, %p158
      %p160 = scmp.ne.s32.totalorder %s146, %s147
      %p161 = scmp.eq.s32.totalorder %s27, 1
      %p162 = por %p160, %p161
      %p164 = scmp.ne.s32.totalorder %s147, %s163
      %p165 = scmp.eq.s32.totalorder %s27, 0
      %p166 = por %p164, %p165
      %p167 = scmp.le.s32.totalorder 1, %s21
      %p168 = scmp.lt.s32.totalorder %s21, 3
      %p169 = pnand %p167, %p168
      %p170 = pneg %p169
      // Predicated region
      $region9: #{tpu_custom_call.1} parent=5 // pred_check
        _
      $region10: #{tpu_custom_call.1} parent=5 // pred_check_branch
        %172 = sbr.rel (%p169) target = $region12
      $region11: #{tpu_custom_call.1} parent=5 // pred_region
        %s173 = ssub.s32 %s21, 1
        // Predicated region
        $region13: #{tpu_custom_call.1} parent=11 // pred_check
          %p174 = pneg %p82
        $region14: #{tpu_custom_call.1} parent=11 // pred_check_branch
          %176 = sbr.rel (%p174) target = $region16
        $region15: #{tpu_custom_call.1} parent=11 // pred_region
          %s178 = ssub.s32 4096, 4096
          %179 = vsyncadd [#allocation6], %s178
          %s180 = sshll.u32 [#allocation5], 4
          %s181 = int_to_ptr.vmem [resolvable:$true] %s180
          %186 = dma.hbm_to_vmem [thread:$0]  %s1, 4096, %s181, [#allocation6], 256, 256, 16
        $region16: #{tpu_custom_call.1} parent=11 // pred_fallthru
          _
        // Predicated region
        $region17: #{tpu_custom_call.1} parent=11 // pred_check
          %p187 = pneg %p103
        $region18: #{tpu_custom_call.1} parent=11 // pred_check_branch
          %189 = sbr.rel (%p187) target = $region20
        $region19: #{tpu_custom_call.1} parent=11 // pred_region
          _
        $region20: #{tpu_custom_call.1} parent=11 // pred_fallthru
          _
      $region12: #{tpu_custom_call.1} parent=5 // pred_fallthru
        _
      %p190 = scmp.lt.s32.totalorder %s21, 2
      // Predicated region
      $region21: #{tpu_custom_call.1} parent=5 // pred_check
        %p191 = pneg %p190
      $region22: #{tpu_custom_call.1} parent=5 // pred_check_branch
        %193 = sbr.rel (%p191) target = $region24
      $region23: #{tpu_custom_call.1} parent=5 // pred_region
        // Predicated region
        $region25: #{tpu_custom_call.1} parent=23 // pred_check
          %p194 = pneg %p55
        $region26: #{tpu_custom_call.1} parent=23 // pred_check_branch
          %196 = sbr.rel (%p194) target = $region28
        $region27: #{tpu_custom_call.1} parent=23 // pred_region
          %s197 = sand.u32 %s45, 1
          %s198 = scalar_lea.sflag [#allocation3], %s197
          %s199 = sand.u32 %s45, 1
          %s200 = smul.addr %s199, 256
          %s201 = scalar_lea.vmem [#allocation2], %s200
          %s202 = smul.u32 32, %s29
          %s204 = ssub.s32 4096, 4096
          %205 = vsyncadd %s198, %s204
          %s206 = smul.addr %s28, 32
          %s207 = sadd.s32 %s202, %s206
          %s208 = smul.addr %s207, 128
          %s209 = scalar_lea.hbm %s0, %s208
          %s210 = sshll.u32 %s201, 4
          %s211 = int_to_ptr.vmem [resolvable:$true] %s210
          %216 = dma.hbm_to_vmem [thread:$0]  %s209, 4096, %s211, %s198, 128, 128, 8
        $region28: #{tpu_custom_call.1} parent=23 // pred_fallthru
          _
      $region24: #{tpu_custom_call.1} parent=5 // pred_fallthru
        _
      %p217 = scmp.le.s32.totalorder 1, %s21
      %p218 = scmp.lt.s32.totalorder %s21, 3
      %p219 = pnand %p217, %p218
      %p220 = pneg %p219
      // Predicated region
      $region29: #{tpu_custom_call.1} parent=5 // pred_check
        _
      $region30: #{tpu_custom_call.1} parent=5 // pred_check_branch
        %222 = sbr.rel (%p219) target = $region32
      $region31: #{tpu_custom_call.1} parent=5 // pred_region
        %s223 = ssub.s32 %s21, 1
        %s224 = sand.u32 %s48, 1
        %s225 = scalar_lea.sflag [#allocation3], %s224
        %s226 = sand.u32 %s48, 1
        %s227 = smul.addr %s226, 256
        %s228 = scalar_lea.vmem [#allocation2], %s227
        // Predicated region
        $region33: #{tpu_custom_call.1} parent=31 // pred_check
          %p229 = pneg %p61
        $region34: #{tpu_custom_call.1} parent=31 // pred_check_branch
          %231 = sbr.rel (%p229) target = $region36
        $region35: #{tpu_custom_call.1} parent=31 // pred_region
          %232 = dma.done %s225, 4096
        $region36: #{tpu_custom_call.1} parent=31 // pred_fallthru
          _
        // Predicated region
        $region37: #{tpu_custom_call.1} parent=31 // pred_check
          %p233 = pneg %p82
        $region38: #{tpu_custom_call.1} parent=31 // pred_check_branch
          %235 = sbr.rel (%p233) target = $region40
        $region39: #{tpu_custom_call.1} parent=31 // pred_region
          %236 = dma.done [#allocation6], 4096
        $region40: #{tpu_custom_call.1} parent=31 // pred_fallthru
          _
        %s237 = sand.u32 %s48, 1
        %s238 = scalar_lea.sflag [#allocation3], %s237
        %s239 = sand.u32 %s48, 1
        %s240 = smul.addr %s239, 256
        %s241 = scalar_lea.vmem [#allocation2], %s240
        %p242 = pneg %p61
        %p243 = pneg %p58
        %p244 = pneg %p82
        %p245 = pneg %p79
        %p246 = pneg %p103
        %p247 = pneg %p100
        %p248 = pneg %p131
        %p249 = pneg %p128
        %s250 = sand.u32 %s118, 1
        %s251 = scalar_lea.sflag [#allocation4], %s250
        %s252 = sand.u32 %s118, 1
        %s253 = smul.addr %s252, 256
        %s254 = scalar_lea.vmem [#allocation7], %s253
        %p255 = pneg %p159
        %p256 = pneg %p156
        %s257 = sand.u32 %s146, 1
        %s258 = scalar_lea.sflag [#allocation9], %s257
        %s259 = sand.u32 %s146, 1
        %s260 = smul.addr %s259, 256
        %s261 = scalar_lea.vmem [#allocation8], %s260
        %s262 = smul.u32 32, %s31
        %s263 = smul.u32 32, %s31
        %s264 = smul.u32 32, %s31
        %v265 = vld [vmem:[%s228] sm:$0xff]
        %v266 = vld [vmem:[%s228 + $0x8] sm:$0xff]
        %v267 = vld [vmem:[%s228 + $0x10] sm:$0xff]
        %v268 = vld [vmem:[%s228 + $0x18] sm:$0xff]
        %v269 = vld [vmem:[%s228 + $0x20] sm:$0xff]
        %v270 = vld [vmem:[%s228 + $0x28] sm:$0xff]
        %v271 = vld [vmem:[%s228 + $0x30] sm:$0xff]
        %v272 = vld [vmem:[%s228 + $0x38] sm:$0xff]
        %v273 = vld [vmem:[%s228 + $0x40] sm:$0xff]
        %v274 = vld [vmem:[%s228 + $0x48] sm:$0xff]
        %v275 = vld [vmem:[%s228 + $0x50] sm:$0xff]
        %v276 = vld [vmem:[%s228 + $0x58] sm:$0xff]
        %v277 = vld [vmem:[%s228 + $0x60] sm:$0xff]
        %v278 = vld [vmem:[%s228 + $0x68] sm:$0xff]
        %v279 = vld [vmem:[%s228 + $0x70] sm:$0xff]
        %v280 = vld [vmem:[%s228 + $0x78] sm:$0xff]
        %v281 = vld [vmem:[%s228 + $0x80] sm:$0xff]
        %v282 = vld [vmem:[%s228 + $0x88] sm:$0xff]
        %v283 = vld [vmem:[%s228 + $0x90] sm:$0xff]
        %v284 = vld [vmem:[%s228 + $0x98] sm:$0xff]
        %v285 = vld [vmem:[%s228 + $0xa0] sm:$0xff]
        %v286 = vld [vmem:[%s228 + $0xa8] sm:$0xff]
        %v287 = vld [vmem:[%s228 + $0xb0] sm:$0xff]
        %v288 = vld [vmem:[%s228 + $0xb8] sm:$0xff]
        %v289 = vld [vmem:[%s228 + $0xc0] sm:$0xff]
        %v290 = vld [vmem:[%s228 + $0xc8] sm:$0xff]
        %v291 = vld [vmem:[%s228 + $0xd0] sm:$0xff]
        %v292 = vld [vmem:[%s228 + $0xd8] sm:$0xff]
        %v293 = vld [vmem:[%s228 + $0xe0] sm:$0xff]
        %v294 = vld [vmem:[%s228 + $0xe8] sm:$0xff]
        %v295 = vld [vmem:[%s228 + $0xf0] sm:$0xff]
        %v296 = vld [vmem:[%s228 + $0xf8] sm:$0xff]
        %v297 = vld [vmem:[#allocation5] sm:$0xff]
        %v298 = vld [vmem:[#allocation5 + $0x8] sm:$0xff]
        %v299 = vld [vmem:[#allocation5 + $0x10] sm:$0xff]
        %v300 = vld [vmem:[#allocation5 + $0x18] sm:$0xff]
        %v301 = vld [vmem:[#allocation5 + $0x20] sm:$0xff]
        %v302 = vld [vmem:[#allocation5 + $0x28] sm:$0xff]
        %v303 = vld [vmem:[#allocation5 + $0x30] sm:$0xff]
        %v304 = vld [vmem:[#allocation5 + $0x38] sm:$0xff]
        %v305 = vld [vmem:[#allocation5 + $0x40] sm:$0xff]
        %v306 = vld [vmem:[#allocation5 + $0x48] sm:$0xff]
        %v307 = vld [vmem:[#allocation5 + $0x50] sm:$0xff]
        %v308 = vld [vmem:[#allocation5 + $0x58] sm:$0xff]
        %v309 = vld [vmem:[#allocation5 + $0x60] sm:$0xff]
        %v310 = vld [vmem:[#allocation5 + $0x68] sm:$0xff]
        %v311 = vld [vmem:[#allocation5 + $0x70] sm:$0xff]
        %v312 = vld [vmem:[#allocation5 + $0x78] sm:$0xff]
        %v313 = vld [vmem:[#allocation5 + $0x80] sm:$0xff]
        %v314 = vld [vmem:[#allocation5 + $0x88] sm:$0xff]
        %v315 = vld [vmem:[#allocation5 + $0x90] sm:$0xff]
        %v316 = vld [vmem:[#allocation5 + $0x98] sm:$0xff]
        %v317 = vld [vmem:[#allocation5 + $0xa0] sm:$0xff]
        %v318 = vld [vmem:[#allocation5 + $0xa8] sm:$0xff]
        %v319 = vld [vmem:[#allocation5 + $0xb0] sm:$0xff]
        %v320 = vld [vmem:[#allocation5 + $0xb8] sm:$0xff]
        %v321 = vld [vmem:[#allocation5 + $0xc0] sm:$0xff]
        %v322 = vld [vmem:[#allocation5 + $0xc8] sm:$0xff]
        %v323 = vld [vmem:[#allocation5 + $0xd0] sm:$0xff]
        %v324 = vld [vmem:[#allocation5 + $0xd8] sm:$0xff]
        %v325 = vld [vmem:[#allocation5 + $0xe0] sm:$0xff]
        %v326 = vld [vmem:[#allocation5 + $0xe8] sm:$0xff]
        %v327 = vld [vmem:[#allocation5 + $0xf0] sm:$0xff]
        %v328 = vld [vmem:[#allocation5 + $0xf8] sm:$0xff]
        %v329 = vld [vmem:[%s2] sm:$0x3]
        %v331 = vlaneseq
        %v332 = vshrl.u32 %v331, 7
        %v333 = vsub.s32 0, %v332
        %v334 = vrot.slane %v329, %v333
        %v335 = vlaneseq
        %v336 = vshrl.u32 %v335, 7
        %v337 = vsub.s32 1, %v336
        %v338 = vrot.slane %v329, %v337
        %341 = vmatprep.subr.mxu0 %v298
        %342 = vmatpush1.msra.mxu0 %v297
        %343 = vmatprep.subr.mxu0 %v300
        %344 = vmatpush1.msra.mxu0 %v299
        %345 = vmatprep.subr.mxu0 %v302
        %346 = vmatpush1.msra.mxu0 %v301
        %347 = vmatprep.subr.mxu0 %v304
        %348 = vmatpush1.msra.mxu0 %v303
        %349 = vmatprep.subr.mxu0 %v306
        %350 = vmatpush1.msra.mxu0 %v305
        %351 = vmatprep.subr.mxu0 %v308
        %352 = vmatpush1.msra.mxu0 %v307
        %353 = vmatprep.subr.mxu0 %v310
        %354 = vmatpush1.msra.mxu0 %v309
        %355 = vmatprep.subr.mxu0 %v312
        %356 = vmatpush1.msra.mxu0 %v311
        %357 = vmatprep.subr.mxu0 %v314
        %358 = vmatpush1.msra.mxu0 %v313
        %359 = vmatprep.subr.mxu0 %v316
        %360 = vmatpush1.msra.mxu0 %v315
        %361 = vmatprep.subr.mxu0 %v318
        %362 = vmatpush1.msra.mxu0 %v317
        %363 = vmatprep.subr.mxu0 %v320
        %364 = vmatpush1.msra.mxu0 %v319
        %365 = vmatprep.subr.mxu0 %v322
        %366 = vmatpush1.msra.mxu0 %v321
        %367 = vmatprep.subr.mxu0 %v324
        %368 = vmatpush1.msra.mxu0 %v323
        %369 = vmatprep.subr.mxu0 %v326
        %370 = vmatpush1.msra.mxu0 %v325
        %371 = vmatprep.subr.mxu0 %v328
        %372 = vmatpush1.msra.mxu0 %v327
        %373 = vmatprep.subr.mxu0 0.0
        %374 = vmatpush1.msra.mxu0 0.0
        %375 = vmatprep.subr.mxu0 0.0
        %376 = vmatpush1.msra.mxu0 0.0
        %377 = vmatprep.subr.mxu0 0.0
        %378 = vmatpush1.msra.mxu0 0.0
        %379 = vmatprep.subr.mxu0 0.0
        %380 = vmatpush1.msra.mxu0 0.0
        %381 = vmatprep.subr.mxu0 0.0
        %382 = vmatpush1.msra.mxu0 0.0
        %383 = vmatprep.subr.mxu0 0.0
        %384 = vmatpush1.msra.mxu0 0.0
        %385 = vmatprep.subr.mxu0 0.0
        %386 = vmatpush1.msra.mxu0 0.0
        %387 = vmatprep.subr.mxu0 0.0
        %388 = vmatpush1.msra.mxu0 0.0
        %389 = vmatprep.subr.mxu0 0.0
        %390 = vmatpush1.msra.mxu0 0.0
        %391 = vmatprep.subr.mxu0 0.0
        %392 = vmatpush1.msra.mxu0 0.0
        %393 = vmatprep.subr.mxu0 0.0
        %394 = vmatpush1.msra.mxu0 0.0
        %395 = vmatprep.subr.mxu0 0.0
        %396 = vmatpush1.msra.mxu0 0.0
        %397 = vmatprep.subr.mxu0 0.0
        %398 = vmatpush1.msra.mxu0 0.0
        %399 = vmatprep.subr.mxu0 0.0
        %400 = vmatpush1.msra.mxu0 0.0
        %401 = vmatprep.subr.mxu0 0.0
        %402 = vmatpush1.msra.mxu0 0.0
        %403 = vmatprep.subr.mxu0 0.0
        %404 = vmatpush1.msra.mxu0 0.0
        %405 = vmatprep.mubr.f32.mxu0 0.0
        %406 = vmatmul.mubr.f32.gmra.mrb[0].mxu0 %v265
        %v407 = vpop.f32.mrb[0].mxu0
        %v408 = vadd.f32 %v334, %v407
        %v409 = vpop.f32.mrb[0].mxu0
        %v410 = vadd.f32 %v338, %v409
        %411 = vmatprep.mubr.f32.mxu0 0.0
        %412 = vmatmul.mubr.f32.gmra.mrb[0].mxu0 %v266
        %v413 = vpop.f32.mrb[0].mxu0
        %v414 = vadd.f32 %v334, %v413
        %v415 = vpop.f32.mrb[0].mxu0
        %v416 = vadd.f32 %v338, %v415
        %417 = vmatprep.mubr.f32.mxu0 0.0
        %418 = vmatmul.mubr.f32.gmra.mrb[0].mxu0 %v267
        %v419 = vpop.f32.mrb[0].mxu0
        %v420 = vadd.f32 %v334, %v419
        %v421 = vpop.f32.mrb[0].mxu0
        %v422 = vadd.f32 %v338, %v421
        %423 = vmatprep.mubr.f32.mxu0 0.0
        %424 = vmatmul.mubr.f32.gmra.mrb[0].mxu0 %v268
        %v425 = vpop.f32.mrb[0].mxu0
        %v426 = vadd.f32 %v334, %v425
        %v427 = vpop.f32.mrb[0].mxu0
        %v428 = vadd.f32 %v338, %v427
        %429 = vmatprep.mubr.f32.mxu0 0.0
        %430 = vmatmul.mubr.f32.gmra.mrb[0].mxu0 %v269
        %v431 = vpop.f32.mrb[0].mxu0
        %v432 = vadd.f32 %v334, %v431
        %v433 = vpop.f32.mrb[0].mxu0
        %v434 = vadd.f32 %v338, %v433
        %435 = vmatprep.mubr.f32.mxu0 0.0
        %436 = vmatmul.mubr.f32.gmra.mrb[0].mxu0 %v270
        %v437 = vpop.f32.mrb[0].mxu0
        %v438 = vadd.f32 %v334, %v437
        %v439 = vpop.f32.mrb[0].mxu0
        %v440 = vadd.f32 %v338, %v439
        %441 = vmatprep.mubr.f32.mxu0 0.0
        %442 = vmatmul.mubr.f32.gmra.mrb[0].mxu0 %v271
        %v443 = vpop.f32.mrb[0].mxu0
        %v444 = vadd.f32 %v334, %v443
        %v445 = vpop.f32.mrb[0].mxu0
        %v446 = vadd.f32 %v338, %v445
        %447 = vmatprep.mubr.f32.mxu0 0.0
        %448 = vmatmul.mubr.f32.gmra.mrb[0].mxu0 %v272
        %v449 = vpop.f32.mrb[0].mxu0
        %v450 = vadd.f32 %v334, %v449
        %v451 = vpop.f32.mrb[0].mxu0
        %v452 = vadd.f32 %v338, %v451
        %453 = vmatprep.mubr.f32.mxu0 0.0
        %454 = vmatmul.mubr.f32.gmra.mrb[0].mxu0 %v273
        %v455 = vpop.f32.mrb[0].mxu0
        %v456 = vadd.f32 %v334, %v455
        %v457 = vpop.f32.mrb[0].mxu0
        %v458 = vadd.f32 %v338, %v457
        %459 = vmatprep.mubr.f32.mxu0 0.0
        %460 = vmatmul.mubr.f32.gmra.mrb[0].mxu0 %v274
        %v461 = vpop.f32.mrb[0].mxu0
        %v462 = vadd.f32 %v334, %v461
        %v463 = vpop.f32.mrb[0].mxu0
        %v464 = vadd.f32 %v338, %v463
        %465 = vmatprep.mubr.f32.mxu0 0.0
        %466 = vmatmul.mubr.f32.gmra.mrb[0].mxu0 %v275
        %v467 = vpop.f32.mrb[0].mxu0
        %v468 = vadd.f32 %v334, %v467
        %v469 = vpop.f32.mrb[0].mxu0
        %v470 = vadd.f32 %v338, %v469
        %471 = vmatprep.mubr.f32.mxu0 0.0
        %472 = vmatmul.mubr.f32.gmra.mrb[0].mxu0 %v276
        %v473 = vpop.f32.mrb[0].mxu0
        %v474 = vadd.f32 %v334, %v473
        %v475 = vpop.f32.mrb[0].mxu0
        %v476 = vadd.f32 %v338, %v475
        %477 = vmatprep.mubr.f32.mxu0 0.0
        %478 = vmatmul.mubr.f32.gmra.mrb[0].mxu0 %v277
        %v479 = vpop.f32.mrb[0].mxu0
        %v480 = vadd.f32 %v334, %v479
        %v481 = vpop.f32.mrb[0].mxu0
        %v482 = vadd.f32 %v338, %v481
        %483 = vmatprep.mubr.f32.mxu0 0.0
        %484 = vmatmul.mubr.f32.gmra.mrb[0].mxu0 %v278
        %v485 = vpop.f32.mrb[0].mxu0
        %v486 = vadd.f32 %v334, %v485
        %v487 = vpop.f32.mrb[0].mxu0
        %v488 = vadd.f32 %v338, %v487
        %489 = vmatprep.mubr.f32.mxu0 0.0
        %490 = vmatmul.mubr.f32.gmra.mrb[0].mxu0 %v279
        %v491 = vpop.f32.mrb[0].mxu0
        %v492 = vadd.f32 %v334, %v491
        %v493 = vpop.f32.mrb[0].mxu0
        %v494 = vadd.f32 %v338, %v493
        %495 = vmatprep.mubr.f32.mxu0 0.0
        %496 = vmatmul.mubr.f32.gmra.mrb[0].mxu0 %v280
        %v497 = vpop.f32.mrb[0].mxu0
        %v498 = vadd.f32 %v334, %v497
        %v499 = vpop.f32.mrb[0].mxu0
        %v500 = vadd.f32 %v338, %v499
        %501 = vmatprep.mubr.f32.mxu0 0.0
        %502 = vmatmul.mubr.f32.gmra.mrb[0].mxu0 %v281
        %v503 = vpop.f32.mrb[0].mxu0
        %v504 = vadd.f32 %v334, %v503
        %v505 = vpop.f32.mrb[0].mxu0
        %v506 = vadd.f32 %v338, %v505
        %507 = vmatprep.mubr.f32.mxu0 0.0
        %508 = vmatmul.mubr.f32.gmra.mrb[0].mxu0 %v282
        %v509 = vpop.f32.mrb[0].mxu0
        %v510 = vadd.f32 %v334, %v509
        %v511 = vpop.f32.mrb[0].mxu0
        %v512 = vadd.f32 %v338, %v511
        %513 = vmatprep.mubr.f32.mxu0 0.0
        %514 = vmatmul.mubr.f32.gmra.mrb[0].mxu0 %v283
        %v515 = vpop.f32.mrb[0].mxu0
        %v516 = vadd.f32 %v334, %v515
        %v517 = vpop.f32.mrb[0].mxu0
        %v518 = vadd.f32 %v338, %v517
        %519 = vmatprep.mubr.f32.mxu0 0.0
        %520 = vmatmul.mubr.f32.gmra.mrb[0].mxu0 %v284
        %v521 = vpop.f32.mrb[0].mxu0
        %v522 = vadd.f32 %v334, %v521
        %v523 = vpop.f32.mrb[0].mxu0
        %v524 = vadd.f32 %v338, %v523
        %525 = vmatprep.mubr.f32.mxu0 0.0
        %526 = vmatmul.mubr.f32.gmra.mrb[0].mxu0 %v285
        %v527 = vpop.f32.mrb[0].mxu0
        %v528 = vadd.f32 %v334, %v527
        %v529 = vpop.f32.mrb[0].mxu0
        %v530 = vadd.f32 %v338, %v529
        %531 = vmatprep.mubr.f32.mxu0 0.0
        %532 = vmatmul.mubr.f32.gmra.mrb[0].mxu0 %v286
        %v533 = vpop.f32.mrb[0].mxu0
        %v534 = vadd.f32 %v334, %v533
        %v535 = vpop.f32.mrb[0].mxu0
        %v536 = vadd.f32 %v338, %v535
        %537 = vmatprep.mubr.f32.mxu0 0.0
        %538 = vmatmul.mubr.f32.gmra.mrb[0].mxu0 %v287
        %v539 = vpop.f32.mrb[0].mxu0
        %v540 = vadd.f32 %v334, %v539
        %v541 = vpop.f32.mrb[0].mxu0
        %v542 = vadd.f32 %v338, %v541
        %543 = vmatprep.mubr.f32.mxu0 0.0
        %544 = vmatmul.mubr.f32.gmra.mrb[0].mxu0 %v288
        %v545 = vpop.f32.mrb[0].mxu0
        %v546 = vadd.f32 %v334, %v545
        %v547 = vpop.f32.mrb[0].mxu0
        %v548 = vadd.f32 %v338, %v547
        %549 = vmatprep.mubr.f32.mxu0 0.0
        %550 = vmatmul.mubr.f32.gmra.mrb[0].mxu0 %v289
        %v551 = vpop.f32.mrb[0].mxu0
        %v552 = vadd.f32 %v334, %v551
        %v553 = vpop.f32.mrb[0].mxu0
        %v554 = vadd.f32 %v338, %v553
        %555 = vmatprep.mubr.f32.mxu0 0.0
        %556 = vmatmul.mubr.f32.gmra.mrb[0].mxu0 %v290
        %v557 = vpop.f32.mrb[0].mxu0
        %v558 = vadd.f32 %v334, %v557
        %v559 = vpop.f32.mrb[0].mxu0
        %v560 = vadd.f32 %v338, %v559
        %561 = vmatprep.mubr.f32.mxu0 0.0
        %562 = vmatmul.mubr.f32.gmra.mrb[0].mxu0 %v291
        %v563 = vpop.f32.mrb[0].mxu0
        %v564 = vadd.f32 %v334, %v563
        %v565 = vpop.f32.mrb[0].mxu0
        %v566 = vadd.f32 %v338, %v565
        %567 = vmatprep.mubr.f32.mxu0 0.0
        %568 = vmatmul.mubr.f32.gmra.mrb[0].mxu0 %v292
        %v569 = vpop.f32.mrb[0].mxu0
        %v570 = vadd.f32 %v334, %v569
        %v571 = vpop.f32.mrb[0].mxu0
        %v572 = vadd.f32 %v338, %v571
        %573 = vmatprep.mubr.f32.mxu0 0.0
        %574 = vmatmul.mubr.f32.gmra.mrb[0].mxu0 %v293
        %v575 = vpop.f32.mrb[0].mxu0
        %v576 = vadd.f32 %v334, %v575
        %v577 = vpop.f32.mrb[0].mxu0
        %v578 = vadd.f32 %v338, %v577
        %579 = vmatprep.mubr.f32.mxu0 0.0
        %580 = vmatmul.mubr.f32.gmra.mrb[0].mxu0 %v294
        %v581 = vpop.f32.mrb[0].mxu0
        %v582 = vadd.f32 %v334, %v581
        %v583 = vpop.f32.mrb[0].mxu0
        %v584 = vadd.f32 %v338, %v583
        %585 = vmatprep.mubr.f32.mxu0 0.0
        %586 = vmatmul.mubr.f32.gmra.mrb[0].mxu0 %v295
        %v587 = vpop.f32.mrb[0].mxu0
        %v588 = vadd.f32 %v334, %v587
        %v589 = vpop.f32.mrb[0].mxu0
        %v590 = vadd.f32 %v338, %v589
        %591 = vmatprep.mubr.f32.mxu0 0.0
        %592 = vmatmul.mubr.f32.gmra.mrb[0].mxu0 %v296
        %v593 = vpop.f32.mrb[0].mxu0
        %v594 = vadd.f32 %v334, %v593
        %v595 = vpop.f32.mrb[0].mxu0
        %v596 = vadd.f32 %v338, %v595
        %597 = vdwg.mxu0
        %598 = vst [vmem:[%s254] sm:$0xff] %v408
        %599 = vst [vmem:[%s254 + $0x8] sm:$0xff] %v414
        %600 = vst [vmem:[%s254 + $0x10] sm:$0xff] %v420
        %601 = vst [vmem:[%s254 + $0x18] sm:$0xff] %v426
        %602 = vst [vmem:[%s254 + $0x20] sm:$0xff] %v432
        %603 = vst [vmem:[%s254 + $0x28] sm:$0xff] %v438
        %604 = vst [vmem:[%s254 + $0x30] sm:$0xff] %v444
        %605 = vst [vmem:[%s254 + $0x38] sm:$0xff] %v450
        %606 = vst [vmem:[%s254 + $0x40] sm:$0xff] %v456
        %607 = vst [vmem:[%s254 + $0x48] sm:$0xff] %v462
        %608 = vst [vmem:[%s254 + $0x50] sm:$0xff] %v468
        %609 = vst [vmem:[%s254 + $0x58] sm:$0xff] %v474
        %610 = vst [vmem:[%s254 + $0x60] sm:$0xff] %v480
        %611 = vst [vmem:[%s254 + $0x68] sm:$0xff] %v486
        %612 = vst [vmem:[%s254 + $0x70] sm:$0xff] %v492
        %613 = vst [vmem:[%s254 + $0x78] sm:$0xff] %v498
        %614 = vst [vmem:[%s254 + $0x80] sm:$0xff] %v504
        %615 = vst [vmem:[%s254 + $0x88] sm:$0xff] %v510
        %616 = vst [vmem:[%s254 + $0x90] sm:$0xff] %v516
        %617 = vst [vmem:[%s254 + $0x98] sm:$0xff] %v522
        %618 = vst [vmem:[%s254 + $0xa0] sm:$0xff] %v528
        %619 = vst [vmem:[%s254 + $0xa8] sm:$0xff] %v534
        %620 = vst [vmem:[%s254 + $0xb0] sm:$0xff] %v540
        %621 = vst [vmem:[%s254 + $0xb8] sm:$0xff] %v546
        %622 = vst [vmem:[%s254 + $0xc0] sm:$0xff] %v552
        %623 = vst [vmem:[%s254 + $0xc8] sm:$0xff] %v558
        %624 = vst [vmem:[%s254 + $0xd0] sm:$0xff] %v564
        %625 = vst [vmem:[%s254 + $0xd8] sm:$0xff] %v570
        %626 = vst [vmem:[%s254 + $0xe0] sm:$0xff] %v576
        %627 = vst [vmem:[%s254 + $0xe8] sm:$0xff] %v582
        %628 = vst [vmem:[%s254 + $0xf0] sm:$0xff] %v588
        %629 = vst [vmem:[%s254 + $0xf8] sm:$0xff] %v594
        %630 = vst [vmem:[%s261] sm:$0xff] %v410
        %631 = vst [vmem:[%s261 + $0x8] sm:$0xff] %v416
        %632 = vst [vmem:[%s261 + $0x10] sm:$0xff] %v422
        %633 = vst [vmem:[%s261 + $0x18] sm:$0xff] %v428
        %634 = vst [vmem:[%s261 + $0x20] sm:$0xff] %v434
        %635 = vst [vmem:[%s261 + $0x28] sm:$0xff] %v440
        %636 = vst [vmem:[%s261 + $0x30] sm:$0xff] %v446
        %637 = vst [vmem:[%s261 + $0x38] sm:$0xff] %v452
        %638 = vst [vmem:[%s261 + $0x40] sm:$0xff] %v458
        %639 = vst [vmem:[%s261 + $0x48] sm:$0xff] %v464
        %640 = vst [vmem:[%s261 + $0x50] sm:$0xff] %v470
        %641 = vst [vmem:[%s261 + $0x58] sm:$0xff] %v476
        %642 = vst [vmem:[%s261 + $0x60] sm:$0xff] %v482
        %643 = vst [vmem:[%s261 + $0x68] sm:$0xff] %v488
        %644 = vst [vmem:[%s261 + $0x70] sm:$0xff] %v494
        %645 = vst [vmem:[%s261 + $0x78] sm:$0xff] %v500
        %646 = vst [vmem:[%s261 + $0x80] sm:$0xff] %v506
        %647 = vst [vmem:[%s261 + $0x88] sm:$0xff] %v512
        %648 = vst [vmem:[%s261 + $0x90] sm:$0xff] %v518
        %649 = vst [vmem:[%s261 + $0x98] sm:$0xff] %v524
        %650 = vst [vmem:[%s261 + $0xa0] sm:$0xff] %v530
        %651 = vst [vmem:[%s261 + $0xa8] sm:$0xff] %v536
        %652 = vst [vmem:[%s261 + $0xb0] sm:$0xff] %v542
        %653 = vst [vmem:[%s261 + $0xb8] sm:$0xff] %v548
        %654 = vst [vmem:[%s261 + $0xc0] sm:$0xff] %v554
        %655 = vst [vmem:[%s261 + $0xc8] sm:$0xff] %v560
        %656 = vst [vmem:[%s261 + $0xd0] sm:$0xff] %v566
        %657 = vst [vmem:[%s261 + $0xd8] sm:$0xff] %v572
        %658 = vst [vmem:[%s261 + $0xe0] sm:$0xff] %v578
        %659 = vst [vmem:[%s261 + $0xe8] sm:$0xff] %v584
        %660 = vst [vmem:[%s261 + $0xf0] sm:$0xff] %v590
        %661 = vst [vmem:[%s261 + $0xf8] sm:$0xff] %v596
        %s662 = sand.u32 %s118, 1
        %s663 = scalar_lea.sflag [#allocation4], %s662
        %s664 = sand.u32 %s118, 1
        %s665 = smul.addr %s664, 256
        %s666 = scalar_lea.vmem [#allocation7], %s665
        %s667 = sand.u32 %s146, 1
        %s668 = scalar_lea.sflag [#allocation9], %s667
        %s669 = sand.u32 %s146, 1
        %s670 = smul.addr %s669, 256
        %s671 = scalar_lea.vmem [#allocation8], %s670
        // Predicated region
        $region41: #{tpu_custom_call.1} parent=31 // pred_check
          %p672 = pneg %p128
        $region42: #{tpu_custom_call.1} parent=31 // pred_check_branch
          %674 = sbr.rel (%p672) target = $region44
        $region43: #{tpu_custom_call.1} parent=31 // pred_region
          %s675 = smul.u32 32, %s31
          %s677 = ssub.s32 4096, 4096
          %678 = vsyncadd %s663, %s677
          %s679 = smul.addr %s30, 32
          %s680 = sadd.s32 %s675, %s679
          %s681 = smul.addr %s680, 128
          %s682 = scalar_lea.hbm %s3, %s681
          %s683 = sshll.u32 %s666, 4
          %s684 = int_to_ptr.vmem [resolvable:$true] %s683
          %689 = dma.vmem_to_hbm [thread:$0]  %s684, 4096, %s682, %s663, 128, 128, 8
        $region44: #{tpu_custom_call.1} parent=31 // pred_fallthru
          _
        // Predicated region
        $region45: #{tpu_custom_call.1} parent=31 // pred_check
          %p690 = pneg %p156
        $region46: #{tpu_custom_call.1} parent=31 // pred_check_branch
          %692 = sbr.rel (%p690) target = $region48
        $region47: #{tpu_custom_call.1} parent=31 // pred_region
          %s693 = smul.u32 32, %s31
          %s695 = ssub.s32 4096, 4096
          %696 = vsyncadd %s668, %s695
          %s697 = smul.addr %s30, 32
          %s698 = sadd.s32 %s693, %s697
          %s699 = smul.addr %s698, 128
          %s700 = scalar_lea.hbm %s4, %s699
          %s701 = sshll.u32 %s671, 4
          %s702 = int_to_ptr.vmem [resolvable:$true] %s701
          %707 = dma.vmem_to_hbm [thread:$0]  %s702, 4096, %s700, %s668, 128, 128, 8
        $region48: #{tpu_custom_call.1} parent=31 // pred_fallthru
          _
      $region32: #{tpu_custom_call.1} parent=5 // pred_fallthru
        _
      %p708 = scmp.le.s32.totalorder 2, %s21
      // Predicated region
      $region49: #{tpu_custom_call.1} parent=5 // pred_check
        %p709 = pneg %p708
      $region50: #{tpu_custom_call.1} parent=5 // pred_check_branch
        %711 = sbr.rel (%p709) target = $region52
      $region51: #{tpu_custom_call.1} parent=5 // pred_region
        %s712 = ssub.s32 %s21, 2
        // Predicated region
        $region53: #{tpu_custom_call.1} parent=51 // pred_check
          %p713 = pneg %p134
        $region54: #{tpu_custom_call.1} parent=51 // pred_check_branch
          %715 = sbr.rel (%p713) target = $region56
        $region55: #{tpu_custom_call.1} parent=51 // pred_region
          %s716 = sand.u32 %s119, 1
          %s717 = scalar_lea.sflag [#allocation4], %s716
          %s718 = sand.u32 %s119, 1
          %s719 = smul.addr %s718, 256
          %s720 = scalar_lea.vmem [#allocation7], %s719
          %721 = dma.done %s717, 4096
        $region56: #{tpu_custom_call.1} parent=51 // pred_fallthru
          _
        // Predicated region
        $region57: #{tpu_custom_call.1} parent=51 // pred_check
          %p722 = pneg %p162
        $region58: #{tpu_custom_call.1} parent=51 // pred_check_branch
          %724 = sbr.rel (%p722) target = $region60
        $region59: #{tpu_custom_call.1} parent=51 // pred_region
          %s725 = sand.u32 %s147, 1
          %s726 = scalar_lea.sflag [#allocation9], %s725
          %s727 = sand.u32 %s147, 1
          %s728 = smul.addr %s727, 256
          %s729 = scalar_lea.vmem [#allocation8], %s728
          %730 = dma.done %s726, 4096
        $region60: #{tpu_custom_call.1} parent=51 // pred_fallthru
          _
      $region52: #{tpu_custom_call.1} parent=5 // pred_fallthru
        _
    $region6: #{tpu_custom_call.1} parent=1 // loop_footer
      %s25 = sadd.s32 1, %s21
    $region7: #{tpu_custom_call.1} parent=1 // loop_footer_branch
      %20 = sbr.rel target = $region3
    $region8: #{tpu_custom_call.1} parent=1 // loop_exit
      _
    %731 = vsyncpa [#allocation3], 1
    %s732 = scalar_lea.sflag [#allocation3], 1
    %733 = vsyncpa %s732, 1
    %734 = vsyncpa [#allocation6], 1
    %735 = vsyncpa [#allocation4], 1
    %s736 = scalar_lea.sflag [#allocation4], 1
    %737 = vsyncpa %s736, 1
    %738 = vsyncpa [#allocation9], 1
    %s739 = scalar_lea.sflag [#allocation9], 1
    %740 = vsyncpa %s739, 1

// kernel: tpu_custom_call.1
$region0: #{tpu_custom_call.1}
  #allocation0 [shape = 'u32[]', space=smem, size = 0x4, offset = 0x4, fixed_abs, tag = 'smem constant byte address 0x4 - core index']
  #allocation1 [shape = 'u32[144,128]{1,0:T(1,128)}', space=vmem, size = 0x12000, scoped, tag = 'internal scratch']
  %s0 = inlined_call_operand.hbm [shape: f32[2,256,128], index: 0, kind: input, shape index: {}]
  %s1 = inlined_call_operand.hbm [shape: f32[128,256], index: 1, kind: input, shape index: {}]
  %s2 = inlined_call_operand.vmem [shape: f32[1,256], index: 2, kind: input, shape index: {}]
  %s3 = inlined_call_operand.hbm [shape: f32[2,256,128], index: 3, kind: output, shape index: {0}]
  %s4 = inlined_call_operand.hbm [shape: f32[2,256,128], index: 4, kind: output, shape index: {1}]
  %5 = xla_tuple %s3, %s4
  %s6 = sld [smem:[#allocation0]]
  $region61: #{tpu_custom_call.1} parent=0
    _
  %s8 = ssub.s32 1, %s6
  %s9 = scalar_select 0, %s8, %s6
  $region1: #{tpu_custom_call.1} parent=0
    #allocation2 [shape = 'u8[262144]{0}', space=vmem, size = 0x40000, scoped, tag = 'input window, operand 0']
    #allocation3 [shape = 's32[2]{0}', space=sflag, size = 0x8, scoped, tag = 'scoped memory for tpu_custom_call.1']
    #allocation4 [shape = 's32[2]{0}', space=sflag, size = 0x8, scoped, tag = 'scoped memory for tpu_custom_call.1']
    #allocation5 [shape = 'u8[131072]{0}', space=vmem, size = 0x20000, scoped, tag = 'input window, operand 1, single buffered']
    #allocation6 [shape = 's32[1]{0}', space=sflag, size = 0x4, scoped, tag = 'scoped memory for tpu_custom_call.1']
    #allocation7 [shape = 'u8[262144]{0}', space=vmem, size = 0x40000, scoped, tag = 'output window, operand 0']
    #allocation8 [shape = 'u8[262144]{0}', space=vmem, size = 0x40000, scoped, tag = 'output window, operand 1']
    #allocation9 [shape = 's32[2]{0}', space=sflag, size = 0x8, scoped, tag = 'scoped memory for tpu_custom_call.1']
    %10 = vsyncpa [#allocation3], 0
    %s11 = scalar_lea.sflag [#allocation3], 1
    %12 = vsyncpa %s11, 0
    %13 = vsyncpa [#allocation6], 0
    %14 = vsyncpa [#allocation4], 0
    %s15 = scalar_lea.sflag [#allocation4], 1
    %16 = vsyncpa %s15, 0
    %17 = vsyncpa [#allocation9], 0
    %s18 = scalar_lea.sflag [#allocation9], 1
    %19 = vsyncpa %s18, 0
    loop: start=0, step=1, limit=4
    $region2: #{tpu_custom_call.1} parent=1 // loop_pre_header
      _
    $region3: #{tpu_custom_call.1} parent=1 // loop_header
      %s21 = sphi 0, %s25
      %p22 = scmp.ge.s32.totalorder %s21, 4
      %s28 = sphi 0, %s40
      %s29 = sphi 0, %s36
      %s30 = sphi 0, %s28
      %s31 = sphi 0, %s29
      %s32 = sphi 0, %s30
      %s33 = sphi 0, %s31
      %s45 = sphi 0, %s47
      %s48 = sphi 0, %s45
      %s49 = sphi 0, %s48
      %s65 = sphi 0, %s49
      %s69 = sphi 0, %s69
      %s71 = sphi 0, %s69
      %s72 = sphi 0, %s71
      %s86 = sphi 0, %s72
      %s90 = sphi 0, %s90
      %s92 = sphi 0, %s90
      %s93 = sphi 0, %s92
      %s107 = sphi 0, %s93
      %s115 = sphi 0, %s117
      %s118 = sphi 0, %s115
      %s119 = sphi 0, %s118
      %s135 = sphi 0, %s119
      %s143 = sphi 0, %s145
      %s146 = sphi 0, %s143
      %s147 = sphi 0, %s146
      %s163 = sphi 0, %s147
    $region4: #{tpu_custom_call.1} parent=1 // loop_header_branch
      %24 = sbr.rel (%p22) target = $region8
    $region5: #{tpu_custom_call.1} parent=1 // loop_body
      %s26 = ssub.s32 %s21, 1
      %s27 = ssub.s32 %s21, 2
      %s34 = sadd.s32 1, %s29
      %p35 = scmp.ge.s32.totalorder %s34, 1
      %s36 = scalar_select %p35, 0, %s34
      %s37 = sadd.s32 1, %s28
      %s38 = scalar_select %p35, %s37, %s28
      %p39 = scmp.ge.s32.totalorder %s38, 2
      %s40 = scalar_select %p39, 0, %s38
      %s41 = ssub.s32 %s28, %s40
      %s42 = ssub.s32 %s29, %s36
      %s43 = sor.u32 %s41, %s42
      %p44 = scmp.eq.s32.totalorder %s43, 0
      %s46 = sadd.s32 %s45, 1
      %s47 = scalar_select %p44, %s45, %s46
      %p50 = pneg %p44
      %p51 = scmp.eq.s32.totalorder %s21, 1
      %p52 = por %p50, %p51
      %p53 = scmp.ne.s32.totalorder %s45, %s48
      %p54 = scmp.eq.s32.totalorder %s21, 0
      %p55 = por %p53, %p54
      %p56 = scmp.ne.s32.totalorder %s45, %s48
      %p57 = scmp.eq.s32.totalorder %s26, 1
      %p58 = por %p56, %p57
      %p59 = scmp.ne.s32.totalorder %s48, %s49
      %p60 = scmp.eq.s32.totalorder %s26, 0
      %p61 = por %p59, %p60
      %p62 = scmp.ne.s32.totalorder %s48, %s49
      %p63 = scmp.eq.s32.totalorder %s27, 1
      %p64 = por %p62, %p63
      %p66 = scmp.ne.s32.totalorder %s49, %s65
      %p67 = scmp.eq.s32.totalorder %s27, 0
      %p68 = por %p66, %p67
      %s70 = sadd.s32 %s69, 1
      %p73 = scmp.eq.s32.totalorder %s21, 1
      %p74 = scmp.ne.s32.totalorder %s69, %s71
      %p75 = scmp.eq.s32.totalorder %s21, 0
      %p76 = por %p74, %p75
      %p77 = scmp.ne.s32.totalorder %s69, %s71
      %p78 = scmp.eq.s32.totalorder %s26, 1
      %p79 = por %p77, %p78
      %p80 = scmp.ne.s32.totalorder %s71, %s72
      %p81 = scmp.eq.s32.totalorder %s26, 0
      %p82 = por %p80, %p81
      %p83 = scmp.ne.s32.totalorder %s71, %s72
      %p84 = scmp.eq.s32.totalorder %s27, 1
      %p85 = por %p83, %p84
      %p87 = scmp.ne.s32.totalorder %s72, %s86
      %p88 = scmp.eq.s32.totalorder %s27, 0
      %p89 = por %p87, %p88
      %s91 = sadd.s32 %s90, 1
      %p94 = scmp.eq.s32.totalorder %s21, 1
      %p95 = scmp.ne.s32.totalorder %s90, %s92
      %p96 = scmp.eq.s32.totalorder %s21, 0
      %p97 = por %p95, %p96
      %p98 = scmp.ne.s32.totalorder %s90, %s92
      %p99 = scmp.eq.s32.totalorder %s26, 1
      %p100 = por %p98, %p99
      %p101 = scmp.ne.s32.totalorder %s92, %s93
      %p102 = scmp.eq.s32.totalorder %s26, 0
      %p103 = por %p101, %p102
      %p104 = scmp.ne.s32.totalorder %s92, %s93
      %p105 = scmp.eq.s32.totalorder %s27, 1
      %p106 = por %p104, %p105
      %p108 = scmp.ne.s32.totalorder %s93, %s107
      %p109 = scmp.eq.s32.totalorder %s27, 0
      %p110 = por %p108, %p109
      %s111 = ssub.s32 %s28, %s40
      %s112 = ssub.s32 %s29, %s36
      %s113 = sor.u32 %s111, %s112
      %p114 = scmp.eq.s32.totalorder %s113, 0
      %s116 = sadd.s32 %s115, 1
      %s117 = scalar_select %p114, %s115, %s116
      %p120 = pneg %p114
      %p121 = scmp.eq.s32.totalorder %s21, 1
      %p122 = por %p120, %p121
      %p123 = scmp.ne.s32.totalorder %s115, %s118
      %p124 = scmp.eq.s32.totalorder %s21, 0
      %p125 = por %p123, %p124
      %p126 = scmp.ne.s32.totalorder %s115, %s118
      %p127 = scmp.eq.s32.totalorder %s26, 1
      %p128 = por %p126, %p127
      %p129 = scmp.ne.s32.totalorder %s118, %s119
      %p130 = scmp.eq.s32.totalorder %s26, 0
      %p131 = por %p129, %p130
      %p132 = scmp.ne.s32.totalorder %s118, %s119
      %p133 = scmp.eq.s32.totalorder %s27, 1
      %p134 = por %p132, %p133
      %p136 = scmp.ne.s32.totalorder %s119, %s135
      %p137 = scmp.eq.s32.totalorder %s27, 0
      %p138 = por %p136, %p137
      %s139 = ssub.s32 %s28, %s40
      %s140 = ssub.s32 %s29, %s36
      %s141 = sor.u32 %s139, %s140
      %p142 = scmp.eq.s32.totalorder %s141, 0
      %s144 = sadd.s32 %s143, 1
      %s145 = scalar_select %p142, %s143, %s144
      %p148 = pneg %p142
      %p149 = scmp.eq.s32.totalorder %s21, 1
      %p150 = por %p148, %p149
      %p151 = scmp.ne.s32.totalorder %s143, %s146
      %p152 = scmp.eq.s32.totalorder %s21, 0
      %p153 = por %p151, %p152
      %p154 = scmp.ne.s32.totalorder %s143, %s146
      %p155 = scmp.eq.s32.totalorder %s26, 1
      %p156 = por %p154, %p155
      %p157 = scmp.ne.s32.totalorder %s146, %s147
      %p158 = scmp.eq.s32.totalorder %s26, 0
      %p159 = por %p157, %p158
      %p160 = scmp.ne.s32.totalorder %s146, %s147
      %p161 = scmp.eq.s32.totalorder %s27, 1
      %p162 = por %p160, %p161
      %p164 = scmp.ne.s32.totalorder %s147, %s163
      %p165 = scmp.eq.s32.totalorder %s27, 0
      %p166 = por %p164, %p165
      %p167 = scmp.le.s32.totalorder 1, %s21
      %p168 = scmp.lt.s32.totalorder %s21, 3
      %p169 = pnand %p167, %p168
      %p170 = pneg %p169
      // Predicated region
      $region9: #{tpu_custom_call.1} parent=5 // pred_check
        _
      $region10: #{tpu_custom_call.1} parent=5 // pred_check_branch
        %172 = sbr.rel (%p169) target = $region12
      $region11: #{tpu_custom_call.1} parent=5 // pred_region
        %s173 = ssub.s32 %s21, 1
        // Predicated region
        $region13: #{tpu_custom_call.1} parent=11 // pred_check
          %p174 = pneg %p82
        $region14: #{tpu_custom_call.1} parent=11 // pred_check_branch
          %176 = sbr.rel (%p174) target = $region16
        $region15: #{tpu_custom_call.1} parent=11 // pred_region
          %s178 = ssub.s32 4096, 4096
          %179 = vsyncadd [#allocation6], %s178
          %s180 = sshll.u32 [#allocation5], 4
          %s181 = int_to_ptr.vmem [resolvable:$true] %s180
          %186 = dma.hbm_to_vmem [thread:$0]  %s1, 4096, %s181, [#allocation6], 256, 256, 16
        $region16: #{tpu_custom_call.1} parent=11 // pred_fallthru
          _
        // Predicated region
        $region17: #{tpu_custom_call.1} parent=11 // pred_check
          %p187 = pneg %p103
        $region18: #{tpu_custom_call.1} parent=11 // pred_check_branch
          %189 = sbr.rel (%p187) target = $region20
        $region19: #{tpu_custom_call.1} parent=11 // pred_region
          _
        $region20: #{tpu_custom_call.1} parent=11 // pred_fallthru
          _
      $region12: #{tpu_custom_call.1} parent=5 // pred_fallthru
        _
      %p190 = scmp.lt.s32.totalorder %s21, 2
      // Predicated region
      $region21: #{tpu_custom_call.1} parent=5 // pred_check
        %p191 = pneg %p190
      $region22: #{tpu_custom_call.1} parent=5 // pred_check_branch
        %193 = sbr.rel (%p191) target = $region24
      $region23: #{tpu_custom_call.1} parent=5 // pred_region
        // Predicated region
        $region25: #{tpu_custom_call.1} parent=23 // pred_check
          %p194 = pneg %p55
        $region26: #{tpu_custom_call.1} parent=23 // pred_check_branch
          %196 = sbr.rel (%p194) target = $region28
        $region27: #{tpu_custom_call.1} parent=23 // pred_region
          %s197 = sand.u32 %s45, 1
          %s198 = scalar_lea.sflag [#allocation3], %s197
          %s199 = sand.u32 %s45, 1
          %s200 = smul.addr %s199, 256
          %s201 = scalar_lea.vmem [#allocation2], %s200
          %s202 = smul.u32 32, %s29
          %s204 = ssub.s32 4096, 4096
          %205 = vsyncadd %s198, %s204
          %s206 = smul.addr %s28, 32
          %s207 = sadd.s32 %s202, %s206
          %s208 = smul.addr %s207, 128
          %s209 = scalar_lea.hbm %s0, %s208
          %s210 = sshll.u32 %s201, 4
          %s211 = int_to_ptr.vmem [resolvable:$true] %s210
          %216 = dma.hbm_to_vmem [thread:$0]  %s209, 4096, %s211, %s198, 128, 128, 8
        $region28: #{tpu_custom_call.1} parent=23 // pred_fallthru
          _
      $region24: #{tpu_custom_call.1} parent=5 // pred_fallthru
        _
      %p217 = scmp.le.s32.totalorder 1, %s21
      %p218 = scmp.lt.s32.totalorder %s21, 3
      %p219 = pnand %p217, %p218
      %p220 = pneg %p219
      // Predicated region
      $region29: #{tpu_custom_call.1} parent=5 // pred_check
        _
      $region30: #{tpu_custom_call.1} parent=5 // pred_check_branch
        %222 = sbr.rel (%p219) target = $region32
      $region31: #{tpu_custom_call.1} parent=5 // pred_region
        %s223 = ssub.s32 %s21, 1
        %s224 = sand.u32 %s48, 1
        %s225 = scalar_lea.sflag [#allocation3], %s224
        %s226 = sand.u32 %s48, 1
        %s227 = smul.addr %s226, 256
        %s228 = scalar_lea.vmem [#allocation2], %s227
        // Predicated region
        $region33: #{tpu_custom_call.1} parent=31 // pred_check
          %p229 = pneg %p61
        $region34: #{tpu_custom_call.1} parent=31 // pred_check_branch
          %231 = sbr.rel (%p229) target = $region36
        $region35: #{tpu_custom_call.1} parent=31 // pred_region
          %232 = dma.done %s225, 4096
        $region36: #{tpu_custom_call.1} parent=31 // pred_fallthru
          _
        // Predicated region
        $region37: #{tpu_custom_call.1} parent=31 // pred_check
          %p233 = pneg %p82
        $region38: #{tpu_custom_call.1} parent=31 // pred_check_branch
          %235 = sbr.rel (%p233) target = $region40
        $region39: #{tpu_custom_call.1} parent=31 // pred_region
          %236 = dma.done [#allocation6], 4096
        $region40: #{tpu_custom_call.1} parent=31 // pred_fallthru
          _
        %s237 = sand.u32 %s48, 1
        %s238 = scalar_lea.sflag [#allocation3], %s237
        %s239 = sand.u32 %s48, 1
        %s240 = smul.addr %s239, 256
        %s241 = scalar_lea.vmem [#allocation2], %s240
        %p242 = pneg %p61
        %p243 = pneg %p58
        %p244 = pneg %p82
        %p245 = pneg %p79
        %p246 = pneg %p103
        %p247 = pneg %p100
        %p248 = pneg %p131
        %p249 = pneg %p128
        %s250 = sand.u32 %s118, 1
        %s251 = scalar_lea.sflag [#allocation4], %s250
        %s252 = sand.u32 %s118, 1
        %s253 = smul.addr %s252, 256
        %s254 = scalar_lea.vmem [#allocation7], %s253
        %p255 = pneg %p159
        %p256 = pneg %p156
        %s257 = sand.u32 %s146, 1
        %s258 = scalar_lea.sflag [#allocation9], %s257
        %s259 = sand.u32 %s146, 1
        %s260 = smul.addr %s259, 256
        %s261 = scalar_lea.vmem [#allocation8], %s260
        %s262 = smul.u32 32, %s31
        %s263 = smul.u32 32, %s31
        %s264 = smul.u32 32, %s31
        %v265 = vld [vmem:[%s228] sm:$0xff]
        %v266 = vld [vmem:[%s228 + $0x8] sm:$0xff]
        %v267 = vld [vmem:[%s228 + $0x10] sm:$0xff]
        %v268 = vld [vmem:[%s228 + $0x18] sm:$0xff]
        %v269 = vld [vmem:[%s228 + $0x20] sm:$0xff]
        %v270 = vld [vmem:[%s228 + $0x28] sm:$0xff]
        %v271 = vld [vmem:[%s228 + $0x30] sm:$0xff]
        %v272 = vld [vmem:[%s228 + $0x38] sm:$0xff]
        %v273 = vld [vmem:[%s228 + $0x40] sm:$0xff]
        %v274 = vld [vmem:[%s228 + $0x48] sm:$0xff]
        %v275 = vld [vmem:[%s228 + $0x50] sm:$0xff]
        %v276 = vld [vmem:[%s228 + $0x58] sm:$0xff]
        %v277 = vld [vmem:[%s228 + $0x60] sm:$0xff]
        %v278 = vld [vmem:[%s228 + $0x68] sm:$0xff]
        %v279 = vld [vmem:[%s228 + $0x70] sm:$0xff]
        %v280 = vld [vmem:[%s228 + $0x78] sm:$0xff]
        %v281 = vld [vmem:[%s228 + $0x80] sm:$0xff]
        %v282 = vld [vmem:[%s228 + $0x88] sm:$0xff]
        %v283 = vld [vmem:[%s228 + $0x90] sm:$0xff]
        %v284 = vld [vmem:[%s228 + $0x98] sm:$0xff]
        %v285 = vld [vmem:[%s228 + $0xa0] sm:$0xff]
        %v286 = vld [vmem:[%s228 + $0xa8] sm:$0xff]
        %v287 = vld [vmem:[%s228 + $0xb0] sm:$0xff]
        %v288 = vld [vmem:[%s228 + $0xb8] sm:$0xff]
        %v289 = vld [vmem:[%s228 + $0xc0] sm:$0xff]
        %v290 = vld [vmem:[%s228 + $0xc8] sm:$0xff]
        %v291 = vld [vmem:[%s228 + $0xd0] sm:$0xff]
        %v292 = vld [vmem:[%s228 + $0xd8] sm:$0xff]
        %v293 = vld [vmem:[%s228 + $0xe0] sm:$0xff]
        %v294 = vld [vmem:[%s228 + $0xe8] sm:$0xff]
        %v295 = vld [vmem:[%s228 + $0xf0] sm:$0xff]
        %v296 = vld [vmem:[%s228 + $0xf8] sm:$0xff]
        %v297 = vld [vmem:[#allocation5] sm:$0xff]
        %v298 = vld [vmem:[#allocation5 + $0x8] sm:$0xff]
        %v299 = vld [vmem:[#allocation5 + $0x10] sm:$0xff]
        %v300 = vld [vmem:[#allocation5 + $0x18] sm:$0xff]
        %v301 = vld [vmem:[#allocation5 + $0x20] sm:$0xff]
        %v302 = vld [vmem:[#allocation5 + $0x28] sm:$0xff]
        %v303 = vld [vmem:[#allocation5 + $0x30] sm:$0xff]
        %v304 = vld [vmem:[#allocation5 + $0x38] sm:$0xff]
        %v305 = vld [vmem:[#allocation5 + $0x40] sm:$0xff]
        %v306 = vld [vmem:[#allocation5 + $0x48] sm:$0xff]
        %v307 = vld [vmem:[#allocation5 + $0x50] sm:$0xff]
        %v308 = vld [vmem:[#allocation5 + $0x58] sm:$0xff]
        %v309 = vld [vmem:[#allocation5 + $0x60] sm:$0xff]
        %v310 = vld [vmem:[#allocation5 + $0x68] sm:$0xff]
        %v311 = vld [vmem:[#allocation5 + $0x70] sm:$0xff]
        %v312 = vld [vmem:[#allocation5 + $0x78] sm:$0xff]
        %v313 = vld [vmem:[#allocation5 + $0x80] sm:$0xff]
        %v314 = vld [vmem:[#allocation5 + $0x88] sm:$0xff]
        %v315 = vld [vmem:[#allocation5 + $0x90] sm:$0xff]
        %v316 = vld [vmem:[#allocation5 + $0x98] sm:$0xff]
        %v317 = vld [vmem:[#allocation5 + $0xa0] sm:$0xff]
        %v318 = vld [vmem:[#allocation5 + $0xa8] sm:$0xff]
        %v319 = vld [vmem:[#allocation5 + $0xb0] sm:$0xff]
        %v320 = vld [vmem:[#allocation5 + $0xb8] sm:$0xff]
        %v321 = vld [vmem:[#allocation5 + $0xc0] sm:$0xff]
        %v322 = vld [vmem:[#allocation5 + $0xc8] sm:$0xff]
        %v323 = vld [vmem:[#allocation5 + $0xd0] sm:$0xff]
        %v324 = vld [vmem:[#allocation5 + $0xd8] sm:$0xff]
        %v325 = vld [vmem:[#allocation5 + $0xe0] sm:$0xff]
        %v326 = vld [vmem:[#allocation5 + $0xe8] sm:$0xff]
        %v327 = vld [vmem:[#allocation5 + $0xf0] sm:$0xff]
        %v328 = vld [vmem:[#allocation5 + $0xf8] sm:$0xff]
        %v329 = vld [vmem:[%s2] sm:$0x3]
        %v331 = vlaneseq
        %v332 = vshrl.u32 %v331, 7
        %v333 = vsub.s32 0, %v332
        %v334 = vrot.slane %v329, %v333
        %v335 = vlaneseq
        %v336 = vshrl.u32 %v335, 7
        %v337 = vsub.s32 1, %v336
        %v338 = vrot.slane %v329, %v337
        %341 = vmatprep.subr.mxu0 %v298
        %342 = vmatpush1.msra.mxu0 %v297
        %343 = vmatprep.subr.mxu0 %v300
        %344 = vmatpush1.msra.mxu0 %v299
        %345 = vmatprep.subr.mxu0 %v302
        %346 = vmatpush1.msra.mxu0 %v301
        %347 = vmatprep.subr.mxu0 %v304
        %348 = vmatpush1.msra.mxu0 %v303
        %349 = vmatprep.subr.mxu0 %v306
        %350 = vmatpush1.msra.mxu0 %v305
        %351 = vmatprep.subr.mxu0 %v308
        %352 = vmatpush1.msra.mxu0 %v307
        %353 = vmatprep.subr.mxu0 %v310
        %354 = vmatpush1.msra.mxu0 %v309
        %355 = vmatprep.subr.mxu0 %v312
        %356 = vmatpush1.msra.mxu0 %v311
        %357 = vmatprep.subr.mxu0 %v314
        %358 = vmatpush1.msra.mxu0 %v313
        %359 = vmatprep.subr.mxu0 %v316
        %360 = vmatpush1.msra.mxu0 %v315
        %361 = vmatprep.subr.mxu0 %v318
        %362 = vmatpush1.msra.mxu0 %v317
        %363 = vmatprep.subr.mxu0 %v320
        %364 = vmatpush1.msra.mxu0 %v319
        %365 = vmatprep.subr.mxu0 %v322
        %366 = vmatpush1.msra.mxu0 %v321
        %367 = vmatprep.subr.mxu0 %v324
        %368 = vmatpush1.msra.mxu0 %v323
        %369 = vmatprep.subr.mxu0 %v326
        %370 = vmatpush1.msra.mxu0 %v325
        %371 = vmatprep.subr.mxu0 %v328
        %372 = vmatpush1.msra.mxu0 %v327
        %373 = vmatprep.subr.mxu0 0.0
        %374 = vmatpush1.msra.mxu0 0.0
        %375 = vmatprep.subr.mxu0 0.0
        %376 = vmatpush1.msra.mxu0 0.0
        %377 = vmatprep.subr.mxu0 0.0
        %378 = vmatpush1.msra.mxu0 0.0
        %379 = vmatprep.subr.mxu0 0.0
        %380 = vmatpush1.msra.mxu0 0.0
        %381 = vmatprep.subr.mxu0 0.0
        %382 = vmatpush1.msra.mxu0 0.0
        %383 = vmatprep.subr.mxu0 0.0
        %384 = vmatpush1.msra.mxu0 0.0
        %385 = vmatprep.subr.mxu0 0.0
        %386 = vmatpush1.msra.mxu0 0.0
        %387 = vmatprep.subr.mxu0 0.0
        %388 = vmatpush1.msra.mxu0 0.0
        %389 = vmatprep.subr.mxu0 0.0
        %390 = vmatpush1.msra.mxu0 0.0
        %391 = vmatprep.subr.mxu0 0.0
        %392 = vmatpush1.msra.mxu0 0.0
        %393 = vmatprep.subr.mxu0 0.0
        %394 = vmatpush1.msra.mxu0 0.0
        %395 = vmatprep.subr.mxu0 0.0
        %396 = vmatpush1.msra.mxu0 0.0
        %397 = vmatprep.subr.mxu0 0.0
        %398 = vmatpush1.msra.mxu0 0.0
        %399 = vmatprep.subr.mxu0 0.0
        %400 = vmatpush1.msra.mxu0 0.0
        %401 = vmatprep.subr.mxu0 0.0
        %402 = vmatpush1.msra.mxu0 0.0
        %403 = vmatprep.subr.mxu0 0.0
        %404 = vmatpush1.msra.mxu0 0.0
        %405 = vmatprep.mubr.f32.mxu0 0.0
        %406 = vmatmul.mubr.f32.gmra.mrb[0].mxu0 %v265
        %v407 = vpop.f32.mrb[0].mxu0
        %v408 = vadd.f32 %v334, %v407
        %v409 = vpop.f32.mrb[0].mxu0
        %v410 = vadd.f32 %v338, %v409
        %411 = vmatprep.mubr.f32.mxu0 0.0
        %412 = vmatmul.mubr.f32.gmra.mrb[0].mxu0 %v266
        %v413 = vpop.f32.mrb[0].mxu0
        %v414 = vadd.f32 %v334, %v413
        %v415 = vpop.f32.mrb[0].mxu0
        %v416 = vadd.f32 %v338, %v415
        %417 = vmatprep.mubr.f32.mxu0 0.0
        %418 = vmatmul.mubr.f32.gmra.mrb[0].mxu0 %v267
        %v419 = vpop.f32.mrb[0].mxu0
        %v420 = vadd.f32 %v334, %v419
        %v421 = vpop.f32.mrb[0].mxu0
        %v422 = vadd.f32 %v338, %v421
        %423 = vmatprep.mubr.f32.mxu0 0.0
        %424 = vmatmul.mubr.f32.gmra.mrb[0].mxu0 %v268
        %v425 = vpop.f32.mrb[0].mxu0
        %v426 = vadd.f32 %v334, %v425
        %v427 = vpop.f32.mrb[0].mxu0
        %v428 = vadd.f32 %v338, %v427
        %429 = vmatprep.mubr.f32.mxu0 0.0
        %430 = vmatmul.mubr.f32.gmra.mrb[0].mxu0 %v269
        %v431 = vpop.f32.mrb[0].mxu0
        %v432 = vadd.f32 %v334, %v431
        %v433 = vpop.f32.mrb[0].mxu0
        %v434 = vadd.f32 %v338, %v433
        %435 = vmatprep.mubr.f32.mxu0 0.0
        %436 = vmatmul.mubr.f32.gmra.mrb[0].mxu0 %v270
        %v437 = vpop.f32.mrb[0].mxu0
        %v438 = vadd.f32 %v334, %v437
        %v439 = vpop.f32.mrb[0].mxu0
        %v440 = vadd.f32 %v338, %v439
        %441 = vmatprep.mubr.f32.mxu0 0.0
        %442 = vmatmul.mubr.f32.gmra.mrb[0].mxu0 %v271
        %v443 = vpop.f32.mrb[0].mxu0
        %v444 = vadd.f32 %v334, %v443
        %v445 = vpop.f32.mrb[0].mxu0
        %v446 = vadd.f32 %v338, %v445
        %447 = vmatprep.mubr.f32.mxu0 0.0
        %448 = vmatmul.mubr.f32.gmra.mrb[0].mxu0 %v272
        %v449 = vpop.f32.mrb[0].mxu0
        %v450 = vadd.f32 %v334, %v449
        %v451 = vpop.f32.mrb[0].mxu0
        %v452 = vadd.f32 %v338, %v451
        %453 = vmatprep.mubr.f32.mxu0 0.0
        %454 = vmatmul.mubr.f32.gmra.mrb[0].mxu0 %v273
        %v455 = vpop.f32.mrb[0].mxu0
        %v456 = vadd.f32 %v334, %v455
        %v457 = vpop.f32.mrb[0].mxu0
        %v458 = vadd.f32 %v338, %v457
        %459 = vmatprep.mubr.f32.mxu0 0.0
        %460 = vmatmul.mubr.f32.gmra.mrb[0].mxu0 %v274
        %v461 = vpop.f32.mrb[0].mxu0
        %v462 = vadd.f32 %v334, %v461
        %v463 = vpop.f32.mrb[0].mxu0
        %v464 = vadd.f32 %v338, %v463
        %465 = vmatprep.mubr.f32.mxu0 0.0
        %466 = vmatmul.mubr.f32.gmra.mrb[0].mxu0 %v275
        %v467 = vpop.f32.mrb[0].mxu0
        %v468 = vadd.f32 %v334, %v467
        %v469 = vpop.f32.mrb[0].mxu0
        %v470 = vadd.f32 %v338, %v469
        %471 = vmatprep.mubr.f32.mxu0 0.0
        %472 = vmatmul.mubr.f32.gmra.mrb[0].mxu0 %v276
        %v473 = vpop.f32.mrb[0].mxu0
        %v474 = vadd.f32 %v334, %v473
        %v475 = vpop.f32.mrb[0].mxu0
        %v476 = vadd.f32 %v338, %v475
        %477 = vmatprep.mubr.f32.mxu0 0.0
        %478 = vmatmul.mubr.f32.gmra.mrb[0].mxu0 %v277
        %v479 = vpop.f32.mrb[0].mxu0
        %v480 = vadd.f32 %v334, %v479
        %v481 = vpop.f32.mrb[0].mxu0
        %v482 = vadd.f32 %v338, %v481
        %483 = vmatprep.mubr.f32.mxu0 0.0
        %484 = vmatmul.mubr.f32.gmra.mrb[0].mxu0 %v278
        %v485 = vpop.f32.mrb[0].mxu0
        %v486 = vadd.f32 %v334, %v485
        %v487 = vpop.f32.mrb[0].mxu0
        %v488 = vadd.f32 %v338, %v487
        %489 = vmatprep.mubr.f32.mxu0 0.0
        %490 = vmatmul.mubr.f32.gmra.mrb[0].mxu0 %v279
        %v491 = vpop.f32.mrb[0].mxu0
        %v492 = vadd.f32 %v334, %v491
        %v493 = vpop.f32.mrb[0].mxu0
        %v494 = vadd.f32 %v338, %v493
        %495 = vmatprep.mubr.f32.mxu0 0.0
        %496 = vmatmul.mubr.f32.gmra.mrb[0].mxu0 %v280
        %v497 = vpop.f32.mrb[0].mxu0
        %v498 = vadd.f32 %v334, %v497
        %v499 = vpop.f32.mrb[0].mxu0
        %v500 = vadd.f32 %v338, %v499
        %501 = vmatprep.mubr.f32.mxu0 0.0
        %502 = vmatmul.mubr.f32.gmra.mrb[0].mxu0 %v281
        %v503 = vpop.f32.mrb[0].mxu0
        %v504 = vadd.f32 %v334, %v503
        %v505 = vpop.f32.mrb[0].mxu0
        %v506 = vadd.f32 %v338, %v505
        %507 = vmatprep.mubr.f32.mxu0 0.0
        %508 = vmatmul.mubr.f32.gmra.mrb[0].mxu0 %v282
        %v509 = vpop.f32.mrb[0].mxu0
        %v510 = vadd.f32 %v334, %v509
        %v511 = vpop.f32.mrb[0].mxu0
        %v512 = vadd.f32 %v338, %v511
        %513 = vmatprep.mubr.f32.mxu0 0.0
        %514 = vmatmul.mubr.f32.gmra.mrb[0].mxu0 %v283
        %v515 = vpop.f32.mrb[0].mxu0
        %v516 = vadd.f32 %v334, %v515
        %v517 = vpop.f32.mrb[0].mxu0
        %v518 = vadd.f32 %v338, %v517
        %519 = vmatprep.mubr.f32.mxu0 0.0
        %520 = vmatmul.mubr.f32.gmra.mrb[0].mxu0 %v284
        %v521 = vpop.f32.mrb[0].mxu0
        %v522 = vadd.f32 %v334, %v521
        %v523 = vpop.f32.mrb[0].mxu0
        %v524 = vadd.f32 %v338, %v523
        %525 = vmatprep.mubr.f32.mxu0 0.0
        %526 = vmatmul.mubr.f32.gmra.mrb[0].mxu0 %v285
        %v527 = vpop.f32.mrb[0].mxu0
        %v528 = vadd.f32 %v334, %v527
        %v529 = vpop.f32.mrb[0].mxu0
        %v530 = vadd.f32 %v338, %v529
        %531 = vmatprep.mubr.f32.mxu0 0.0
        %532 = vmatmul.mubr.f32.gmra.mrb[0].mxu0 %v286
        %v533 = vpop.f32.mrb[0].mxu0
        %v534 = vadd.f32 %v334, %v533
        %v535 = vpop.f32.mrb[0].mxu0
        %v536 = vadd.f32 %v338, %v535
        %537 = vmatprep.mubr.f32.mxu0 0.0
        %538 = vmatmul.mubr.f32.gmra.mrb[0].mxu0 %v287
        %v539 = vpop.f32.mrb[0].mxu0
        %v540 = vadd.f32 %v334, %v539
        %v541 = vpop.f32.mrb[0].mxu0
        %v542 = vadd.f32 %v338, %v541
        %543 = vmatprep.mubr.f32.mxu0 0.0
        %544 = vmatmul.mubr.f32.gmra.mrb[0].mxu0 %v288
        %v545 = vpop.f32.mrb[0].mxu0
        %v546 = vadd.f32 %v334, %v545
        %v547 = vpop.f32.mrb[0].mxu0
        %v548 = vadd.f32 %v338, %v547
        %549 = vmatprep.mubr.f32.mxu0 0.0
        %550 = vmatmul.mubr.f32.gmra.mrb[0].mxu0 %v289
        %v551 = vpop.f32.mrb[0].mxu0
        %v552 = vadd.f32 %v334, %v551
        %v553 = vpop.f32.mrb[0].mxu0
        %v554 = vadd.f32 %v338, %v553
        %555 = vmatprep.mubr.f32.mxu0 0.0
        %556 = vmatmul.mubr.f32.gmra.mrb[0].mxu0 %v290
        %v557 = vpop.f32.mrb[0].mxu0
        %v558 = vadd.f32 %v334, %v557
        %v559 = vpop.f32.mrb[0].mxu0
        %v560 = vadd.f32 %v338, %v559
        %561 = vmatprep.mubr.f32.mxu0 0.0
        %562 = vmatmul.mubr.f32.gmra.mrb[0].mxu0 %v291
        %v563 = vpop.f32.mrb[0].mxu0
        %v564 = vadd.f32 %v334, %v563
        %v565 = vpop.f32.mrb[0].mxu0
        %v566 = vadd.f32 %v338, %v565
        %567 = vmatprep.mubr.f32.mxu0 0.0
        %568 = vmatmul.mubr.f32.gmra.mrb[0].mxu0 %v292
        %v569 = vpop.f32.mrb[0].mxu0
        %v570 = vadd.f32 %v334, %v569
        %v571 = vpop.f32.mrb[0].mxu0
        %v572 = vadd.f32 %v338, %v571
        %573 = vmatprep.mubr.f32.mxu0 0.0
        %574 = vmatmul.mubr.f32.gmra.mrb[0].mxu0 %v293
        %v575 = vpop.f32.mrb[0].mxu0
        %v576 = vadd.f32 %v334, %v575
        %v577 = vpop.f32.mrb[0].mxu0
        %v578 = vadd.f32 %v338, %v577
        %579 = vmatprep.mubr.f32.mxu0 0.0
        %580 = vmatmul.mubr.f32.gmra.mrb[0].mxu0 %v294
        %v581 = vpop.f32.mrb[0].mxu0
        %v582 = vadd.f32 %v334, %v581
        %v583 = vpop.f32.mrb[0].mxu0
        %v584 = vadd.f32 %v338, %v583
        %585 = vmatprep.mubr.f32.mxu0 0.0
        %586 = vmatmul.mubr.f32.gmra.mrb[0].mxu0 %v295
        %v587 = vpop.f32.mrb[0].mxu0
        %v588 = vadd.f32 %v334, %v587
        %v589 = vpop.f32.mrb[0].mxu0
        %v590 = vadd.f32 %v338, %v589
        %591 = vmatprep.mubr.f32.mxu0 0.0
        %592 = vmatmul.mubr.f32.gmra.mrb[0].mxu0 %v296
        %v593 = vpop.f32.mrb[0].mxu0
        %v594 = vadd.f32 %v334, %v593
        %v595 = vpop.f32.mrb[0].mxu0
        %v596 = vadd.f32 %v338, %v595
        %597 = vdwg.mxu0
        %598 = vst [vmem:[%s254] sm:$0xff] %v408
        %599 = vst [vmem:[%s254 + $0x8] sm:$0xff] %v414
        %600 = vst [vmem:[%s254 + $0x10] sm:$0xff] %v420
        %601 = vst [vmem:[%s254 + $0x18] sm:$0xff] %v426
        %602 = vst [vmem:[%s254 + $0x20] sm:$0xff] %v432
        %603 = vst [vmem:[%s254 + $0x28] sm:$0xff] %v438
        %604 = vst [vmem:[%s254 + $0x30] sm:$0xff] %v444
        %605 = vst [vmem:[%s254 + $0x38] sm:$0xff] %v450
        %606 = vst [vmem:[%s254 + $0x40] sm:$0xff] %v456
        %607 = vst [vmem:[%s254 + $0x48] sm:$0xff] %v462
        %608 = vst [vmem:[%s254 + $0x50] sm:$0xff] %v468
        %609 = vst [vmem:[%s254 + $0x58] sm:$0xff] %v474
        %610 = vst [vmem:[%s254 + $0x60] sm:$0xff] %v480
        %611 = vst [vmem:[%s254 + $0x68] sm:$0xff] %v486
        %612 = vst [vmem:[%s254 + $0x70] sm:$0xff] %v492
        %613 = vst [vmem:[%s254 + $0x78] sm:$0xff] %v498
        %614 = vst [vmem:[%s254 + $0x80] sm:$0xff] %v504
        %615 = vst [vmem:[%s254 + $0x88] sm:$0xff] %v510
        %616 = vst [vmem:[%s254 + $0x90] sm:$0xff] %v516
        %617 = vst [vmem:[%s254 + $0x98] sm:$0xff] %v522
        %618 = vst [vmem:[%s254 + $0xa0] sm:$0xff] %v528
        %619 = vst [vmem:[%s254 + $0xa8] sm:$0xff] %v534
        %620 = vst [vmem:[%s254 + $0xb0] sm:$0xff] %v540
        %621 = vst [vmem:[%s254 + $0xb8] sm:$0xff] %v546
        %622 = vst [vmem:[%s254 + $0xc0] sm:$0xff] %v552
        %623 = vst [vmem:[%s254 + $0xc8] sm:$0xff] %v558
        %624 = vst [vmem:[%s254 + $0xd0] sm:$0xff] %v564
        %625 = vst [vmem:[%s254 + $0xd8] sm:$0xff] %v570
        %626 = vst [vmem:[%s254 + $0xe0] sm:$0xff] %v576
        %627 = vst [vmem:[%s254 + $0xe8] sm:$0xff] %v582
        %628 = vst [vmem:[%s254 + $0xf0] sm:$0xff] %v588
        %629 = vst [vmem:[%s254 + $0xf8] sm:$0xff] %v594
        %630 = vst [vmem:[%s261] sm:$0xff] %v410
        %631 = vst [vmem:[%s261 + $0x8] sm:$0xff] %v416
        %632 = vst [vmem:[%s261 + $0x10] sm:$0xff] %v422
        %633 = vst [vmem:[%s261 + $0x18] sm:$0xff] %v428
        %634 = vst [vmem:[%s261 + $0x20] sm:$0xff] %v434
        %635 = vst [vmem:[%s261 + $0x28] sm:$0xff] %v440
        %636 = vst [vmem:[%s261 + $0x30] sm:$0xff] %v446
        %637 = vst [vmem:[%s261 + $0x38] sm:$0xff] %v452
        %638 = vst [vmem:[%s261 + $0x40] sm:$0xff] %v458
        %639 = vst [vmem:[%s261 + $0x48] sm:$0xff] %v464
        %640 = vst [vmem:[%s261 + $0x50] sm:$0xff] %v470
        %641 = vst [vmem:[%s261 + $0x58] sm:$0xff] %v476
        %642 = vst [vmem:[%s261 + $0x60] sm:$0xff] %v482
        %643 = vst [vmem:[%s261 + $0x68] sm:$0xff] %v488
        %644 = vst [vmem:[%s261 + $0x70] sm:$0xff] %v494
        %645 = vst [vmem:[%s261 + $0x78] sm:$0xff] %v500
        %646 = vst [vmem:[%s261 + $0x80] sm:$0xff] %v506
        %647 = vst [vmem:[%s261 + $0x88] sm:$0xff] %v512
        %648 = vst [vmem:[%s261 + $0x90] sm:$0xff] %v518
        %649 = vst [vmem:[%s261 + $0x98] sm:$0xff] %v524
        %650 = vst [vmem:[%s261 + $0xa0] sm:$0xff] %v530
        %651 = vst [vmem:[%s261 + $0xa8] sm:$0xff] %v536
        %652 = vst [vmem:[%s261 + $0xb0] sm:$0xff] %v542
        %653 = vst [vmem:[%s261 + $0xb8] sm:$0xff] %v548
        %654 = vst [vmem:[%s261 + $0xc0] sm:$0xff] %v554
        %655 = vst [vmem:[%s261 + $0xc8] sm:$0xff] %v560
        %656 = vst [vmem:[%s261 + $0xd0] sm:$0xff] %v566
        %657 = vst [vmem:[%s261 + $0xd8] sm:$0xff] %v572
        %658 = vst [vmem:[%s261 + $0xe0] sm:$0xff] %v578
        %659 = vst [vmem:[%s261 + $0xe8] sm:$0xff] %v584
        %660 = vst [vmem:[%s261 + $0xf0] sm:$0xff] %v590
        %661 = vst [vmem:[%s261 + $0xf8] sm:$0xff] %v596
        %s662 = sand.u32 %s118, 1
        %s663 = scalar_lea.sflag [#allocation4], %s662
        %s664 = sand.u32 %s118, 1
        %s665 = smul.addr %s664, 256
        %s666 = scalar_lea.vmem [#allocation7], %s665
        %s667 = sand.u32 %s146, 1
        %s668 = scalar_lea.sflag [#allocation9], %s667
        %s669 = sand.u32 %s146, 1
        %s670 = smul.addr %s669, 256
        %s671 = scalar_lea.vmem [#allocation8], %s670
        // Predicated region
        $region41: #{tpu_custom_call.1} parent=31 // pred_check
          %p672 = pneg %p128
        $region42: #{tpu_custom_call.1} parent=31 // pred_check_branch
          %674 = sbr.rel (%p672) target = $region44
        $region43: #{tpu_custom_call.1} parent=31 // pred_region
          %s675 = smul.u32 32, %s31
          %s677 = ssub.s32 4096, 4096
          %678 = vsyncadd %s663, %s677
          %s679 = smul.addr %s30, 32
          %s680 = sadd.s32 %s675, %s679
          %s681 = smul.addr %s680, 128
          %s682 = scalar_lea.hbm %s3, %s681
          %s683 = sshll.u32 %s666, 4
          %s684 = int_to_ptr.vmem [resolvable:$true] %s683
          %689 = dma.vmem_to_hbm [thread:$0]  %s684, 4096, %s682, %s663, 128, 128, 8
        $region44: #{tpu_custom_call.1} parent=31 // pred_fallthru
          _
        // Predicated region
        $region45: #{tpu_custom_call.1} parent=31 // pred_check
          %p690 = pneg %p156
        $region46: #{tpu_custom_call.1} parent=31 // pred_check_branch
          %692 = sbr.rel (%p690) target = $region48
        $region47: #{tpu_custom_call.1} parent=31 // pred_region
          %s693 = smul.u32 32, %s31
          %s695 = ssub.s32 4096, 4096
          %696 = vsyncadd %s668, %s695
          %s697 = smul.addr %s30, 32
          %s698 = sadd.s32 %s693, %s697
          %s699 = smul.addr %s698, 128
          %s700 = scalar_lea.hbm %s4, %s699
          %s701 = sshll.u32 %s671, 4
          %s702 = int_to_ptr.vmem [resolvable:$true] %s701
          %707 = dma.vmem_to_hbm [thread:$0]  %s702, 4096, %s700, %s668, 128, 128, 8
        $region48: #{tpu_custom_call.1} parent=31 // pred_fallthru
          _
      $region32: #{tpu_custom_call.1} parent=5 // pred_fallthru
        _
      %p708 = scmp.le.s32.totalorder 2, %s21
      // Predicated region
      $region49: #{tpu_custom_call.1} parent=5 // pred_check
        %p709 = pneg %p708
      $region50: #{tpu_custom_call.1} parent=5 // pred_check_branch
        %711 = sbr.rel (%p709) target = $region52
      $region51: #{tpu_custom_call.1} parent=5 // pred_region
        %s712 = ssub.s32 %s21, 2
        // Predicated region
        $region53: #{tpu_custom_call.1} parent=51 // pred_check
          %p713 = pneg %p134
        $region54: #{tpu_custom_call.1} parent=51 // pred_check_branch
          %715 = sbr.rel (%p713) target = $region56
        $region55: #{tpu_custom_call.1} parent=51 // pred_region
          %s716 = sand.u32 %s119, 1
          %s717 = scalar_lea.sflag [#allocation4], %s716
          %s718 = sand.u32 %s119, 1
          %s719 = smul.addr %s718, 256
          %s720 = scalar_lea.vmem [#allocation7], %s719
          %721 = dma.done %s717, 4096
        $region56: #{tpu_custom_call.1} parent=51 // pred_fallthru
          _
        // Predicated region
        $region57: #{tpu_custom_call.1} parent=51 // pred_check
          %p722 = pneg %p162
        $region58: #{tpu_custom_call.1} parent=51 // pred_check_branch
          %724 = sbr.rel (%p722) target = $region60
        $region59: #{tpu_custom_call.1} parent=51 // pred_region
          %s725 = sand.u32 %s147, 1
          %s726 = scalar_lea.sflag [#allocation9], %s725
          %s727 = sand.u32 %s147, 1
          %s728 = smul.addr %s727, 256
          %s729 = scalar_lea.vmem [#allocation8], %s728
          %730 = dma.done %s726, 4096
        $region60: #{tpu_custom_call.1} parent=51 // pred_fallthru
          _
      $region52: #{tpu_custom_call.1} parent=5 // pred_fallthru
        _
    $region6: #{tpu_custom_call.1} parent=1 // loop_footer
      %s25 = sadd.s32 1, %s21
    $region7: #{tpu_custom_call.1} parent=1 // loop_footer_branch
      %20 = sbr.rel target = $region3
    $region8: #{tpu_custom_call.1} parent=1 // loop_exit
      _
    %731 = vsyncpa [#allocation3], 1
    %s732 = scalar_lea.sflag [#allocation3], 1
    %733 = vsyncpa %s732, 1
    %734 = vsyncpa [#allocation6], 1
    %735 = vsyncpa [#allocation4], 1
    %s736 = scalar_lea.sflag [#allocation4], 1
    %737 = vsyncpa %s736, 1
    %738 = vsyncpa [#allocation9], 1
    %s739 = scalar_lea.sflag [#allocation9], 1
    %740 = vsyncpa %s739, 1

</llo_original>
